<compile_context>
chip_gen: v7x
topology: tpu7x:2x2x1
jax: 0.10.0
libtpu: 0.0.40
codegen_flags: <defaults>
</compile_context>

<pallas_src>
import jax
import jax.numpy as jnp
from jax.experimental import pallas as pl
from jax.experimental.pallas import tpu as pltpu

LANE = 128            # lane-dense feature width used for all padded tensors
BN_EPS = 1e-5
NORM_EPS = 1e-8

VMEM_SPEC = pl.BlockSpec(memory_space=pltpu.MemorySpace.VMEM)


def _dotf32(a, b):
    # bf16 x bf16 -> f32 accumulation (native MXU path).
    return jnp.dot(a, b, preferred_element_type=jnp.float32)


def _row_normalize(o):
    # x / clamp(||x||_fro, min=1e-8)  ==  x * rsqrt(max(sum(x^2), 1e-16))
    sumsq = jnp.sum(o * o, axis=1, keepdims=True)
    return o * jax.lax.rsqrt(jnp.maximum(sumsq, NORM_EPS * NORM_EPS))


# ---------------------------------------------------------------------------
# Fused forward kernel
# ---------------------------------------------------------------------------
def make_fused_mpnn_kernel(cell_plan, track_plan, block_plans, block_iterations):
    """Single kernel for the entire MPNN forward pass.

    The *plan* pytrees hold static integer indices into the two parameter
    slabs (built by the wrapper with the same canonical ordering)."""

    def kernel(x_cell_ref, x_track_ref, a_cn_ref, a_tn_ref, a_nn_ref,
               w_slab_ref, v_slab_ref, node_out_ref, glob_out_ref):

        # Per-use parameter loads (static offsets -> zero-cost slicing; avoids
        # keeping every weight live across the whole unrolled kernel).
        def W(i):            # (LANE, LANE) bf16 weight block
            return w_slab_ref[pl.ds(i * LANE, LANE), :]

        def V(i):            # (1, LANE) f32 row (bias / gamma / beta)
            return v_slab_ref[pl.ds(i, 1), :]

        def init_mlp(x16, plan):
            # build_layers(..., add_batch_norm=True):
            #   Linear+ReLU, [BatchNorm1d, Linear+ReLU]*(H-1), Linear
            # BatchNorm1d uses batch statistics (PyTorch .train() default,
            # biased variance).
            # TODO(synk): eval-mode running statistics are not modeled.
            wi, bi = plan['first']
            h = jnp.maximum(_dotf32(x16, W(wi)) + V(bi), 0.0)
            for gi, bei, wi, bi in plan['mid']:
                mean = jnp.mean(h, axis=0, keepdims=True)
                var = jnp.mean(jnp.square(h - mean), axis=0, keepdims=True)
                h = (h - mean) * jax.lax.rsqrt(var + BN_EPS) * V(gi) + V(bei)
                h = jnp.maximum(_dotf32(h.astype(jnp.bfloat16), W(wi)) + V(bi), 0.0)
            wi, bi = plan['last']
            return _dotf32(h.astype(jnp.bfloat16), W(wi)) + V(bi)

        # --- init networks (cell / track hidden reps) ---
        cell_h16 = init_mlp(x_cell_ref[...], cell_plan).astype(jnp.bfloat16)
        track_h16 = init_mlp(x_track_ref[...], track_plan).astype(jnp.bfloat16)

        # --- move_from_cellstracks_to_nodes: copy_src + sum over both etypes ---
        node_h = _dotf32(a_cn_ref[...], cell_h16) + _dotf32(a_tn_ref[...], track_h16)
        node_h16 = node_h.astype(jnp.bfloat16)

        # --- update_global_rep: dgl.sum_nodes + norm clamp; kept as one row ---
        # TODO(synk): at large n_nodes, replace the axis-0 sums with a
        # (1, n_rows) ones-row matmul to move the reduction off the XLU.
        g_row = _row_normalize(jnp.sum(node_h, axis=0, keepdims=True))
        g_row16 = g_row.astype(jnp.bfloat16)

        a_nn = a_nn_ref[...]
        # --- GN blocks (statically unrolled; total iteration count is tiny) ---
        for plan, n_iters in zip(block_plans, block_iterations):
            wm, wh, wg, b0 = plan['first']
            for _ in range(n_iters):
                # mailbox sum over node_to_node edges
                msg16 = _dotf32(a_nn, node_h16).astype(jnp.bfloat16)
                # concat([msg, hidden, global]) @ W0 done as three row-block
                # matmuls; concat order matches the PyTorch NodeNetwork.
                h = jnp.maximum(
                    _dotf32(msg16, W(wm)) + _dotf32(node_h16, W(wh))
                    + _dotf32(g_row16, W(wg)) + V(b0), 0.0)
                for wi, bi in plan['mid']:
                    h = jnp.maximum(
                        _dotf32(h.astype(jnp.bfloat16), W(wi)) + V(bi), 0.0)
                wi, bi = plan['last']
                node_h = _row_normalize(
                    _dotf32(h.astype(jnp.bfloat16), W(wi)) + V(bi))
                node_h16 = node_h.astype(jnp.bfloat16)
                g_row = _row_normalize(jnp.sum(node_h, axis=0, keepdims=True))
                g_row16 = g_row.astype(jnp.bfloat16)

        node_out_ref[...] = node_h          # (n_nodes, 128) lane-dense store
        glob_out_ref[...] = g_row           # (1, 128)

    return kernel


# ---------------------------------------------------------------------------
# Parameter packing (wrapper side)
# ---------------------------------------------------------------------------
def _pad2d(a, rows, cols):
    a = jnp.asarray(a, jnp.float32)
    if a.ndim == 1:
        a = a.reshape(1, -1)
    out = jnp.zeros((rows, cols), jnp.float32)
    return out.at[:a.shape[0], :a.shape[1]].set(a)


class _ParamPacker:
    """Packs all weights into one bf16 (n*128, 128) slab and all row vectors
    (biases / gammas / betas) into one f32 (n_vec, 128) slab."""

    def __init__(self):
        self._weights = []
        self._vectors = []

    def weight(self, w):
        self._weights.append(_pad2d(w, LANE, LANE))
        return len(self._weights) - 1

    def vector(self, v):
        self._vectors.append(_pad2d(v, 1, LANE))
        return len(self._vectors) - 1

    def finalize(self):
        w_slab = jnp.concatenate(self._weights, axis=0).astype(jnp.bfloat16)
        pad = (-len(self._vectors)) % 8
        vecs = self._vectors + [jnp.zeros((1, LANE), jnp.float32)] * pad
        v_slab = jnp.concatenate(vecs, axis=0)
        return w_slab, v_slab


def _pack_init_net(packer, params, num_hidden):
    # params layout: [W0, b0] + [gamma, beta, W, b]*(num_hidden-1) + [Wf, bf]
    plan = {'first': (packer.weight(params[0]), packer.vector(params[1])),
            'mid': []}
    i = 2
    for _ in range(1, num_hidden):
        g, be, w, b = params[i], params[i + 1], params[i + 2], params[i + 3]
        i += 4
        plan['mid'].append((packer.vector(g), packer.vector(be),
                            packer.weight(w), packer.vector(b)))
    plan['last'] = (packer.weight(params[i]), packer.vector(params[i + 1]))
    return plan


def _pack_node_net(packer, params, num_hidden, hidden):
    # params layout: [W0, b0] + [W, b]*(num_hidden-1) + [Wf, bf]
    # W0 (3*hidden, L0) is split into the three row blocks corresponding to the
    # PyTorch concat order [msg, hidden rep, global rep].
    w0, b0 = params[0], params[1]
    plan = {'first': (packer.weight(w0[:hidden, :]),
                      packer.weight(w0[hidden:2 * hidden, :]),
                      packer.weight(w0[2 * hidden:, :]),
                      packer.vector(b0)),
            'mid': []}
    i = 2
    for _ in range(1, num_hidden):
        plan['mid'].append((packer.weight(params[i]), packer.vector(params[i + 1])))
        i += 2
    plan['last'] = (packer.weight(params[i]), packer.vector(params[i + 1]))
    return plan


# ---------------------------------------------------------------------------
# Wrapper
# ---------------------------------------------------------------------------
def mpnn_forward(config, params, cell_feats, cell_zeta, track_feats,
                 a_cell_to_node, a_track_to_node, a_node_to_node):
    n_nodes = a_cell_to_node.shape[0]
    hidden = config['cell hidden size']
    n_blocks = config['n GN blocks']
    block_iterations = tuple(config['n iterations'][:n_blocks])

    # (source module references total_features before defining it; fixed here)
    total_features = jnp.concatenate(
        [cell_feats, cell_zeta[:, None]], axis=1).astype(jnp.float32)

    # Lane-dense, bf16 inputs (padding columns are exact zeros end-to-end).
    x_cell = _pad2d(total_features, total_features.shape[0], LANE).astype(jnp.bfloat16)
    x_track = _pad2d(track_feats, track_feats.shape[0], LANE).astype(jnp.bfloat16)

    # 0/1 adjacencies are exact in bf16 -> halve bytes, hit the bf16 MXU path.
    a_cn16 = jnp.asarray(a_cell_to_node, jnp.bfloat16)
    a_tn16 = jnp.asarray(a_track_to_node, jnp.bfloat16)
    a_nn16 = jnp.asarray(a_node_to_node, jnp.bfloat16)

    packer = _ParamPacker()
    cell_plan = _pack_init_net(packer, params['cell_init'],
                               len(config['node init layers']))
    track_plan = _pack_init_net(packer, params['track_init'],
                                len(config['track init layers']))
    block_plans = [
        _pack_node_net(packer, blk, len(config['node net layers']), hidden)
        for blk in params['node_nets']]
    w_slab, v_slab = packer.finalize()

    kernel = make_fused_mpnn_kernel(cell_plan, track_plan, block_plans,
                                    block_iterations)

    args = (x_cell, x_track, a_cn16, a_tn16, a_nn16, w_slab, v_slab)
    out_shapes = (jax.ShapeDtypeStruct((n_nodes, LANE), jnp.float32),
                  jax.ShapeDtypeStruct((1, LANE), jnp.float32))

    # Explicit scoped-VMEM limit sized from the actual resident set (keeps the
    # same kernel valid under v5e's 16 MiB / v7x's 64 MiB constraints).
    in_bytes = sum(int(a.size) * a.dtype.itemsize for a in args)
    out_bytes = (n_nodes + 1) * LANE * 4
    vmem_limit = int(min(max(2 * (in_bytes + out_bytes) + (8 << 20), 16 << 20),
                         64 << 20))

    node_pad, glob_pad = pl.pallas_call(
        kernel,
        out_shape=out_shapes,
        in_specs=[VMEM_SPEC] * len(args),
        out_specs=(VMEM_SPEC, VMEM_SPEC),
        compiler_params=pltpu.CompilerParams(vmem_limit_bytes=vmem_limit),
    )(*args)

    node_hidden = node_pad[:, :hidden]
    # dgl.broadcast_nodes equivalent (free XLA broadcast outside the kernel).
    global_rep = jnp.broadcast_to(glob_pad[:, :hidden], (n_nodes, hidden))
    return node_hidden, global_rep


# ---------------------------------------------------------------------------
# Deterministic parameter init (PyTorch nn.Linear / nn.BatchNorm1d defaults)
# ---------------------------------------------------------------------------
def linear_params(key, fan_in, fan_out):
    k1, k2 = jax.random.split(key)
    bound = 1.0 / float(fan_in) ** 0.5
    w = jax.random.uniform(k1, (fan_in, fan_out), jnp.float32, -bound, bound)
    b = jax.random.uniform(k2, (1, fan_out), jnp.float32, -bound, bound)
    return w, b


def init_network_params(key, in_size, out_size, features, add_batch_norm):
    params = []
    key, k = jax.random.split(key)
    params.extend(linear_params(k, in_size, features[0]))
    for i in range(1, len(features)):
        if add_batch_norm:
            params.append(jnp.ones((1, features[i - 1]), jnp.float32))   # gamma
            params.append(jnp.zeros((1, features[i - 1]), jnp.float32))  # beta
        key, k = jax.random.split(key)
        params.extend(linear_params(k, features[i - 1], features[i]))
    key, k = jax.random.split(key)
    params.extend(linear_params(k, features[-1], out_size))
    return params


if __name__ == "__main__":
    config = {
        'cell inputsize': 9,      # 8 raw cell features + 1 zeta
        'track inputsize': 6,
        'cell hidden size': 32,
        'track hidden size': 32,
        'node init layers': [32, 32],
        'track init layers': [32, 32],
        'node net layers': [64, 64],
        'n GN blocks': 2,
        'n iterations': [2, 1],
    }
    n_cells, n_tracks, n_nodes = 32, 16, 24

    key = jax.random.PRNGKey(0)
    ks = jax.random.split(key, 10)
    cell_feats = jax.random.normal(ks[0], (n_cells, config['cell inputsize'] - 1), jnp.float32)
    cell_zeta = jax.random.normal(ks[1], (n_cells,), jnp.float32)
    track_feats = jax.random.normal(ks[2], (n_tracks, config['track inputsize']), jnp.float32)

    # Dense adjacency A[dst, src].  Self-loops on node_to_node guarantee every
    # node has in-degree >= 1 (matches DGL degree-bucketed NodeNetwork reduce).
    a_cn = (jax.random.uniform(ks[3], (n_nodes, n_cells)) < 0.3).astype(jnp.float32)
    a_tn = (jax.random.uniform(ks[4], (n_nodes, n_tracks)) < 0.3).astype(jnp.float32)
    a_nn = (jax.random.uniform(ks[5], (n_nodes, n_nodes)) < 0.4).astype(jnp.float32)
    a_nn = jnp.maximum(a_nn, jnp.eye(n_nodes, dtype=jnp.float32))

    params = {
        'cell_init': init_network_params(ks[6], config['cell inputsize'],
                                         config['cell hidden size'],
                                         config['node init layers'], True),
        'track_init': init_network_params(ks[7], config['track inputsize'],
                                          config['track hidden size'],
                                          config['track init layers'], True),
        'node_nets': [
            init_network_params(k, 3 * config['cell hidden size'],
                                config['cell hidden size'],
                                config['node net layers'], False)
            for k in jax.random.split(ks[8], config['n GN blocks'])
        ],
    }

    node_hidden, global_rep = mpnn_forward(
        config, params, cell_feats, cell_zeta, track_feats, a_cn, a_tn, a_nn)
    jax.block_until_ready((node_hidden, global_rep))
    assert node_hidden.shape == (n_nodes, config['cell hidden size'])
    assert global_rep.shape == (n_nodes, config['cell hidden size'])
    assert bool(jnp.all(jnp.isfinite(node_hidden))) and bool(jnp.all(jnp.isfinite(global_rep)))
    print("KERNEL_OK")
</pallas_src>

<mosaic_0001>
module attributes {stable_mosaic.version = 11 : i64} {
  func.func @kernel(%arg0: memref<32x128xbf16, #tpu.memory_space<vmem>>, %arg1: memref<16x128xbf16, #tpu.memory_space<vmem>>, %arg2: memref<24x32xbf16, #tpu.memory_space<vmem>>, %arg3: memref<24x16xbf16, #tpu.memory_space<vmem>>, %arg4: memref<24x24xbf16, #tpu.memory_space<vmem>>, %arg5: memref<2048x128xbf16, #tpu.memory_space<vmem>>, %arg6: memref<16x128xf32, #tpu.memory_space<vmem>>, %arg7: memref<24x128xf32, #tpu.memory_space<vmem>>, %arg8: memref<1x128xf32, #tpu.memory_space<vmem>>) attributes {dimension_semantics = [], scalar_prefetch = 0 : i64, scratch_operands = 0 : i64, tpu.core_type = #tpu.core_type<tc>} {
    %c0 = arith.constant 0 : index
    %c0_0 = arith.constant 0 : index
    %0 = vector.load %arg0[%c0, %c0_0] : memref<32x128xbf16, #tpu.memory_space<vmem>>, vector<32x128xbf16>
    %c0_1 = arith.constant 0 : index
    %c0_2 = arith.constant 0 : index
    %1 = vector.load %arg5[%c0_1, %c0_2] : memref<2048x128xbf16, #tpu.memory_space<vmem>>, vector<128x128xbf16>
    %cst = arith.constant dense<0.000000e+00> : vector<32x128xf32>
    %2 = tpu.matmul %0, %1, %cst {dimension_numbers = #tpu.dot_dimension_numbers<[1], [0], [0], [1], [0, 0, 1, 1], [], []>} : vector<32x128xbf16>, vector<128x128xbf16>, vector<32x128xf32> -> vector<32x128xf32>
    %c0_3 = arith.constant 0 : index
    %c0_4 = arith.constant 0 : index
    %3 = vector.load %arg6[%c0_3, %c0_4] : memref<16x128xf32, #tpu.memory_space<vmem>>, vector<1x128xf32>
    %4 = vector.broadcast %3 : vector<1x128xf32> to vector<32x128xf32>
    %5 = arith.addf %2, %4 : vector<32x128xf32>
    %cst_5 = arith.constant 0.000000e+00 : f32
    %6 = vector.broadcast %cst_5 : f32 to vector<32x128xf32>
    %7 = arith.maximumf %5, %6 : vector<32x128xf32>
    %cst_6 = arith.constant dense<0.000000e+00> : vector<128xf32>
    %8 = vector.multi_reduction <add>, %7, %cst_6 [0] : vector<32x128xf32> to vector<128xf32>
    %9 = vector.shape_cast %8 : vector<128xf32> to vector<1x128xf32>
    %cst_7 = arith.constant 3.200000e+01 : f32
    %10 = vector.broadcast %cst_7 : f32 to vector<1x128xf32>
    %11 = arith.divf %9, %10 : vector<1x128xf32>
    %12 = vector.broadcast %11 : vector<1x128xf32> to vector<32x128xf32>
    %13 = arith.subf %7, %12 : vector<32x128xf32>
    %14 = arith.mulf %13, %13 : vector<32x128xf32>
    %cst_8 = arith.constant dense<0.000000e+00> : vector<128xf32>
    %15 = vector.multi_reduction <add>, %14, %cst_8 [0] : vector<32x128xf32> to vector<128xf32>
    %16 = vector.shape_cast %15 : vector<128xf32> to vector<1x128xf32>
    %cst_9 = arith.constant 3.200000e+01 : f32
    %17 = vector.broadcast %cst_9 : f32 to vector<1x128xf32>
    %18 = arith.divf %16, %17 : vector<1x128xf32>
    %19 = vector.broadcast %11 : vector<1x128xf32> to vector<32x128xf32>
    %20 = arith.subf %7, %19 : vector<32x128xf32>
    %cst_10 = arith.constant 9.99999974E-6 : f32
    %21 = vector.broadcast %cst_10 : f32 to vector<1x128xf32>
    %22 = arith.addf %18, %21 : vector<1x128xf32>
    %23 = math.rsqrt %22 : vector<1x128xf32>
    %24 = vector.broadcast %23 : vector<1x128xf32> to vector<32x128xf32>
    %25 = arith.mulf %20, %24 : vector<32x128xf32>
    %c1 = arith.constant 1 : index
    %c0_11 = arith.constant 0 : index
    %26 = vector.load %arg6[%c1, %c0_11] : memref<16x128xf32, #tpu.memory_space<vmem>>, vector<1x128xf32>
    %27 = vector.broadcast %26 : vector<1x128xf32> to vector<32x128xf32>
    %28 = arith.mulf %25, %27 : vector<32x128xf32>
    %c2 = arith.constant 2 : index
    %c0_12 = arith.constant 0 : index
    %29 = vector.load %arg6[%c2, %c0_12] : memref<16x128xf32, #tpu.memory_space<vmem>>, vector<1x128xf32>
    %30 = vector.broadcast %29 : vector<1x128xf32> to vector<32x128xf32>
    %31 = arith.addf %28, %30 : vector<32x128xf32>
    %32 = arith.truncf %31 : vector<32x128xf32> to vector<32x128xbf16>
    %c128 = arith.constant 128 : index
    %c0_13 = arith.constant 0 : index
    %33 = vector.load %arg5[%c128, %c0_13] : memref<2048x128xbf16, #tpu.memory_space<vmem>>, vector<128x128xbf16>
    %cst_14 = arith.constant dense<0.000000e+00> : vector<32x128xf32>
    %34 = tpu.matmul %32, %33, %cst_14 {dimension_numbers = #tpu.dot_dimension_numbers<[1], [0], [0], [1], [0, 0, 1, 1], [], []>} : vector<32x128xbf16>, vector<128x128xbf16>, vector<32x128xf32> -> vector<32x128xf32>
    %c3 = arith.constant 3 : index
    %c0_15 = arith.constant 0 : index
    %35 = vector.load %arg6[%c3, %c0_15] : memref<16x128xf32, #tpu.memory_space<vmem>>, vector<1x128xf32>
    %36 = vector.broadcast %35 : vector<1x128xf32> to vector<32x128xf32>
    %37 = arith.addf %34, %36 : vector<32x128xf32>
    %cst_16 = arith.constant 0.000000e+00 : f32
    %38 = vector.broadcast %cst_16 : f32 to vector<32x128xf32>
    %39 = arith.maximumf %37, %38 : vector<32x128xf32>
    %40 = arith.truncf %39 : vector<32x128xf32> to vector<32x128xbf16>
    %c256 = arith.constant 256 : index
    %c0_17 = arith.constant 0 : index
    %41 = vector.load %arg5[%c256, %c0_17] : memref<2048x128xbf16, #tpu.memory_space<vmem>>, vector<128x128xbf16>
    %cst_18 = arith.constant dense<0.000000e+00> : vector<32x128xf32>
    %42 = tpu.matmul %40, %41, %cst_18 {dimension_numbers = #tpu.dot_dimension_numbers<[1], [0], [0], [1], [0, 0, 1, 1], [], []>} : vector<32x128xbf16>, vector<128x128xbf16>, vector<32x128xf32> -> vector<32x128xf32>
    %c4 = arith.constant 4 : index
    %c0_19 = arith.constant 0 : index
    %43 = vector.load %arg6[%c4, %c0_19] : memref<16x128xf32, #tpu.memory_space<vmem>>, vector<1x128xf32>
    %44 = vector.broadcast %43 : vector<1x128xf32> to vector<32x128xf32>
    %45 = arith.addf %42, %44 : vector<32x128xf32>
    %46 = arith.truncf %45 : vector<32x128xf32> to vector<32x128xbf16>
    %c0_20 = arith.constant 0 : index
    %c0_21 = arith.constant 0 : index
    %47 = vector.load %arg1[%c0_20, %c0_21] : memref<16x128xbf16, #tpu.memory_space<vmem>>, vector<16x128xbf16>
    %c384 = arith.constant 384 : index
    %c0_22 = arith.constant 0 : index
    %48 = vector.load %arg5[%c384, %c0_22] : memref<2048x128xbf16, #tpu.memory_space<vmem>>, vector<128x128xbf16>
    %cst_23 = arith.constant dense<0.000000e+00> : vector<16x128xf32>
    %49 = tpu.matmul %47, %48, %cst_23 {dimension_numbers = #tpu.dot_dimension_numbers<[1], [0], [0], [1], [0, 0, 1, 1], [], []>} : vector<16x128xbf16>, vector<128x128xbf16>, vector<16x128xf32> -> vector<16x128xf32>
    %c5 = arith.constant 5 : index
    %c0_24 = arith.constant 0 : index
    %50 = vector.load %arg6[%c5, %c0_24] : memref<16x128xf32, #tpu.memory_space<vmem>>, vector<1x128xf32>
    %51 = vector.broadcast %50 : vector<1x128xf32> to vector<16x128xf32>
    %52 = arith.addf %49, %51 : vector<16x128xf32>
    %cst_25 = arith.constant 0.000000e+00 : f32
    %53 = vector.broadcast %cst_25 : f32 to vector<16x128xf32>
    %54 = arith.maximumf %52, %53 : vector<16x128xf32>
    %cst_26 = arith.constant dense<0.000000e+00> : vector<128xf32>
    %55 = vector.multi_reduction <add>, %54, %cst_26 [0] : vector<16x128xf32> to vector<128xf32>
    %56 = vector.shape_cast %55 : vector<128xf32> to vector<1x128xf32>
    %cst_27 = arith.constant 1.600000e+01 : f32
    %57 = vector.broadcast %cst_27 : f32 to vector<1x128xf32>
    %58 = arith.divf %56, %57 : vector<1x128xf32>
    %59 = vector.broadcast %58 : vector<1x128xf32> to vector<16x128xf32>
    %60 = arith.subf %54, %59 : vector<16x128xf32>
    %61 = arith.mulf %60, %60 : vector<16x128xf32>
    %cst_28 = arith.constant dense<0.000000e+00> : vector<128xf32>
    %62 = vector.multi_reduction <add>, %61, %cst_28 [0] : vector<16x128xf32> to vector<128xf32>
    %63 = vector.shape_cast %62 : vector<128xf32> to vector<1x128xf32>
    %cst_29 = arith.constant 1.600000e+01 : f32
    %64 = vector.broadcast %cst_29 : f32 to vector<1x128xf32>
    %65 = arith.divf %63, %64 : vector<1x128xf32>
    %66 = vector.broadcast %58 : vector<1x128xf32> to vector<16x128xf32>
    %67 = arith.subf %54, %66 : vector<16x128xf32>
    %cst_30 = arith.constant 9.99999974E-6 : f32
    %68 = vector.broadcast %cst_30 : f32 to vector<1x128xf32>
    %69 = arith.addf %65, %68 : vector<1x128xf32>
    %70 = math.rsqrt %69 : vector<1x128xf32>
    %71 = vector.broadcast %70 : vector<1x128xf32> to vector<16x128xf32>
    %72 = arith.mulf %67, %71 : vector<16x128xf32>
    %c6 = arith.constant 6 : index
    %c0_31 = arith.constant 0 : index
    %73 = vector.load %arg6[%c6, %c0_31] : memref<16x128xf32, #tpu.memory_space<vmem>>, vector<1x128xf32>
    %74 = vector.broadcast %73 : vector<1x128xf32> to vector<16x128xf32>
    %75 = arith.mulf %72, %74 : vector<16x128xf32>
    %c7 = arith.constant 7 : index
    %c0_32 = arith.constant 0 : index
    %76 = vector.load %arg6[%c7, %c0_32] : memref<16x128xf32, #tpu.memory_space<vmem>>, vector<1x128xf32>
    %77 = vector.broadcast %76 : vector<1x128xf32> to vector<16x128xf32>
    %78 = arith.addf %75, %77 : vector<16x128xf32>
    %79 = arith.truncf %78 : vector<16x128xf32> to vector<16x128xbf16>
    %c512 = arith.constant 512 : index
    %c0_33 = arith.constant 0 : index
    %80 = vector.load %arg5[%c512, %c0_33] : memref<2048x128xbf16, #tpu.memory_space<vmem>>, vector<128x128xbf16>
    %cst_34 = arith.constant dense<0.000000e+00> : vector<16x128xf32>
    %81 = tpu.matmul %79, %80, %cst_34 {dimension_numbers = #tpu.dot_dimension_numbers<[1], [0], [0], [1], [0, 0, 1, 1], [], []>} : vector<16x128xbf16>, vector<128x128xbf16>, vector<16x128xf32> -> vector<16x128xf32>
    %c8 = arith.constant 8 : index
    %c0_35 = arith.constant 0 : index
    %82 = vector.load %arg6[%c8, %c0_35] : memref<16x128xf32, #tpu.memory_space<vmem>>, vector<1x128xf32>
    %83 = vector.broadcast %82 : vector<1x128xf32> to vector<16x128xf32>
    %84 = arith.addf %81, %83 : vector<16x128xf32>
    %cst_36 = arith.constant 0.000000e+00 : f32
    %85 = vector.broadcast %cst_36 : f32 to vector<16x128xf32>
    %86 = arith.maximumf %84, %85 : vector<16x128xf32>
    %87 = arith.truncf %86 : vector<16x128xf32> to vector<16x128xbf16>
    %c640 = arith.constant 640 : index
    %c0_37 = arith.constant 0 : index
    %88 = vector.load %arg5[%c640, %c0_37] : memref<2048x128xbf16, #tpu.memory_space<vmem>>, vector<128x128xbf16>
    %cst_38 = arith.constant dense<0.000000e+00> : vector<16x128xf32>
    %89 = tpu.matmul %87, %88, %cst_38 {dimension_numbers = #tpu.dot_dimension_numbers<[1], [0], [0], [1], [0, 0, 1, 1], [], []>} : vector<16x128xbf16>, vector<128x128xbf16>, vector<16x128xf32> -> vector<16x128xf32>
    %c9 = arith.constant 9 : index
    %c0_39 = arith.constant 0 : index
    %90 = vector.load %arg6[%c9, %c0_39] : memref<16x128xf32, #tpu.memory_space<vmem>>, vector<1x128xf32>
    %91 = vector.broadcast %90 : vector<1x128xf32> to vector<16x128xf32>
    %92 = arith.addf %89, %91 : vector<16x128xf32>
    %93 = arith.truncf %92 : vector<16x128xf32> to vector<16x128xbf16>
    %c0_40 = arith.constant 0 : index
    %c0_41 = arith.constant 0 : index
    %94 = vector.load %arg2[%c0_40, %c0_41] : memref<24x32xbf16, #tpu.memory_space<vmem>>, vector<24x32xbf16>
    %cst_42 = arith.constant dense<0.000000e+00> : vector<24x128xf32>
    %95 = tpu.matmul %94, %46, %cst_42 {dimension_numbers = #tpu.dot_dimension_numbers<[1], [0], [0], [1], [0, 0, 1, 1], [], []>} : vector<24x32xbf16>, vector<32x128xbf16>, vector<24x128xf32> -> vector<24x128xf32>
    %c0_43 = arith.constant 0 : index
    %c0_44 = arith.constant 0 : index
    %96 = vector.load %arg3[%c0_43, %c0_44] : memref<24x16xbf16, #tpu.memory_space<vmem>>, vector<24x16xbf16>
    %cst_45 = arith.constant dense<0.000000e+00> : vector<24x128xf32>
    %97 = tpu.matmul %96, %93, %cst_45 {dimension_numbers = #tpu.dot_dimension_numbers<[1], [0], [0], [1], [0, 0, 1, 1], [], []>} : vector<24x16xbf16>, vector<16x128xbf16>, vector<24x128xf32> -> vector<24x128xf32>
    %98 = arith.addf %95, %97 : vector<24x128xf32>
    %99 = arith.truncf %98 : vector<24x128xf32> to vector<24x128xbf16>
    %cst_46 = arith.constant dense<0.000000e+00> : vector<128xf32>
    %100 = vector.multi_reduction <add>, %98, %cst_46 [0] : vector<24x128xf32> to vector<128xf32>
    %101 = vector.shape_cast %100 : vector<128xf32> to vector<1x128xf32>
    %102 = arith.mulf %101, %101 : vector<1x128xf32>
    %cst_47 = arith.constant dense<0.000000e+00> : vector<1xf32>
    %103 = vector.multi_reduction <add>, %102, %cst_47 [1] : vector<1x128xf32> to vector<1xf32>
    %104 = vector.shape_cast %103 : vector<1xf32> to vector<1x1xf32>
    %cst_48 = arith.constant 1.000000e-16 : f32
    %105 = vector.broadcast %cst_48 : f32 to vector<1x1xf32>
    %106 = arith.maximumf %104, %105 : vector<1x1xf32>
    %107 = math.rsqrt %106 : vector<1x1xf32>
    %108 = vector.broadcast %107 : vector<1x1xf32> to vector<1x128xf32>
    %109 = arith.mulf %101, %108 : vector<1x128xf32>
    %110 = arith.truncf %109 : vector<1x128xf32> to vector<1x128xbf16>
    %c0_49 = arith.constant 0 : index
    %c0_50 = arith.constant 0 : index
    %111 = vector.load %arg4[%c0_49, %c0_50] : memref<24x24xbf16, #tpu.memory_space<vmem>>, vector<24x24xbf16>
    %cst_51 = arith.constant dense<0.000000e+00> : vector<24x128xf32>
    %112 = tpu.matmul %111, %99, %cst_51 {dimension_numbers = #tpu.dot_dimension_numbers<[1], [0], [0], [1], [0, 0, 1, 1], [], []>} : vector<24x24xbf16>, vector<24x128xbf16>, vector<24x128xf32> -> vector<24x128xf32>
    %113 = arith.truncf %112 : vector<24x128xf32> to vector<24x128xbf16>
    %c768 = arith.constant 768 : index
    %c0_52 = arith.constant 0 : index
    %114 = vector.load %arg5[%c768, %c0_52] : memref<2048x128xbf16, #tpu.memory_space<vmem>>, vector<128x128xbf16>
    %cst_53 = arith.constant dense<0.000000e+00> : vector<24x128xf32>
    %115 = tpu.matmul %113, %114, %cst_53 {dimension_numbers = #tpu.dot_dimension_numbers<[1], [0], [0], [1], [0, 0, 1, 1], [], []>} : vector<24x128xbf16>, vector<128x128xbf16>, vector<24x128xf32> -> vector<24x128xf32>
    %c896 = arith.constant 896 : index
    %c0_54 = arith.constant 0 : index
    %116 = vector.load %arg5[%c896, %c0_54] : memref<2048x128xbf16, #tpu.memory_space<vmem>>, vector<128x128xbf16>
    %cst_55 = arith.constant dense<0.000000e+00> : vector<24x128xf32>
    %117 = tpu.matmul %99, %116, %cst_55 {dimension_numbers = #tpu.dot_dimension_numbers<[1], [0], [0], [1], [0, 0, 1, 1], [], []>} : vector<24x128xbf16>, vector<128x128xbf16>, vector<24x128xf32> -> vector<24x128xf32>
    %118 = arith.addf %115, %117 : vector<24x128xf32>
    %c1024 = arith.constant 1024 : index
    %c0_56 = arith.constant 0 : index
    %119 = vector.load %arg5[%c1024, %c0_56] : memref<2048x128xbf16, #tpu.memory_space<vmem>>, vector<128x128xbf16>
    %cst_57 = arith.constant dense<0.000000e+00> : vector<1x128xf32>
    %120 = tpu.matmul %110, %119, %cst_57 {dimension_numbers = #tpu.dot_dimension_numbers<[1], [0], [0], [1], [0, 0, 1, 1], [], []>} : vector<1x128xbf16>, vector<128x128xbf16>, vector<1x128xf32> -> vector<1x128xf32>
    %121 = vector.broadcast %120 : vector<1x128xf32> to vector<24x128xf32>
    %122 = arith.addf %118, %121 : vector<24x128xf32>
    %c10 = arith.constant 10 : index
    %c0_58 = arith.constant 0 : index
    %123 = vector.load %arg6[%c10, %c0_58] : memref<16x128xf32, #tpu.memory_space<vmem>>, vector<1x128xf32>
    %124 = vector.broadcast %123 : vector<1x128xf32> to vector<24x128xf32>
    %125 = arith.addf %122, %124 : vector<24x128xf32>
    %cst_59 = arith.constant 0.000000e+00 : f32
    %126 = vector.broadcast %cst_59 : f32 to vector<24x128xf32>
    %127 = arith.maximumf %125, %126 : vector<24x128xf32>
    %128 = arith.truncf %127 : vector<24x128xf32> to vector<24x128xbf16>
    %c1152 = arith.constant 1152 : index
    %c0_60 = arith.constant 0 : index
    %129 = vector.load %arg5[%c1152, %c0_60] : memref<2048x128xbf16, #tpu.memory_space<vmem>>, vector<128x128xbf16>
    %cst_61 = arith.constant dense<0.000000e+00> : vector<24x128xf32>
    %130 = tpu.matmul %128, %129, %cst_61 {dimension_numbers = #tpu.dot_dimension_numbers<[1], [0], [0], [1], [0, 0, 1, 1], [], []>} : vector<24x128xbf16>, vector<128x128xbf16>, vector<24x128xf32> -> vector<24x128xf32>
    %c11 = arith.constant 11 : index
    %c0_62 = arith.constant 0 : index
    %131 = vector.load %arg6[%c11, %c0_62] : memref<16x128xf32, #tpu.memory_space<vmem>>, vector<1x128xf32>
    %132 = vector.broadcast %131 : vector<1x128xf32> to vector<24x128xf32>
    %133 = arith.addf %130, %132 : vector<24x128xf32>
    %cst_63 = arith.constant 0.000000e+00 : f32
    %134 = vector.broadcast %cst_63 : f32 to vector<24x128xf32>
    %135 = arith.maximumf %133, %134 : vector<24x128xf32>
    %136 = arith.truncf %135 : vector<24x128xf32> to vector<24x128xbf16>
    %c1280 = arith.constant 1280 : index
    %c0_64 = arith.constant 0 : index
    %137 = vector.load %arg5[%c1280, %c0_64] : memref<2048x128xbf16, #tpu.memory_space<vmem>>, vector<128x128xbf16>
    %cst_65 = arith.constant dense<0.000000e+00> : vector<24x128xf32>
    %138 = tpu.matmul %136, %137, %cst_65 {dimension_numbers = #tpu.dot_dimension_numbers<[1], [0], [0], [1], [0, 0, 1, 1], [], []>} : vector<24x128xbf16>, vector<128x128xbf16>, vector<24x128xf32> -> vector<24x128xf32>
    %c12 = arith.constant 12 : index
    %c0_66 = arith.constant 0 : index
    %139 = vector.load %arg6[%c12, %c0_66] : memref<16x128xf32, #tpu.memory_space<vmem>>, vector<1x128xf32>
    %140 = vector.broadcast %139 : vector<1x128xf32> to vector<24x128xf32>
    %141 = arith.addf %138, %140 : vector<24x128xf32>
    %142 = arith.mulf %141, %141 : vector<24x128xf32>
    %cst_67 = arith.constant dense<0.000000e+00> : vector<24xf32>
    %143 = vector.multi_reduction <add>, %142, %cst_67 [1] : vector<24x128xf32> to vector<24xf32>
    %144 = vector.shape_cast %143 : vector<24xf32> to vector<24x1xf32>
    %cst_68 = arith.constant 1.000000e-16 : f32
    %145 = vector.broadcast %cst_68 : f32 to vector<24x1xf32>
    %146 = arith.maximumf %144, %145 : vector<24x1xf32>
    %147 = math.rsqrt %146 : vector<24x1xf32>
    %148 = vector.broadcast %147 : vector<24x1xf32> to vector<24x128xf32>
    %149 = arith.mulf %141, %148 : vector<24x128xf32>
    %150 = arith.truncf %149 : vector<24x128xf32> to vector<24x128xbf16>
    %cst_69 = arith.constant dense<0.000000e+00> : vector<128xf32>
    %151 = vector.multi_reduction <add>, %149, %cst_69 [0] : vector<24x128xf32> to vector<128xf32>
    %152 = vector.shape_cast %151 : vector<128xf32> to vector<1x128xf32>
    %153 = arith.mulf %152, %152 : vector<1x128xf32>
    %cst_70 = arith.constant dense<0.000000e+00> : vector<1xf32>
    %154 = vector.multi_reduction <add>, %153, %cst_70 [1] : vector<1x128xf32> to vector<1xf32>
    %155 = vector.shape_cast %154 : vector<1xf32> to vector<1x1xf32>
    %cst_71 = arith.constant 1.000000e-16 : f32
    %156 = vector.broadcast %cst_71 : f32 to vector<1x1xf32>
    %157 = arith.maximumf %155, %156 : vector<1x1xf32>
    %158 = math.rsqrt %157 : vector<1x1xf32>
    %159 = vector.broadcast %158 : vector<1x1xf32> to vector<1x128xf32>
    %160 = arith.mulf %152, %159 : vector<1x128xf32>
    %161 = arith.truncf %160 : vector<1x128xf32> to vector<1x128xbf16>
    %cst_72 = arith.constant dense<0.000000e+00> : vector<24x128xf32>
    %162 = tpu.matmul %111, %150, %cst_72 {dimension_numbers = #tpu.dot_dimension_numbers<[1], [0], [0], [1], [0, 0, 1, 1], [], []>} : vector<24x24xbf16>, vector<24x128xbf16>, vector<24x128xf32> -> vector<24x128xf32>
    %163 = arith.truncf %162 : vector<24x128xf32> to vector<24x128xbf16>
    %c768_73 = arith.constant 768 : index
    %c0_74 = arith.constant 0 : index
    %164 = vector.load %arg5[%c768_73, %c0_74] : memref<2048x128xbf16, #tpu.memory_space<vmem>>, vector<128x128xbf16>
    %cst_75 = arith.constant dense<0.000000e+00> : vector<24x128xf32>
    %165 = tpu.matmul %163, %164, %cst_75 {dimension_numbers = #tpu.dot_dimension_numbers<[1], [0], [0], [1], [0, 0, 1, 1], [], []>} : vector<24x128xbf16>, vector<128x128xbf16>, vector<24x128xf32> -> vector<24x128xf32>
    %c896_76 = arith.constant 896 : index
    %c0_77 = arith.constant 0 : index
    %166 = vector.load %arg5[%c896_76, %c0_77] : memref<2048x128xbf16, #tpu.memory_space<vmem>>, vector<128x128xbf16>
    %cst_78 = arith.constant dense<0.000000e+00> : vector<24x128xf32>
    %167 = tpu.matmul %150, %166, %cst_78 {dimension_numbers = #tpu.dot_dimension_numbers<[1], [0], [0], [1], [0, 0, 1, 1], [], []>} : vector<24x128xbf16>, vector<128x128xbf16>, vector<24x128xf32> -> vector<24x128xf32>
    %168 = arith.addf %165, %167 : vector<24x128xf32>
    %c1024_79 = arith.constant 1024 : index
    %c0_80 = arith.constant 0 : index
    %169 = vector.load %arg5[%c1024_79, %c0_80] : memref<2048x128xbf16, #tpu.memory_space<vmem>>, vector<128x128xbf16>
    %cst_81 = arith.constant dense<0.000000e+00> : vector<1x128xf32>
    %170 = tpu.matmul %161, %169, %cst_81 {dimension_numbers = #tpu.dot_dimension_numbers<[1], [0], [0], [1], [0, 0, 1, 1], [], []>} : vector<1x128xbf16>, vector<128x128xbf16>, vector<1x128xf32> -> vector<1x128xf32>
    %171 = vector.broadcast %170 : vector<1x128xf32> to vector<24x128xf32>
    %172 = arith.addf %168, %171 : vector<24x128xf32>
    %c10_82 = arith.constant 10 : index
    %c0_83 = arith.constant 0 : index
    %173 = vector.load %arg6[%c10_82, %c0_83] : memref<16x128xf32, #tpu.memory_space<vmem>>, vector<1x128xf32>
    %174 = vector.broadcast %173 : vector<1x128xf32> to vector<24x128xf32>
    %175 = arith.addf %172, %174 : vector<24x128xf32>
    %cst_84 = arith.constant 0.000000e+00 : f32
    %176 = vector.broadcast %cst_84 : f32 to vector<24x128xf32>
    %177 = arith.maximumf %175, %176 : vector<24x128xf32>
    %178 = arith.truncf %177 : vector<24x128xf32> to vector<24x128xbf16>
    %c1152_85 = arith.constant 1152 : index
    %c0_86 = arith.constant 0 : index
    %179 = vector.load %arg5[%c1152_85, %c0_86] : memref<2048x128xbf16, #tpu.memory_space<vmem>>, vector<128x128xbf16>
    %cst_87 = arith.constant dense<0.000000e+00> : vector<24x128xf32>
    %180 = tpu.matmul %178, %179, %cst_87 {dimension_numbers = #tpu.dot_dimension_numbers<[1], [0], [0], [1], [0, 0, 1, 1], [], []>} : vector<24x128xbf16>, vector<128x128xbf16>, vector<24x128xf32> -> vector<24x128xf32>
    %c11_88 = arith.constant 11 : index
    %c0_89 = arith.constant 0 : index
    %181 = vector.load %arg6[%c11_88, %c0_89] : memref<16x128xf32, #tpu.memory_space<vmem>>, vector<1x128xf32>
    %182 = vector.broadcast %181 : vector<1x128xf32> to vector<24x128xf32>
    %183 = arith.addf %180, %182 : vector<24x128xf32>
    %cst_90 = arith.constant 0.000000e+00 : f32
    %184 = vector.broadcast %cst_90 : f32 to vector<24x128xf32>
    %185 = arith.maximumf %183, %184 : vector<24x128xf32>
    %186 = arith.truncf %185 : vector<24x128xf32> to vector<24x128xbf16>
    %c1280_91 = arith.constant 1280 : index
    %c0_92 = arith.constant 0 : index
    %187 = vector.load %arg5[%c1280_91, %c0_92] : memref<2048x128xbf16, #tpu.memory_space<vmem>>, vector<128x128xbf16>
    %cst_93 = arith.constant dense<0.000000e+00> : vector<24x128xf32>
    %188 = tpu.matmul %186, %187, %cst_93 {dimension_numbers = #tpu.dot_dimension_numbers<[1], [0], [0], [1], [0, 0, 1, 1], [], []>} : vector<24x128xbf16>, vector<128x128xbf16>, vector<24x128xf32> -> vector<24x128xf32>
    %c12_94 = arith.constant 12 : index
    %c0_95 = arith.constant 0 : index
    %189 = vector.load %arg6[%c12_94, %c0_95] : memref<16x128xf32, #tpu.memory_space<vmem>>, vector<1x128xf32>
    %190 = vector.broadcast %189 : vector<1x128xf32> to vector<24x128xf32>
    %191 = arith.addf %188, %190 : vector<24x128xf32>
    %192 = arith.mulf %191, %191 : vector<24x128xf32>
    %cst_96 = arith.constant dense<0.000000e+00> : vector<24xf32>
    %193 = vector.multi_reduction <add>, %192, %cst_96 [1] : vector<24x128xf32> to vector<24xf32>
    %194 = vector.shape_cast %193 : vector<24xf32> to vector<24x1xf32>
    %cst_97 = arith.constant 1.000000e-16 : f32
    %195 = vector.broadcast %cst_97 : f32 to vector<24x1xf32>
    %196 = arith.maximumf %194, %195 : vector<24x1xf32>
    %197 = math.rsqrt %196 : vector<24x1xf32>
    %198 = vector.broadcast %197 : vector<24x1xf32> to vector<24x128xf32>
    %199 = arith.mulf %191, %198 : vector<24x128xf32>
    %200 = arith.truncf %199 : vector<24x128xf32> to vector<24x128xbf16>
    %cst_98 = arith.constant dense<0.000000e+00> : vector<128xf32>
    %201 = vector.multi_reduction <add>, %199, %cst_98 [0] : vector<24x128xf32> to vector<128xf32>
    %202 = vector.shape_cast %201 : vector<128xf32> to vector<1x128xf32>
    %203 = arith.mulf %202, %202 : vector<1x128xf32>
    %cst_99 = arith.constant dense<0.000000e+00> : vector<1xf32>
    %204 = vector.multi_reduction <add>, %203, %cst_99 [1] : vector<1x128xf32> to vector<1xf32>
    %205 = vector.shape_cast %204 : vector<1xf32> to vector<1x1xf32>
    %cst_100 = arith.constant 1.000000e-16 : f32
    %206 = vector.broadcast %cst_100 : f32 to vector<1x1xf32>
    %207 = arith.maximumf %205, %206 : vector<1x1xf32>
    %208 = math.rsqrt %207 : vector<1x1xf32>
    %209 = vector.broadcast %208 : vector<1x1xf32> to vector<1x128xf32>
    %210 = arith.mulf %202, %209 : vector<1x128xf32>
    %211 = arith.truncf %210 : vector<1x128xf32> to vector<1x128xbf16>
    %cst_101 = arith.constant dense<0.000000e+00> : vector<24x128xf32>
    %212 = tpu.matmul %111, %200, %cst_101 {dimension_numbers = #tpu.dot_dimension_numbers<[1], [0], [0], [1], [0, 0, 1, 1], [], []>} : vector<24x24xbf16>, vector<24x128xbf16>, vector<24x128xf32> -> vector<24x128xf32>
    %213 = arith.truncf %212 : vector<24x128xf32> to vector<24x128xbf16>
    %c1408 = arith.constant 1408 : index
    %c0_102 = arith.constant 0 : index
    %214 = vector.load %arg5[%c1408, %c0_102] : memref<2048x128xbf16, #tpu.memory_space<vmem>>, vector<128x128xbf16>
    %cst_103 = arith.constant dense<0.000000e+00> : vector<24x128xf32>
    %215 = tpu.matmul %213, %214, %cst_103 {dimension_numbers = #tpu.dot_dimension_numbers<[1], [0], [0], [1], [0, 0, 1, 1], [], []>} : vector<24x128xbf16>, vector<128x128xbf16>, vector<24x128xf32> -> vector<24x128xf32>
    %c1536 = arith.constant 1536 : index
    %c0_104 = arith.constant 0 : index
    %216 = vector.load %arg5[%c1536, %c0_104] : memref<2048x128xbf16, #tpu.memory_space<vmem>>, vector<128x128xbf16>
    %cst_105 = arith.constant dense<0.000000e+00> : vector<24x128xf32>
    %217 = tpu.matmul %200, %216, %cst_105 {dimension_numbers = #tpu.dot_dimension_numbers<[1], [0], [0], [1], [0, 0, 1, 1], [], []>} : vector<24x128xbf16>, vector<128x128xbf16>, vector<24x128xf32> -> vector<24x128xf32>
    %218 = arith.addf %215, %217 : vector<24x128xf32>
    %c1664 = arith.constant 1664 : index
    %c0_106 = arith.constant 0 : index
    %219 = vector.load %arg5[%c1664, %c0_106] : memref<2048x128xbf16, #tpu.memory_space<vmem>>, vector<128x128xbf16>
    %cst_107 = arith.constant dense<0.000000e+00> : vector<1x128xf32>
    %220 = tpu.matmul %211, %219, %cst_107 {dimension_numbers = #tpu.dot_dimension_numbers<[1], [0], [0], [1], [0, 0, 1, 1], [], []>} : vector<1x128xbf16>, vector<128x128xbf16>, vector<1x128xf32> -> vector<1x128xf32>
    %221 = vector.broadcast %220 : vector<1x128xf32> to vector<24x128xf32>
    %222 = arith.addf %218, %221 : vector<24x128xf32>
    %c13 = arith.constant 13 : index
    %c0_108 = arith.constant 0 : index
    %223 = vector.load %arg6[%c13, %c0_108] : memref<16x128xf32, #tpu.memory_space<vmem>>, vector<1x128xf32>
    %224 = vector.broadcast %223 : vector<1x128xf32> to vector<24x128xf32>
    %225 = arith.addf %222, %224 : vector<24x128xf32>
    %cst_109 = arith.constant 0.000000e+00 : f32
    %226 = vector.broadcast %cst_109 : f32 to vector<24x128xf32>
    %227 = arith.maximumf %225, %226 : vector<24x128xf32>
    %228 = arith.truncf %227 : vector<24x128xf32> to vector<24x128xbf16>
    %c1792 = arith.constant 1792 : index
    %c0_110 = arith.constant 0 : index
    %229 = vector.load %arg5[%c1792, %c0_110] : memref<2048x128xbf16, #tpu.memory_space<vmem>>, vector<128x128xbf16>
    %cst_111 = arith.constant dense<0.000000e+00> : vector<24x128xf32>
    %230 = tpu.matmul %228, %229, %cst_111 {dimension_numbers = #tpu.dot_dimension_numbers<[1], [0], [0], [1], [0, 0, 1, 1], [], []>} : vector<24x128xbf16>, vector<128x128xbf16>, vector<24x128xf32> -> vector<24x128xf32>
    %c14 = arith.constant 14 : index
    %c0_112 = arith.constant 0 : index
    %231 = vector.load %arg6[%c14, %c0_112] : memref<16x128xf32, #tpu.memory_space<vmem>>, vector<1x128xf32>
    %232 = vector.broadcast %231 : vector<1x128xf32> to vector<24x128xf32>
    %233 = arith.addf %230, %232 : vector<24x128xf32>
    %cst_113 = arith.constant 0.000000e+00 : f32
    %234 = vector.broadcast %cst_113 : f32 to vector<24x128xf32>
    %235 = arith.maximumf %233, %234 : vector<24x128xf32>
    %236 = arith.truncf %235 : vector<24x128xf32> to vector<24x128xbf16>
    %c1920 = arith.constant 1920 : index
    %c0_114 = arith.constant 0 : index
    %237 = vector.load %arg5[%c1920, %c0_114] : memref<2048x128xbf16, #tpu.memory_space<vmem>>, vector<128x128xbf16>
    %cst_115 = arith.constant dense<0.000000e+00> : vector<24x128xf32>
    %238 = tpu.matmul %236, %237, %cst_115 {dimension_numbers = #tpu.dot_dimension_numbers<[1], [0], [0], [1], [0, 0, 1, 1], [], []>} : vector<24x128xbf16>, vector<128x128xbf16>, vector<24x128xf32> -> vector<24x128xf32>
    %c15 = arith.constant 15 : index
    %c0_116 = arith.constant 0 : index
    %239 = vector.load %arg6[%c15, %c0_116] : memref<16x128xf32, #tpu.memory_space<vmem>>, vector<1x128xf32>
    %240 = vector.broadcast %239 : vector<1x128xf32> to vector<24x128xf32>
    %241 = arith.addf %238, %240 : vector<24x128xf32>
    %242 = arith.mulf %241, %241 : vector<24x128xf32>
    %cst_117 = arith.constant dense<0.000000e+00> : vector<24xf32>
    %243 = vector.multi_reduction <add>, %242, %cst_117 [1] : vector<24x128xf32> to vector<24xf32>
    %244 = vector.shape_cast %243 : vector<24xf32> to vector<24x1xf32>
    %cst_118 = arith.constant 1.000000e-16 : f32
    %245 = vector.broadcast %cst_118 : f32 to vector<24x1xf32>
    %246 = arith.maximumf %244, %245 : vector<24x1xf32>
    %247 = math.rsqrt %246 : vector<24x1xf32>
    %248 = vector.broadcast %247 : vector<24x1xf32> to vector<24x128xf32>
    %249 = arith.mulf %241, %248 : vector<24x128xf32>
    %cst_119 = arith.constant dense<0.000000e+00> : vector<128xf32>
    %250 = vector.multi_reduction <add>, %249, %cst_119 [0] : vector<24x128xf32> to vector<128xf32>
    %251 = vector.shape_cast %250 : vector<128xf32> to vector<1x128xf32>
    %252 = arith.mulf %251, %251 : vector<1x128xf32>
    %cst_120 = arith.constant dense<0.000000e+00> : vector<1xf32>
    %253 = vector.multi_reduction <add>, %252, %cst_120 [1] : vector<1x128xf32> to vector<1xf32>
    %254 = vector.shape_cast %253 : vector<1xf32> to vector<1x1xf32>
    %cst_121 = arith.constant 1.000000e-16 : f32
    %255 = vector.broadcast %cst_121 : f32 to vector<1x1xf32>
    %256 = arith.maximumf %254, %255 : vector<1x1xf32>
    %257 = math.rsqrt %256 : vector<1x1xf32>
    %258 = vector.broadcast %257 : vector<1x1xf32> to vector<1x128xf32>
    %259 = arith.mulf %251, %258 : vector<1x128xf32>
    %c0_122 = arith.constant 0 : index
    %c0_123 = arith.constant 0 : index
    %260 = vector.load %arg7[%c0_122, %c0_123] : memref<24x128xf32, #tpu.memory_space<vmem>>, vector<24x128xf32>
    tpu.vector_store %arg7[%c0_122, %c0_123], %249 {strides = array<i32>} : memref<24x128xf32, #tpu.memory_space<vmem>>, vector<24x128xf32>,
    %c0_124 = arith.constant 0 : index
    %c0_125 = arith.constant 0 : index
    %261 = vector.load %arg8[%c0_124, %c0_125] : memref<1x128xf32, #tpu.memory_space<vmem>>, vector<1x128xf32>
    tpu.vector_store %arg8[%c0_124, %c0_125], %259 {strides = array<i32>} : memref<1x128xf32, #tpu.memory_space<vmem>>, vector<1x128xf32>,
    return
  }
}

</mosaic_0001>

<llo_original>
// kernel: tpu_custom_call.1
$region0: #{tpu_custom_call.1}
  #allocation0 [shape = 'u32[]', space=smem, size = 0x4, offset = 0x4, fixed_abs, tag = 'smem constant byte address 0x4 - core index']
  #allocation1 [shape = 'u32[144,128]{1,0:T(1,128)}', space=vmem, size = 0x12000, scoped, tag = 'internal scratch']
  %s0 = inlined_call_operand.vmem [shape: bf16[32,128], index: 0, kind: input, shape index: {}]
  %s1 = inlined_call_operand.hbm [shape: bf16[16,128], index: 1, kind: input, shape index: {}]
  %s2 = inlined_call_operand.hbm [shape: bf16[24,32], index: 2, kind: input, shape index: {}]
  %s3 = inlined_call_operand.vmem [shape: bf16[24,16], index: 3, kind: input, shape index: {}]
  %s4 = inlined_call_operand.hbm [shape: bf16[24,24], index: 4, kind: input, shape index: {}]
  %s5 = inlined_call_operand.hbm [shape: bf16[2048,128], index: 5, kind: input, shape index: {}]
  %s6 = inlined_call_operand.vmem [shape: f32[16,128], index: 6, kind: input, shape index: {}]
  %s7 = inlined_call_operand.hbm [shape: f32[24,128], index: 7, kind: output, shape index: {0}]
  %s8 = inlined_call_operand.hbm [shape: f32[1,128], index: 8, kind: output, shape index: {1}]
  %9 = xla_tuple %s7, %s8
  %s10 = sld [smem:[#allocation0]]
  $region62: #{tpu_custom_call.1} parent=0
    _
  %s12 = ssub.s32 1, %s10
  %s13 = scalar_select 0, %s12, %s10
  $region1: #{tpu_custom_call.1} parent=0
    #allocation2 [shape = 'u8[4096]{0}', space=vmem, size = 0x1000, scoped, tag = 'input window, operand 1, single buffered']
    #allocation3 [shape = 's32[1]{0}', space=sflag, size = 0x4, scoped, tag = 'scoped memory for tpu_custom_call.1']
    #allocation4 [shape = 's32[1]{0}', space=sflag, size = 0x4, scoped, tag = 'scoped memory for tpu_custom_call.1']
    #allocation5 [shape = 'u8[6144]{0}', space=vmem, size = 0x1800, scoped, tag = 'input window, operand 2, single buffered']
    #allocation6 [shape = 's32[1]{0}', space=sflag, size = 0x4, scoped, tag = 'scoped memory for tpu_custom_call.1']
    #allocation7 [shape = 'u8[6144]{0}', space=vmem, size = 0x1800, scoped, tag = 'input window, operand 4, single buffered']
    #allocation8 [shape = 'u8[524288]{0}', space=vmem, size = 0x80000, scoped, tag = 'input window, operand 5, single buffered']
    #allocation9 [shape = 's32[1]{0}', space=sflag, size = 0x4, scoped, tag = 'scoped memory for tpu_custom_call.1']
    #allocation10 [shape = 'u8[12288]{0}', space=vmem, size = 0x3000, scoped, tag = 'output window, operand 0, single buffered']
    #allocation11 [shape = 'u8[512]{0}', space=vmem, size = 0x400, scoped, tag = 'output window, operand 1, single buffered']
    #allocation12 [shape = 's32[1]{0}', space=sflag, size = 0x4, scoped, tag = 'scoped memory for tpu_custom_call.1']
    %14 = vsyncpa [#allocation3], 0
    %15 = vsyncpa [#allocation6], 0
    %16 = vsyncpa [#allocation9], 0
    %17 = vsyncpa [#allocation4], 0
    %18 = vsyncpa [#allocation12], 0
    // Predicated region
    $region2: #{tpu_custom_call.1} parent=1 // pred_check
      _
    $region3: #{tpu_custom_call.1} parent=1 // pred_check_branch
      %20 = sbr.rel (0) target = $region5
    $region4: #{tpu_custom_call.1} parent=1 // pred_region
      _
    $region5: #{tpu_custom_call.1} parent=1 // pred_fallthru
      _
    // Predicated region
    $region6: #{tpu_custom_call.1} parent=1 // pred_check
      _
    $region7: #{tpu_custom_call.1} parent=1 // pred_check_branch
      %22 = sbr.rel (0) target = $region9
    $region8: #{tpu_custom_call.1} parent=1 // pred_region
      %s24 = ssub.s32 128, 128
      %25 = vsyncadd [#allocation3], %s24
      %s26 = sshll.u32 [#allocation2], 4
      %s27 = int_to_ptr.vmem [resolvable:$true] %s26
      %32 = dma.hbm_to_vmem [thread:$0]  %s1, 128, %s27, [#allocation3], 64, 64, 4
    $region9: #{tpu_custom_call.1} parent=1 // pred_fallthru
      _
    // Predicated region
    $region10: #{tpu_custom_call.1} parent=1 // pred_check
      _
    $region11: #{tpu_custom_call.1} parent=1 // pred_check_branch
      %34 = sbr.rel (0) target = $region13
    $region12: #{tpu_custom_call.1} parent=1 // pred_region
      %s36 = ssub.s32 192, 192
      %37 = vsyncadd [#allocation6], %s36
      %s38 = sshll.u32 [#allocation5], 4
      %s39 = int_to_ptr.vmem [resolvable:$true] %s38
      %44 = dma.hbm_to_vmem [thread:$0]  %s2, 192, %s39, [#allocation6], 64, 64, 4
    $region13: #{tpu_custom_call.1} parent=1 // pred_fallthru
      _
    // Predicated region
    $region14: #{tpu_custom_call.1} parent=1 // pred_check
      _
    $region15: #{tpu_custom_call.1} parent=1 // pred_check_branch
      %46 = sbr.rel (0) target = $region17
    $region16: #{tpu_custom_call.1} parent=1 // pred_region
      _
    $region17: #{tpu_custom_call.1} parent=1 // pred_fallthru
      _
    // Predicated region
    $region18: #{tpu_custom_call.1} parent=1 // pred_check
      _
    $region19: #{tpu_custom_call.1} parent=1 // pred_check_branch
      %48 = sbr.rel (0) target = $region21
    $region20: #{tpu_custom_call.1} parent=1 // pred_region
      %s50 = ssub.s32 192, 192
      %51 = vsyncadd [#allocation6], %s50
      %s52 = sshll.u32 [#allocation7], 4
      %s53 = int_to_ptr.vmem [resolvable:$true] %s52
      %58 = dma.hbm_to_vmem [thread:$0]  %s4, 192, %s53, [#allocation6], 64, 64, 4
    $region21: #{tpu_custom_call.1} parent=1 // pred_fallthru
      _
    // Predicated region
    $region22: #{tpu_custom_call.1} parent=1 // pred_check
      _
    $region23: #{tpu_custom_call.1} parent=1 // pred_check_branch
      %60 = sbr.rel (0) target = $region25
    $region24: #{tpu_custom_call.1} parent=1 // pred_region
      %s62 = ssub.s32 16384, 16384
      %63 = vsyncadd [#allocation9], %s62
      %s64 = sshll.u32 [#allocation8], 4
      %s65 = int_to_ptr.vmem [resolvable:$true] %s64
      %70 = dma.hbm_to_vmem [thread:$0]  %s5, 16384, %s65, [#allocation9], 64, 64, 4
    $region25: #{tpu_custom_call.1} parent=1 // pred_fallthru
      _
    // Predicated region
    $region26: #{tpu_custom_call.1} parent=1 // pred_check
      _
    $region27: #{tpu_custom_call.1} parent=1 // pred_check_branch
      %72 = sbr.rel (0) target = $region29
    $region28: #{tpu_custom_call.1} parent=1 // pred_region
      _
    $region29: #{tpu_custom_call.1} parent=1 // pred_fallthru
      _
    // Predicated region
    $region30: #{tpu_custom_call.1} parent=1 // pred_check
      _
    $region31: #{tpu_custom_call.1} parent=1 // pred_check_branch
      %74 = sbr.rel (0) target = $region33
    $region32: #{tpu_custom_call.1} parent=1 // pred_region
      %75 = dma.done [#allocation3], 128
    $region33: #{tpu_custom_call.1} parent=1 // pred_fallthru
      _
    // Predicated region
    $region34: #{tpu_custom_call.1} parent=1 // pred_check
      _
    $region35: #{tpu_custom_call.1} parent=1 // pred_check_branch
      %77 = sbr.rel (0) target = $region37
    $region36: #{tpu_custom_call.1} parent=1 // pred_region
      %78 = dma.done [#allocation6], 192
    $region37: #{tpu_custom_call.1} parent=1 // pred_fallthru
      _
    // Predicated region
    $region38: #{tpu_custom_call.1} parent=1 // pred_check
      _
    $region39: #{tpu_custom_call.1} parent=1 // pred_check_branch
      %80 = sbr.rel (0) target = $region41
    $region40: #{tpu_custom_call.1} parent=1 // pred_region
      %81 = dma.done [#allocation6], 192
    $region41: #{tpu_custom_call.1} parent=1 // pred_fallthru
      _
    // Predicated region
    $region42: #{tpu_custom_call.1} parent=1 // pred_check
      _
    $region43: #{tpu_custom_call.1} parent=1 // pred_check_branch
      %83 = sbr.rel (0) target = $region45
    $region44: #{tpu_custom_call.1} parent=1 // pred_region
      %84 = dma.done [#allocation9], 16384
    $region45: #{tpu_custom_call.1} parent=1 // pred_fallthru
      _
    %v86 = vld [vmem:[%s0] sm:$0xf]
    %v87 = vld [vmem:[%s0 + $0x4] sm:$0xf]
    %v88 = vld [vmem:[%s0 + $0x8] sm:$0xf]
    %v89 = vld [vmem:[%s0 + $0xc] sm:$0xf]
    %v90 = vld [vmem:[#allocation8] sm:$0xf]
    %v91 = vld [vmem:[#allocation8 + $0x4] sm:$0xf]
    %v92 = vld [vmem:[#allocation8 + $0x8] sm:$0xf]
    %v93 = vld [vmem:[#allocation8 + $0xc] sm:$0xf]
    %v94 = vld [vmem:[#allocation8 + $0x10] sm:$0xf]
    %v95 = vld [vmem:[#allocation8 + $0x14] sm:$0xf]
    %v96 = vld [vmem:[#allocation8 + $0x18] sm:$0xf]
    %v97 = vld [vmem:[#allocation8 + $0x1c] sm:$0xf]
    %v98 = vld [vmem:[#allocation8 + $0x20] sm:$0xf]
    %v99 = vld [vmem:[#allocation8 + $0x24] sm:$0xf]
    %v100 = vld [vmem:[#allocation8 + $0x28] sm:$0xf]
    %v101 = vld [vmem:[#allocation8 + $0x2c] sm:$0xf]
    %v102 = vld [vmem:[#allocation8 + $0x30] sm:$0xf]
    %v103 = vld [vmem:[#allocation8 + $0x34] sm:$0xf]
    %v104 = vld [vmem:[#allocation8 + $0x38] sm:$0xf]
    %v105 = vld [vmem:[#allocation8 + $0x3c] sm:$0xf]
    %v106 = vld [vmem:[%s6] sm:$0x1]
    %v107 = vlaneseq
    %v108 = vshrl.u32 %v107, 7
    %v109 = vsub.s32 0, %v108
    %v110 = vrot.slane %v106, %v109
    %v115 = vunpack.c.l.b16 %v86
    %v116 = vunpack.c.l.b16 %v87
    %v117 = vunpack.c.l.b16 %v88
    %v118 = vunpack.c.l.b16 %v89
    %v119 = vpack.c.b16 %v116, %v115
    %v120 = vpack.c.b16 %v118, %v117
    %v139 = vunpack.c.l.b16 %v90
    %v140 = vunpack.c.l.b16 %v91
    %v141 = vunpack.c.l.b16 %v92
    %v142 = vunpack.c.l.b16 %v93
    %v143 = vunpack.c.l.b16 %v94
    %v144 = vunpack.c.l.b16 %v95
    %v145 = vunpack.c.l.b16 %v96
    %v146 = vunpack.c.l.b16 %v97
    %v147 = vunpack.c.l.b16 %v98
    %v148 = vunpack.c.l.b16 %v99
    %v149 = vunpack.c.l.b16 %v100
    %v150 = vunpack.c.l.b16 %v101
    %v151 = vunpack.c.l.b16 %v102
    %v152 = vunpack.c.l.b16 %v103
    %v153 = vunpack.c.l.b16 %v104
    %v154 = vunpack.c.l.b16 %v105
    %v155 = vpack.c.b16 %v140, %v139
    %v156 = vpack.c.b16 %v142, %v141
    %v157 = vpack.c.b16 %v144, %v143
    %v158 = vpack.c.b16 %v146, %v145
    %v159 = vpack.c.b16 %v148, %v147
    %v160 = vpack.c.b16 %v150, %v149
    %v161 = vpack.c.b16 %v152, %v151
    %v162 = vpack.c.b16 %v154, %v153
    %171 = vmatprep.subr.bf16.mxu0 0
    %172 = vmatpush1.bf16.msra.mxu0 %v155
    %173 = vmatprep.subr.bf16.mxu0 0
    %174 = vmatpush1.bf16.msra.mxu0 %v156
    %175 = vmatprep.subr.bf16.mxu0 0
    %176 = vmatpush1.bf16.msra.mxu0 %v157
    %177 = vmatprep.subr.bf16.mxu0 0
    %178 = vmatpush1.bf16.msra.mxu0 %v158
    %179 = vmatprep.subr.bf16.mxu0 0
    %180 = vmatpush1.bf16.msra.mxu0 %v159
    %181 = vmatprep.subr.bf16.mxu0 0
    %182 = vmatpush1.bf16.msra.mxu0 %v160
    %183 = vmatprep.subr.bf16.mxu0 0
    %184 = vmatpush1.bf16.msra.mxu0 %v161
    %185 = vmatprep.subr.bf16.mxu0 0
    %186 = vmatpush1.bf16.msra.mxu0 %v162
    %187 = vmatprep.subr.bf16.mxu0 0
    %188 = vmatpush1.bf16.msra.mxu0 0
    %189 = vmatprep.subr.bf16.mxu0 0
    %190 = vmatpush1.bf16.msra.mxu0 0
    %191 = vmatprep.subr.bf16.mxu0 0
    %192 = vmatpush1.bf16.msra.mxu0 0
    %193 = vmatprep.subr.bf16.mxu0 0
    %194 = vmatpush1.bf16.msra.mxu0 0
    %195 = vmatprep.subr.bf16.mxu0 0
    %196 = vmatpush1.bf16.msra.mxu0 0
    %197 = vmatprep.subr.bf16.mxu0 0
    %198 = vmatpush1.bf16.msra.mxu0 0
    %199 = vmatprep.subr.bf16.mxu0 0
    %200 = vmatpush1.bf16.msra.mxu0 0
    %201 = vmatprep.subr.bf16.mxu0 0
    %202 = vmatpush1.bf16.msra.mxu0 0
    %203 = vmatprep.mubr.bf16.mxu0 0
    %204 = vmatmul.mubr.bf16.gmra.mrb[0].mxu0 %v119
    %v205 = vpop.f32.mrb[0].mxu0
    %v206 = vadd.f32 %v110, %v205
    %v207 = vpop.f32.mrb[0].mxu0
    %v208 = vpop.f32.mrb[0].mxu0
    %v209 = vadd.f32 %v110, %v208
    %v210 = vpop.f32.mrb[0].mxu0
    %211 = vmatprep.mubr.bf16.mxu0 0
    %212 = vmatmul.mubr.bf16.gmra.mrb[0].mxu0 %v120
    %v213 = vpop.f32.mrb[0].mxu0
    %v214 = vadd.f32 %v110, %v213
    %v215 = vpop.f32.mrb[0].mxu0
    %v216 = vpop.f32.mrb[0].mxu0
    %v217 = vadd.f32 %v110, %v216
    %v218 = vpop.f32.mrb[0].mxu0
    %219 = vdwg.mxu0
    %v220 = vmax.f32 %v206, 0.0
    %v221 = vmax.f32 %v209, 0.0
    %v222 = vmax.f32 %v214, 0.0
    %v223 = vmax.f32 %v217, 0.0
    %v224 = vadd.f32 %v220, %v221
    %v225 = vadd.f32 %v224, %v222
    %v226 = vadd.f32 %v225, %v223
    %v227 = vrot.slane %v226, 4
    %v228 = vadd.f32 %v226, %v227
    %v229 = vrot.slane %v228, 2
    %v230 = vadd.f32 %v228, %v229
    %v231 = vrot.slane %v230, 1
    %v232 = vadd.f32 %v230, %v231
    %v233 = vrcp.pop 32.0
    %v234 = vmul.f32 %v232, %v233
    %v235 = vsub.f32 %v220, %v234
    %v236 = vsub.f32 %v221, %v234
    %v237 = vsub.f32 %v222, %v234
    %v238 = vsub.f32 %v223, %v234
    %v239 = vmul.f32 %v235, %v235
    %v240 = vmul.f32 %v236, %v236
    %v241 = vmul.f32 %v237, %v237
    %v242 = vmul.f32 %v238, %v238
    %v243 = vadd.f32 %v239, %v240
    %v244 = vadd.f32 %v243, %v241
    %v245 = vadd.f32 %v244, %v242
    %v246 = vrot.slane %v245, 4
    %v247 = vadd.f32 %v245, %v246
    %v248 = vrot.slane %v247, 2
    %v249 = vadd.f32 %v247, %v248
    %v250 = vrot.slane %v249, 1
    %v251 = vadd.f32 %v249, %v250
    %v252 = vmul.f32 %v251, %v233
    %v253 = vadd.f32 %v252, 1e-05
    %v254 = vrsqrt.pop %v253
    %v255 = vmul.f32 %v235, %v254
    %v256 = vmul.f32 %v236, %v254
    %v257 = vmul.f32 %v237, %v254
    %v258 = vmul.f32 %v238, %v254
    %v259 = vld [vmem:[%s6 + $0x1] sm:$0x1]
    %v260 = vlaneseq
    %v261 = vshrl.u32 %v260, 7
    %v262 = vsub.s32 0, %v261
    %v263 = vrot.slane %v259, %v262
    %v264 = vmul.f32 %v255, %v263
    %v265 = vmul.f32 %v256, %v263
    %v266 = vmul.f32 %v257, %v263
    %v267 = vmul.f32 %v258, %v263
    %v268 = vld [vmem:[%s6 + $0x2] sm:$0x1]
    %v269 = vlaneseq
    %v270 = vshrl.u32 %v269, 7
    %v271 = vsub.s32 0, %v270
    %v272 = vrot.slane %v268, %v271
    %v273 = vadd.f32 %v264, %v272
    %v274 = vadd.f32 %v265, %v272
    %v275 = vadd.f32 %v266, %v272
    %v276 = vadd.f32 %v267, %v272
    %v277 = vpack.c.bf16 %v274, %v273
    %v278 = vpack.c.bf16 %v276, %v275
    %v279 = vld [vmem:[#allocation8 + $0x40] sm:$0xf]
    %v280 = vld [vmem:[#allocation8 + $0x44] sm:$0xf]
    %v281 = vld [vmem:[#allocation8 + $0x48] sm:$0xf]
    %v282 = vld [vmem:[#allocation8 + $0x4c] sm:$0xf]
    %v283 = vld [vmem:[#allocation8 + $0x50] sm:$0xf]
    %v284 = vld [vmem:[#allocation8 + $0x54] sm:$0xf]
    %v285 = vld [vmem:[#allocation8 + $0x58] sm:$0xf]
    %v286 = vld [vmem:[#allocation8 + $0x5c] sm:$0xf]
    %v287 = vld [vmem:[#allocation8 + $0x60] sm:$0xf]
    %v288 = vld [vmem:[#allocation8 + $0x64] sm:$0xf]
    %v289 = vld [vmem:[#allocation8 + $0x68] sm:$0xf]
    %v290 = vld [vmem:[#allocation8 + $0x6c] sm:$0xf]
    %v291 = vld [vmem:[#allocation8 + $0x70] sm:$0xf]
    %v292 = vld [vmem:[#allocation8 + $0x74] sm:$0xf]
    %v293 = vld [vmem:[#allocation8 + $0x78] sm:$0xf]
    %v294 = vld [vmem:[#allocation8 + $0x7c] sm:$0xf]
    %v295 = vld [vmem:[%s6 + $0x3] sm:$0x1]
    %v296 = vlaneseq
    %v297 = vshrl.u32 %v296, 7
    %v298 = vsub.s32 0, %v297
    %v299 = vrot.slane %v295, %v298
    %v316 = vunpack.c.l.b16 %v279
    %v317 = vunpack.c.l.b16 %v280
    %v318 = vunpack.c.l.b16 %v281
    %v319 = vunpack.c.l.b16 %v282
    %v320 = vunpack.c.l.b16 %v283
    %v321 = vunpack.c.l.b16 %v284
    %v322 = vunpack.c.l.b16 %v285
    %v323 = vunpack.c.l.b16 %v286
    %v324 = vunpack.c.l.b16 %v287
    %v325 = vunpack.c.l.b16 %v288
    %v326 = vunpack.c.l.b16 %v289
    %v327 = vunpack.c.l.b16 %v290
    %v328 = vunpack.c.l.b16 %v291
    %v329 = vunpack.c.l.b16 %v292
    %v330 = vunpack.c.l.b16 %v293
    %v331 = vunpack.c.l.b16 %v294
    %v332 = vpack.c.b16 %v317, %v316
    %v333 = vpack.c.b16 %v319, %v318
    %v334 = vpack.c.b16 %v321, %v320
    %v335 = vpack.c.b16 %v323, %v322
    %v336 = vpack.c.b16 %v325, %v324
    %v337 = vpack.c.b16 %v327, %v326
    %v338 = vpack.c.b16 %v329, %v328
    %v339 = vpack.c.b16 %v331, %v330
    %348 = vmatprep.subr.bf16.mxu0 0
    %349 = vmatpush1.bf16.msra.mxu0 %v332
    %350 = vmatprep.subr.bf16.mxu0 0
    %351 = vmatpush1.bf16.msra.mxu0 %v333
    %352 = vmatprep.subr.bf16.mxu0 0
    %353 = vmatpush1.bf16.msra.mxu0 %v334
    %354 = vmatprep.subr.bf16.mxu0 0
    %355 = vmatpush1.bf16.msra.mxu0 %v335
    %356 = vmatprep.subr.bf16.mxu0 0
    %357 = vmatpush1.bf16.msra.mxu0 %v336
    %358 = vmatprep.subr.bf16.mxu0 0
    %359 = vmatpush1.bf16.msra.mxu0 %v337
    %360 = vmatprep.subr.bf16.mxu0 0
    %361 = vmatpush1.bf16.msra.mxu0 %v338
    %362 = vmatprep.subr.bf16.mxu0 0
    %363 = vmatpush1.bf16.msra.mxu0 %v339
    %364 = vmatprep.subr.bf16.mxu0 0
    %365 = vmatpush1.bf16.msra.mxu0 0
    %366 = vmatprep.subr.bf16.mxu0 0
    %367 = vmatpush1.bf16.msra.mxu0 0
    %368 = vmatprep.subr.bf16.mxu0 0
    %369 = vmatpush1.bf16.msra.mxu0 0
    %370 = vmatprep.subr.bf16.mxu0 0
    %371 = vmatpush1.bf16.msra.mxu0 0
    %372 = vmatprep.subr.bf16.mxu0 0
    %373 = vmatpush1.bf16.msra.mxu0 0
    %374 = vmatprep.subr.bf16.mxu0 0
    %375 = vmatpush1.bf16.msra.mxu0 0
    %376 = vmatprep.subr.bf16.mxu0 0
    %377 = vmatpush1.bf16.msra.mxu0 0
    %378 = vmatprep.subr.bf16.mxu0 0
    %379 = vmatpush1.bf16.msra.mxu0 0
    %380 = vmatprep.mubr.bf16.mxu0 0
    %381 = vmatmul.mubr.bf16.gmra.mrb[0].mxu0 %v277
    %v382 = vpop.f32.mrb[0].mxu0
    %v383 = vadd.f32 %v299, %v382
    %v384 = vpop.f32.mrb[0].mxu0
    %v385 = vpop.f32.mrb[0].mxu0
    %v386 = vadd.f32 %v299, %v385
    %v387 = vpop.f32.mrb[0].mxu0
    %388 = vmatprep.mubr.bf16.mxu0 0
    %389 = vmatmul.mubr.bf16.gmra.mrb[0].mxu0 %v278
    %v390 = vpop.f32.mrb[0].mxu0
    %v391 = vadd.f32 %v299, %v390
    %v392 = vpop.f32.mrb[0].mxu0
    %v393 = vpop.f32.mrb[0].mxu0
    %v394 = vadd.f32 %v299, %v393
    %v395 = vpop.f32.mrb[0].mxu0
    %396 = vdwg.mxu0
    %v397 = vmax.f32 %v383, 0.0
    %v398 = vmax.f32 %v386, 0.0
    %v399 = vmax.f32 %v391, 0.0
    %v400 = vmax.f32 %v394, 0.0
    %v401 = vpack.c.bf16 %v398, %v397
    %v402 = vpack.c.bf16 %v400, %v399
    %v403 = vld [vmem:[#allocation8 + $0x80] sm:$0xf]
    %v404 = vld [vmem:[#allocation8 + $0x84] sm:$0xf]
    %v405 = vld [vmem:[#allocation8 + $0x88] sm:$0xf]
    %v406 = vld [vmem:[#allocation8 + $0x8c] sm:$0xf]
    %v407 = vld [vmem:[#allocation8 + $0x90] sm:$0xf]
    %v408 = vld [vmem:[#allocation8 + $0x94] sm:$0xf]
    %v409 = vld [vmem:[#allocation8 + $0x98] sm:$0xf]
    %v410 = vld [vmem:[#allocation8 + $0x9c] sm:$0xf]
    %v411 = vld [vmem:[#allocation8 + $0xa0] sm:$0xf]
    %v412 = vld [vmem:[#allocation8 + $0xa4] sm:$0xf]
    %v413 = vld [vmem:[#allocation8 + $0xa8] sm:$0xf]
    %v414 = vld [vmem:[#allocation8 + $0xac] sm:$0xf]
    %v415 = vld [vmem:[#allocation8 + $0xb0] sm:$0xf]
    %v416 = vld [vmem:[#allocation8 + $0xb4] sm:$0xf]
    %v417 = vld [vmem:[#allocation8 + $0xb8] sm:$0xf]
    %v418 = vld [vmem:[#allocation8 + $0xbc] sm:$0xf]
    %v419 = vld [vmem:[%s6 + $0x4] sm:$0x1]
    %v420 = vlaneseq
    %v421 = vshrl.u32 %v420, 7
    %v422 = vsub.s32 0, %v421
    %v423 = vrot.slane %v419, %v422
    %v440 = vunpack.c.l.b16 %v403
    %v441 = vunpack.c.l.b16 %v404
    %v442 = vunpack.c.l.b16 %v405
    %v443 = vunpack.c.l.b16 %v406
    %v444 = vunpack.c.l.b16 %v407
    %v445 = vunpack.c.l.b16 %v408
    %v446 = vunpack.c.l.b16 %v409
    %v447 = vunpack.c.l.b16 %v410
    %v448 = vunpack.c.l.b16 %v411
    %v449 = vunpack.c.l.b16 %v412
    %v450 = vunpack.c.l.b16 %v413
    %v451 = vunpack.c.l.b16 %v414
    %v452 = vunpack.c.l.b16 %v415
    %v453 = vunpack.c.l.b16 %v416
    %v454 = vunpack.c.l.b16 %v417
    %v455 = vunpack.c.l.b16 %v418
    %v456 = vpack.c.b16 %v441, %v440
    %v457 = vpack.c.b16 %v443, %v442
    %v458 = vpack.c.b16 %v445, %v444
    %v459 = vpack.c.b16 %v447, %v446
    %v460 = vpack.c.b16 %v449, %v448
    %v461 = vpack.c.b16 %v451, %v450
    %v462 = vpack.c.b16 %v453, %v452
    %v463 = vpack.c.b16 %v455, %v454
    %472 = vmatprep.subr.bf16.mxu0 0
    %473 = vmatpush1.bf16.msra.mxu0 %v456
    %474 = vmatprep.subr.bf16.mxu0 0
    %475 = vmatpush1.bf16.msra.mxu0 %v457
    %476 = vmatprep.subr.bf16.mxu0 0
    %477 = vmatpush1.bf16.msra.mxu0 %v458
    %478 = vmatprep.subr.bf16.mxu0 0
    %479 = vmatpush1.bf16.msra.mxu0 %v459
    %480 = vmatprep.subr.bf16.mxu0 0
    %481 = vmatpush1.bf16.msra.mxu0 %v460
    %482 = vmatprep.subr.bf16.mxu0 0
    %483 = vmatpush1.bf16.msra.mxu0 %v461
    %484 = vmatprep.subr.bf16.mxu0 0
    %485 = vmatpush1.bf16.msra.mxu0 %v462
    %486 = vmatprep.subr.bf16.mxu0 0
    %487 = vmatpush1.bf16.msra.mxu0 %v463
    %488 = vmatprep.subr.bf16.mxu0 0
    %489 = vmatpush1.bf16.msra.mxu0 0
    %490 = vmatprep.subr.bf16.mxu0 0
    %491 = vmatpush1.bf16.msra.mxu0 0
    %492 = vmatprep.subr.bf16.mxu0 0
    %493 = vmatpush1.bf16.msra.mxu0 0
    %494 = vmatprep.subr.bf16.mxu0 0
    %495 = vmatpush1.bf16.msra.mxu0 0
    %496 = vmatprep.subr.bf16.mxu0 0
    %497 = vmatpush1.bf16.msra.mxu0 0
    %498 = vmatprep.subr.bf16.mxu0 0
    %499 = vmatpush1.bf16.msra.mxu0 0
    %500 = vmatprep.subr.bf16.mxu0 0
    %501 = vmatpush1.bf16.msra.mxu0 0
    %502 = vmatprep.subr.bf16.mxu0 0
    %503 = vmatpush1.bf16.msra.mxu0 0
    %504 = vmatprep.mubr.bf16.mxu0 0
    %505 = vmatmul.mubr.bf16.gmra.mrb[0].mxu0 %v401
    %v506 = vpop.f32.mrb[0].mxu0
    %v507 = vadd.f32 %v423, %v506
    %v508 = vpop.f32.mrb[0].mxu0
    %v509 = vpop.f32.mrb[0].mxu0
    %v510 = vadd.f32 %v423, %v509
    %v511 = vpop.f32.mrb[0].mxu0
    %512 = vmatprep.mubr.bf16.mxu0 0
    %513 = vmatmul.mubr.bf16.gmra.mrb[0].mxu0 %v402
    %v514 = vpop.f32.mrb[0].mxu0
    %v515 = vadd.f32 %v423, %v514
    %v516 = vpop.f32.mrb[0].mxu0
    %v517 = vpop.f32.mrb[0].mxu0
    %v518 = vadd.f32 %v423, %v517
    %v519 = vpop.f32.mrb[0].mxu0
    %520 = vdwg.mxu0
    %v521 = vpack.c.bf16 %v510, %v507
    %v522 = vpack.c.bf16 %v518, %v515
    %v523 = vld [vmem:[#allocation2] sm:$0xf]
    %v524 = vld [vmem:[#allocation2 + $0x4] sm:$0xf]
    %v525 = vld [vmem:[#allocation8 + $0xc0] sm:$0xf]
    %v526 = vld [vmem:[#allocation8 + $0xc4] sm:$0xf]
    %v527 = vld [vmem:[#allocation8 + $0xc8] sm:$0xf]
    %v528 = vld [vmem:[#allocation8 + $0xcc] sm:$0xf]
    %v529 = vld [vmem:[#allocation8 + $0xd0] sm:$0xf]
    %v530 = vld [vmem:[#allocation8 + $0xd4] sm:$0xf]
    %v531 = vld [vmem:[#allocation8 + $0xd8] sm:$0xf]
    %v532 = vld [vmem:[#allocation8 + $0xdc] sm:$0xf]
    %v533 = vld [vmem:[#allocation8 + $0xe0] sm:$0xf]
    %v534 = vld [vmem:[#allocation8 + $0xe4] sm:$0xf]
    %v535 = vld [vmem:[#allocation8 + $0xe8] sm:$0xf]
    %v536 = vld [vmem:[#allocation8 + $0xec] sm:$0xf]
    %v537 = vld [vmem:[#allocation8 + $0xf0] sm:$0xf]
    %v538 = vld [vmem:[#allocation8 + $0xf4] sm:$0xf]
    %v539 = vld [vmem:[#allocation8 + $0xf8] sm:$0xf]
    %v540 = vld [vmem:[#allocation8 + $0xfc] sm:$0xf]
    %v541 = vld [vmem:[%s6 + $0x5] sm:$0x1]
    %v542 = vlaneseq
    %v543 = vshrl.u32 %v542, 7
    %v544 = vsub.s32 0, %v543
    %v545 = vrot.slane %v541, %v544
    %v548 = vunpack.c.l.b16 %v523
    %v549 = vunpack.c.l.b16 %v524
    %v550 = vpack.c.b16 %v549, %v548
    %v568 = vunpack.c.l.b16 %v525
    %v569 = vunpack.c.l.b16 %v526
    %v570 = vunpack.c.l.b16 %v527
    %v571 = vunpack.c.l.b16 %v528
    %v572 = vunpack.c.l.b16 %v529
    %v573 = vunpack.c.l.b16 %v530
    %v574 = vunpack.c.l.b16 %v531
    %v575 = vunpack.c.l.b16 %v532
    %v576 = vunpack.c.l.b16 %v533
    %v577 = vunpack.c.l.b16 %v534
    %v578 = vunpack.c.l.b16 %v535
    %v579 = vunpack.c.l.b16 %v536
    %v580 = vunpack.c.l.b16 %v537
    %v581 = vunpack.c.l.b16 %v538
    %v582 = vunpack.c.l.b16 %v539
    %v583 = vunpack.c.l.b16 %v540
    %v584 = vpack.c.b16 %v569, %v568
    %v585 = vpack.c.b16 %v571, %v570
    %v586 = vpack.c.b16 %v573, %v572
    %v587 = vpack.c.b16 %v575, %v574
    %v588 = vpack.c.b16 %v577, %v576
    %v589 = vpack.c.b16 %v579, %v578
    %v590 = vpack.c.b16 %v581, %v580
    %v591 = vpack.c.b16 %v583, %v582
    %600 = vmatprep.subr.bf16.mxu0 0
    %601 = vmatpush1.bf16.msra.mxu0 %v584
    %602 = vmatprep.subr.bf16.mxu0 0
    %603 = vmatpush1.bf16.msra.mxu0 %v585
    %604 = vmatprep.subr.bf16.mxu0 0
    %605 = vmatpush1.bf16.msra.mxu0 %v586
    %606 = vmatprep.subr.bf16.mxu0 0
    %607 = vmatpush1.bf16.msra.mxu0 %v587
    %608 = vmatprep.subr.bf16.mxu0 0
    %609 = vmatpush1.bf16.msra.mxu0 %v588
    %610 = vmatprep.subr.bf16.mxu0 0
    %611 = vmatpush1.bf16.msra.mxu0 %v589
    %612 = vmatprep.subr.bf16.mxu0 0
    %613 = vmatpush1.bf16.msra.mxu0 %v590
    %614 = vmatprep.subr.bf16.mxu0 0
    %615 = vmatpush1.bf16.msra.mxu0 %v591
    %616 = vmatprep.subr.bf16.mxu0 0
    %617 = vmatpush1.bf16.msra.mxu0 0
    %618 = vmatprep.subr.bf16.mxu0 0
    %619 = vmatpush1.bf16.msra.mxu0 0
    %620 = vmatprep.subr.bf16.mxu0 0
    %621 = vmatpush1.bf16.msra.mxu0 0
    %622 = vmatprep.subr.bf16.mxu0 0
    %623 = vmatpush1.bf16.msra.mxu0 0
    %624 = vmatprep.subr.bf16.mxu0 0
    %625 = vmatpush1.bf16.msra.mxu0 0
    %626 = vmatprep.subr.bf16.mxu0 0
    %627 = vmatpush1.bf16.msra.mxu0 0
    %628 = vmatprep.subr.bf16.mxu0 0
    %629 = vmatpush1.bf16.msra.mxu0 0
    %630 = vmatprep.subr.bf16.mxu0 0
    %631 = vmatpush1.bf16.msra.mxu0 0
    %632 = vmatprep.mubr.bf16.mxu0 0
    %633 = vmatmul.mubr.bf16.gmra.mrb[0].mxu0 %v550
    %v634 = vpop.f32.mrb[0].mxu0
    %v635 = vadd.f32 %v545, %v634
    %v636 = vpop.f32.mrb[0].mxu0
    %v637 = vpop.f32.mrb[0].mxu0
    %v638 = vadd.f32 %v545, %v637
    %v639 = vpop.f32.mrb[0].mxu0
    %640 = vdwg.mxu0
    %v641 = vmax.f32 %v635, 0.0
    %v642 = vmax.f32 %v638, 0.0
    %v643 = vadd.f32 %v641, %v642
    %v644 = vrot.slane %v643, 4
    %v645 = vadd.f32 %v643, %v644
    %v646 = vrot.slane %v645, 2
    %v647 = vadd.f32 %v645, %v646
    %v648 = vrot.slane %v647, 1
    %v649 = vadd.f32 %v647, %v648
    %v650 = vrcp.pop 16.0
    %v651 = vmul.f32 %v649, %v650
    %v652 = vsub.f32 %v641, %v651
    %v653 = vsub.f32 %v642, %v651
    %v654 = vmul.f32 %v652, %v652
    %v655 = vmul.f32 %v653, %v653
    %v656 = vadd.f32 %v654, %v655
    %v657 = vrot.slane %v656, 4
    %v658 = vadd.f32 %v656, %v657
    %v659 = vrot.slane %v658, 2
    %v660 = vadd.f32 %v658, %v659
    %v661 = vrot.slane %v660, 1
    %v662 = vadd.f32 %v660, %v661
    %v663 = vmul.f32 %v662, %v650
    %v664 = vadd.f32 %v663, 1e-05
    %v665 = vrsqrt.pop %v664
    %v666 = vmul.f32 %v652, %v665
    %v667 = vmul.f32 %v653, %v665
    %v668 = vld [vmem:[%s6 + $0x6] sm:$0x1]
    %v669 = vlaneseq
    %v670 = vshrl.u32 %v669, 7
    %v671 = vsub.s32 0, %v670
    %v672 = vrot.slane %v668, %v671
    %v673 = vmul.f32 %v666, %v672
    %v674 = vmul.f32 %v667, %v672
    %v675 = vld [vmem:[%s6 + $0x7] sm:$0x1]
    %v676 = vlaneseq
    %v677 = vshrl.u32 %v676, 7
    %v678 = vsub.s32 0, %v677
    %v679 = vrot.slane %v675, %v678
    %v680 = vadd.f32 %v673, %v679
    %v681 = vadd.f32 %v674, %v679
    %v682 = vpack.c.bf16 %v681, %v680
    %v683 = vld [vmem:[#allocation8 + $0x100] sm:$0xf]
    %v684 = vld [vmem:[#allocation8 + $0x104] sm:$0xf]
    %v685 = vld [vmem:[#allocation8 + $0x108] sm:$0xf]
    %v686 = vld [vmem:[#allocation8 + $0x10c] sm:$0xf]
    %v687 = vld [vmem:[#allocation8 + $0x110] sm:$0xf]
    %v688 = vld [vmem:[#allocation8 + $0x114] sm:$0xf]
    %v689 = vld [vmem:[#allocation8 + $0x118] sm:$0xf]
    %v690 = vld [vmem:[#allocation8 + $0x11c] sm:$0xf]
    %v691 = vld [vmem:[#allocation8 + $0x120] sm:$0xf]
    %v692 = vld [vmem:[#allocation8 + $0x124] sm:$0xf]
    %v693 = vld [vmem:[#allocation8 + $0x128] sm:$0xf]
    %v694 = vld [vmem:[#allocation8 + $0x12c] sm:$0xf]
    %v695 = vld [vmem:[#allocation8 + $0x130] sm:$0xf]
    %v696 = vld [vmem:[#allocation8 + $0x134] sm:$0xf]
    %v697 = vld [vmem:[#allocation8 + $0x138] sm:$0xf]
    %v698 = vld [vmem:[#allocation8 + $0x13c] sm:$0xf]
    %v699 = vld [vmem:[%s6 + $0x8] sm:$0x1]
    %v700 = vlaneseq
    %v701 = vshrl.u32 %v700, 7
    %v702 = vsub.s32 0, %v701
    %v703 = vrot.slane %v699, %v702
    %v720 = vunpack.c.l.b16 %v683
    %v721 = vunpack.c.l.b16 %v684
    %v722 = vunpack.c.l.b16 %v685
    %v723 = vunpack.c.l.b16 %v686
    %v724 = vunpack.c.l.b16 %v687
    %v725 = vunpack.c.l.b16 %v688
    %v726 = vunpack.c.l.b16 %v689
    %v727 = vunpack.c.l.b16 %v690
    %v728 = vunpack.c.l.b16 %v691
    %v729 = vunpack.c.l.b16 %v692
    %v730 = vunpack.c.l.b16 %v693
    %v731 = vunpack.c.l.b16 %v694
    %v732 = vunpack.c.l.b16 %v695
    %v733 = vunpack.c.l.b16 %v696
    %v734 = vunpack.c.l.b16 %v697
    %v735 = vunpack.c.l.b16 %v698
    %v736 = vpack.c.b16 %v721, %v720
    %v737 = vpack.c.b16 %v723, %v722
    %v738 = vpack.c.b16 %v725, %v724
    %v739 = vpack.c.b16 %v727, %v726
    %v740 = vpack.c.b16 %v729, %v728
    %v741 = vpack.c.b16 %v731, %v730
    %v742 = vpack.c.b16 %v733, %v732
    %v743 = vpack.c.b16 %v735, %v734
    %752 = vmatprep.subr.bf16.mxu0 0
    %753 = vmatpush1.bf16.msra.mxu0 %v736
    %754 = vmatprep.subr.bf16.mxu0 0
    %755 = vmatpush1.bf16.msra.mxu0 %v737
    %756 = vmatprep.subr.bf16.mxu0 0
    %757 = vmatpush1.bf16.msra.mxu0 %v738
    %758 = vmatprep.subr.bf16.mxu0 0
    %759 = vmatpush1.bf16.msra.mxu0 %v739
    %760 = vmatprep.subr.bf16.mxu0 0
    %761 = vmatpush1.bf16.msra.mxu0 %v740
    %762 = vmatprep.subr.bf16.mxu0 0
    %763 = vmatpush1.bf16.msra.mxu0 %v741
    %764 = vmatprep.subr.bf16.mxu0 0
    %765 = vmatpush1.bf16.msra.mxu0 %v742
    %766 = vmatprep.subr.bf16.mxu0 0
    %767 = vmatpush1.bf16.msra.mxu0 %v743
    %768 = vmatprep.subr.bf16.mxu0 0
    %769 = vmatpush1.bf16.msra.mxu0 0
    %770 = vmatprep.subr.bf16.mxu0 0
    %771 = vmatpush1.bf16.msra.mxu0 0
    %772 = vmatprep.subr.bf16.mxu0 0
    %773 = vmatpush1.bf16.msra.mxu0 0
    %774 = vmatprep.subr.bf16.mxu0 0
    %775 = vmatpush1.bf16.msra.mxu0 0
    %776 = vmatprep.subr.bf16.mxu0 0
    %777 = vmatpush1.bf16.msra.mxu0 0
    %778 = vmatprep.subr.bf16.mxu0 0
    %779 = vmatpush1.bf16.msra.mxu0 0
    %780 = vmatprep.subr.bf16.mxu0 0
    %781 = vmatpush1.bf16.msra.mxu0 0
    %782 = vmatprep.subr.bf16.mxu0 0
    %783 = vmatpush1.bf16.msra.mxu0 0
    %784 = vmatprep.mubr.bf16.mxu0 0
    %785 = vmatmul.mubr.bf16.gmra.mrb[0].mxu0 %v682
    %v786 = vpop.f32.mrb[0].mxu0
    %v787 = vadd.f32 %v703, %v786
    %v788 = vpop.f32.mrb[0].mxu0
    %v789 = vpop.f32.mrb[0].mxu0
    %v790 = vadd.f32 %v703, %v789
    %v791 = vpop.f32.mrb[0].mxu0
    %792 = vdwg.mxu0
    %v793 = vmax.f32 %v787, 0.0
    %v794 = vmax.f32 %v790, 0.0
    %v795 = vpack.c.bf16 %v794, %v793
    %v796 = vld [vmem:[#allocation8 + $0x140] sm:$0xf]
    %v797 = vld [vmem:[#allocation8 + $0x144] sm:$0xf]
    %v798 = vld [vmem:[#allocation8 + $0x148] sm:$0xf]
    %v799 = vld [vmem:[#allocation8 + $0x14c] sm:$0xf]
    %v800 = vld [vmem:[#allocation8 + $0x150] sm:$0xf]
    %v801 = vld [vmem:[#allocation8 + $0x154] sm:$0xf]
    %v802 = vld [vmem:[#allocation8 + $0x158] sm:$0xf]
    %v803 = vld [vmem:[#allocation8 + $0x15c] sm:$0xf]
    %v804 = vld [vmem:[#allocation8 + $0x160] sm:$0xf]
    %v805 = vld [vmem:[#allocation8 + $0x164] sm:$0xf]
    %v806 = vld [vmem:[#allocation8 + $0x168] sm:$0xf]
    %v807 = vld [vmem:[#allocation8 + $0x16c] sm:$0xf]
    %v808 = vld [vmem:[#allocation8 + $0x170] sm:$0xf]
    %v809 = vld [vmem:[#allocation8 + $0x174] sm:$0xf]
    %v810 = vld [vmem:[#allocation8 + $0x178] sm:$0xf]
    %v811 = vld [vmem:[#allocation8 + $0x17c] sm:$0xf]
    %v812 = vld [vmem:[%s6 + $0x9] sm:$0x1]
    %v813 = vlaneseq
    %v814 = vshrl.u32 %v813, 7
    %v815 = vsub.s32 0, %v814
    %v816 = vrot.slane %v812, %v815
    %v833 = vunpack.c.l.b16 %v796
    %v834 = vunpack.c.l.b16 %v797
    %v835 = vunpack.c.l.b16 %v798
    %v836 = vunpack.c.l.b16 %v799
    %v837 = vunpack.c.l.b16 %v800
    %v838 = vunpack.c.l.b16 %v801
    %v839 = vunpack.c.l.b16 %v802
    %v840 = vunpack.c.l.b16 %v803
    %v841 = vunpack.c.l.b16 %v804
    %v842 = vunpack.c.l.b16 %v805
    %v843 = vunpack.c.l.b16 %v806
    %v844 = vunpack.c.l.b16 %v807
    %v845 = vunpack.c.l.b16 %v808
    %v846 = vunpack.c.l.b16 %v809
    %v847 = vunpack.c.l.b16 %v810
    %v848 = vunpack.c.l.b16 %v811
    %v849 = vpack.c.b16 %v834, %v833
    %v850 = vpack.c.b16 %v836, %v835
    %v851 = vpack.c.b16 %v838, %v837
    %v852 = vpack.c.b16 %v840, %v839
    %v853 = vpack.c.b16 %v842, %v841
    %v854 = vpack.c.b16 %v844, %v843
    %v855 = vpack.c.b16 %v846, %v845
    %v856 = vpack.c.b16 %v848, %v847
    %865 = vmatprep.subr.bf16.mxu0 0
    %866 = vmatpush1.bf16.msra.mxu0 %v849
    %867 = vmatprep.subr.bf16.mxu0 0
    %868 = vmatpush1.bf16.msra.mxu0 %v850
    %869 = vmatprep.subr.bf16.mxu0 0
    %870 = vmatpush1.bf16.msra.mxu0 %v851
    %871 = vmatprep.subr.bf16.mxu0 0
    %872 = vmatpush1.bf16.msra.mxu0 %v852
    %873 = vmatprep.subr.bf16.mxu0 0
    %874 = vmatpush1.bf16.msra.mxu0 %v853
    %875 = vmatprep.subr.bf16.mxu0 0
    %876 = vmatpush1.bf16.msra.mxu0 %v854
    %877 = vmatprep.subr.bf16.mxu0 0
    %878 = vmatpush1.bf16.msra.mxu0 %v855
    %879 = vmatprep.subr.bf16.mxu0 0
    %880 = vmatpush1.bf16.msra.mxu0 %v856
    %881 = vmatprep.subr.bf16.mxu0 0
    %882 = vmatpush1.bf16.msra.mxu0 0
    %883 = vmatprep.subr.bf16.mxu0 0
    %884 = vmatpush1.bf16.msra.mxu0 0
    %885 = vmatprep.subr.bf16.mxu0 0
    %886 = vmatpush1.bf16.msra.mxu0 0
    %887 = vmatprep.subr.bf16.mxu0 0
    %888 = vmatpush1.bf16.msra.mxu0 0
    %889 = vmatprep.subr.bf16.mxu0 0
    %890 = vmatpush1.bf16.msra.mxu0 0
    %891 = vmatprep.subr.bf16.mxu0 0
    %892 = vmatpush1.bf16.msra.mxu0 0
    %893 = vmatprep.subr.bf16.mxu0 0
    %894 = vmatpush1.bf16.msra.mxu0 0
    %895 = vmatprep.subr.bf16.mxu0 0
    %896 = vmatpush1.bf16.msra.mxu0 0
    %897 = vmatprep.mubr.bf16.mxu0 0
    %898 = vmatmul.mubr.bf16.gmra.mrb[0].mxu0 %v795
    %v899 = vpop.f32.mrb[0].mxu0
    %v900 = vadd.f32 %v816, %v899
    %v901 = vpop.f32.mrb[0].mxu0
    %v902 = vpop.f32.mrb[0].mxu0
    %v903 = vadd.f32 %v816, %v902
    %v904 = vpop.f32.mrb[0].mxu0
    %905 = vdwg.mxu0
    %v906 = vpack.c.bf16 %v903, %v900
    %v907 = vld [vmem:[#allocation5] sm:$0xf]
    %v908 = vld [vmem:[#allocation5 + $0x4] sm:$0xf]
    %v909 = vld [vmem:[#allocation5 + $0x8] sm:$0xf]
    %v910 = vld [vmem:[%s3] sm:$0xf]
    %v911 = vld [vmem:[%s3 + $0x4] sm:$0xf]
    %v912 = vld [vmem:[%s3 + $0x8] sm:$0xf]
    %v916 = vunpack.c.l.b16 %v910
    %v917 = vunpack.c.l.b16 %v911
    %v918 = vunpack.c.l.b16 %v912
    %v919 = vpack.c.b16 %v917, %v916
    %v920 = vpack.c.b16 %v918, %v918
    %vm921 = vcmask 130048
    %v923 = vsel %vm921, %v919, 0
    %v926 = vsel %vm921, %v920, 0
    %928 = vmatprep.subr.bf16.mxu0 0
    %929 = vmatpush1.bf16.msra.mxu0 %v906
    %930 = vmatprep.subr.bf16.mxu0 0
    %931 = vmatpush1.bf16.msra.mxu0 0
    %932 = vmatprep.subr.bf16.mxu0 0
    %933 = vmatpush1.bf16.msra.mxu0 0
    %934 = vmatprep.subr.bf16.mxu0 0
    %935 = vmatpush1.bf16.msra.mxu0 0
    %936 = vmatprep.subr.bf16.mxu0 0
    %937 = vmatpush1.bf16.msra.mxu0 0
    %938 = vmatprep.subr.bf16.mxu0 0
    %939 = vmatpush1.bf16.msra.mxu0 0
    %940 = vmatprep.subr.bf16.mxu0 0
    %941 = vmatpush1.bf16.msra.mxu0 0
    %942 = vmatprep.subr.bf16.mxu0 0
    %943 = vmatpush1.bf16.msra.mxu0 0
    %944 = vmatprep.subr.bf16.mxu0 0
    %945 = vmatpush1.bf16.msra.mxu0 0
    %946 = vmatprep.subr.bf16.mxu0 0
    %947 = vmatpush1.bf16.msra.mxu0 0
    %948 = vmatprep.subr.bf16.mxu0 0
    %949 = vmatpush1.bf16.msra.mxu0 0
    %950 = vmatprep.subr.bf16.mxu0 0
    %951 = vmatpush1.bf16.msra.mxu0 0
    %952 = vmatprep.subr.bf16.mxu0 0
    %953 = vmatpush1.bf16.msra.mxu0 0
    %954 = vmatprep.subr.bf16.mxu0 0
    %955 = vmatpush1.bf16.msra.mxu0 0
    %956 = vmatprep.subr.bf16.mxu0 0
    %957 = vmatpush1.bf16.msra.mxu0 0
    %958 = vmatprep.subr.bf16.mxu0 0
    %959 = vmatpush1.bf16.msra.mxu0 0
    %960 = vmatprep.mubr.bf16.mxu0 0
    %961 = vmatmul.mubr.bf16.gmra.mrb[0].mxu0 %v923
    %v962 = vpop.f32.mrb[0].mxu0
    %v963 = vadd.f32 0.0, %v962
    %v964 = vpop.f32.mrb[0].mxu0
    %v965 = vpop.f32.mrb[0].mxu0
    %v966 = vadd.f32 0.0, %v965
    %v967 = vpop.f32.mrb[0].mxu0
    %968 = vmatprep.mubr.bf16.mxu0 0
    %969 = vmatmul.mubr.bf16.gmra.mrb[0].mxu0 %v926
    %v970 = vpop.f32.mrb[0].mxu0
    %v971 = vadd.f32 0.0, %v970
    %v972 = vpop.f32.mrb[0].mxu0
    %v973 = vpop.f32.mrb[0].mxu0
    %v974 = vpop.f32.mrb[0].mxu0
    %975 = vdwg.mxu0
    %v979 = vunpack.c.l.b16 %v907
    %v980 = vunpack.c.l.b16 %v908
    %v981 = vunpack.c.l.b16 %v909
    %v982 = vpack.c.b16 %v980, %v979
    %v983 = vpack.c.b16 %v981, %v981
    %vm984 = vcmask 261120
    %v986 = vsel %vm984, %v982, 0
    %v989 = vsel %vm984, %v983, 0
    %991 = vmatprep.subr.bf16.mxu0 0
    %992 = vmatpush1.bf16.msra.mxu0 %v521
    %993 = vmatprep.subr.bf16.mxu0 0
    %994 = vmatpush1.bf16.msra.mxu0 %v522
    %995 = vmatprep.subr.bf16.mxu0 0
    %996 = vmatpush1.bf16.msra.mxu0 0
    %997 = vmatprep.subr.bf16.mxu0 0
    %998 = vmatpush1.bf16.msra.mxu0 0
    %999 = vmatprep.subr.bf16.mxu0 0
    %1000 = vmatpush1.bf16.msra.mxu0 0
    %1001 = vmatprep.subr.bf16.mxu0 0
    %1002 = vmatpush1.bf16.msra.mxu0 0
    %1003 = vmatprep.subr.bf16.mxu0 0
    %1004 = vmatpush1.bf16.msra.mxu0 0
    %1005 = vmatprep.subr.bf16.mxu0 0
    %1006 = vmatpush1.bf16.msra.mxu0 0
    %1007 = vmatprep.subr.bf16.mxu0 0
    %1008 = vmatpush1.bf16.msra.mxu0 0
    %1009 = vmatprep.subr.bf16.mxu0 0
    %1010 = vmatpush1.bf16.msra.mxu0 0
    %1011 = vmatprep.subr.bf16.mxu0 0
    %1012 = vmatpush1.bf16.msra.mxu0 0
    %1013 = vmatprep.subr.bf16.mxu0 0
    %1014 = vmatpush1.bf16.msra.mxu0 0
    %1015 = vmatprep.subr.bf16.mxu0 0
    %1016 = vmatpush1.bf16.msra.mxu0 0
    %1017 = vmatprep.subr.bf16.mxu0 0
    %1018 = vmatpush1.bf16.msra.mxu0 0
    %1019 = vmatprep.subr.bf16.mxu0 0
    %1020 = vmatpush1.bf16.msra.mxu0 0
    %1021 = vmatprep.subr.bf16.mxu0 0
    %1022 = vmatpush1.bf16.msra.mxu0 0
    %1023 = vmatprep.mubr.bf16.mxu0 0
    %1024 = vmatmul.mubr.bf16.gmra.mrb[0].mxu0 %v986
    %v1025 = vpop.f32.mrb[0].mxu0
    %v1026 = vadd.f32 %v963, %v1025
    %v1027 = vpop.f32.mrb[0].mxu0
    %v1028 = vpop.f32.mrb[0].mxu0
    %v1029 = vadd.f32 %v966, %v1028
    %v1030 = vpop.f32.mrb[0].mxu0
    %1031 = vmatprep.mubr.bf16.mxu0 0
    %1032 = vmatmul.mubr.bf16.gmra.mrb[0].mxu0 %v989
    %v1033 = vpop.f32.mrb[0].mxu0
    %v1034 = vadd.f32 %v971, %v1033
    %v1035 = vpop.f32.mrb[0].mxu0
    %v1036 = vpop.f32.mrb[0].mxu0
    %v1037 = vpop.f32.mrb[0].mxu0
    %1038 = vdwg.mxu0
    %v1039 = vpack.c.bf16 %v1029, %v1026
    %v1040 = vpack.c.bf16 %v1034, %v1034
    %v1041 = vadd.f32 %v1026, %v1029
    %v1042 = vadd.f32 %v1041, %v1034
    %v1043 = vrot.slane %v1042, 4
    %v1044 = vadd.f32 %v1042, %v1043
    %v1045 = vrot.slane %v1044, 2
    %v1046 = vadd.f32 %v1044, %v1045
    %v1047 = vrot.slane %v1046, 1
    %v1048 = vadd.f32 %v1046, %v1047
    %v1049 = vmul.f32 %v1048, %v1048
    %1050 = vadd.xlane.f32.xlu0 %v1049
    %v1051 = vpop.xlane.xlu0 %1050
    %v1052 = vmax.f32 %v1051, 1e-16
    %v1053 = vrsqrt.pop %v1052
    %v1054 = vmul.f32 %v1048, %v1053
    %v1055 = vpack.c.bf16 %v1054, %v1054
    %v1056 = vld [vmem:[#allocation7] sm:$0xf]
    %v1057 = vld [vmem:[#allocation7 + $0x4] sm:$0xf]
    %v1058 = vld [vmem:[#allocation7 + $0x8] sm:$0xf]
    %v1062 = vunpack.c.l.b16 %v1056
    %v1063 = vunpack.c.l.b16 %v1057
    %v1064 = vunpack.c.l.b16 %v1058
    %v1065 = vpack.c.b16 %v1063, %v1062
    %v1066 = vpack.c.b16 %v1064, %v1064
    %vm1067 = vcmask 195584
    %v1069 = vsel %vm1067, %v1065, 0
    %v1072 = vsel %vm1067, %v1066, 0
    %vm1074 = vcmask 1043456
    %v1076 = vsel %vm1074, %v1040, 0
    %1078 = vmatprep.subr.bf16.mxu0 0
    %1079 = vmatpush1.bf16.msra.mxu0 %v1039
    %1080 = vmatprep.subr.bf16.mxu0 0
    %1081 = vmatpush1.bf16.msra.mxu0 %v1076
    %1082 = vmatprep.subr.bf16.mxu0 0
    %1083 = vmatpush1.bf16.msra.mxu0 0
    %1084 = vmatprep.subr.bf16.mxu0 0
    %1085 = vmatpush1.bf16.msra.mxu0 0
    %1086 = vmatprep.subr.bf16.mxu0 0
    %1087 = vmatpush1.bf16.msra.mxu0 0
    %1088 = vmatprep.subr.bf16.mxu0 0
    %1089 = vmatpush1.bf16.msra.mxu0 0
    %1090 = vmatprep.subr.bf16.mxu0 0
    %1091 = vmatpush1.bf16.msra.mxu0 0
    %1092 = vmatprep.subr.bf16.mxu0 0
    %1093 = vmatpush1.bf16.msra.mxu0 0
    %1094 = vmatprep.subr.bf16.mxu0 0
    %1095 = vmatpush1.bf16.msra.mxu0 0
    %1096 = vmatprep.subr.bf16.mxu0 0
    %1097 = vmatpush1.bf16.msra.mxu0 0
    %1098 = vmatprep.subr.bf16.mxu0 0
    %1099 = vmatpush1.bf16.msra.mxu0 0
    %1100 = vmatprep.subr.bf16.mxu0 0
    %1101 = vmatpush1.bf16.msra.mxu0 0
    %1102 = vmatprep.subr.bf16.mxu0 0
    %1103 = vmatpush1.bf16.msra.mxu0 0
    %1104 = vmatprep.subr.bf16.mxu0 0
    %1105 = vmatpush1.bf16.msra.mxu0 0
    %1106 = vmatprep.subr.bf16.mxu0 0
    %1107 = vmatpush1.bf16.msra.mxu0 0
    %1108 = vmatprep.subr.bf16.mxu0 0
    %1109 = vmatpush1.bf16.msra.mxu0 0
    %1110 = vmatprep.mubr.bf16.mxu0 0
    %1111 = vmatmul.mubr.bf16.gmra.mrb[0].mxu0 %v1069
    %v1112 = vpop.f32.mrb[0].mxu0
    %v1113 = vadd.f32 0.0, %v1112
    %v1114 = vpop.f32.mrb[0].mxu0
    %v1115 = vpop.f32.mrb[0].mxu0
    %v1116 = vadd.f32 0.0, %v1115
    %v1117 = vpop.f32.mrb[0].mxu0
    %1118 = vmatprep.mubr.bf16.mxu0 0
    %1119 = vmatmul.mubr.bf16.gmra.mrb[0].mxu0 %v1072
    %v1120 = vpop.f32.mrb[0].mxu0
    %v1121 = vadd.f32 0.0, %v1120
    %v1122 = vpop.f32.mrb[0].mxu0
    %v1123 = vpop.f32.mrb[0].mxu0
    %v1124 = vpop.f32.mrb[0].mxu0
    %1125 = vdwg.mxu0
    %v1126 = vpack.c.bf16 %v1116, %v1113
    %v1127 = vpack.c.bf16 %v1121, %v1121
    %v1128 = vld [vmem:[#allocation8 + $0x180] sm:$0xf]
    %v1129 = vld [vmem:[#allocation8 + $0x184] sm:$0xf]
    %v1130 = vld [vmem:[#allocation8 + $0x188] sm:$0xf]
    %v1131 = vld [vmem:[#allocation8 + $0x18c] sm:$0xf]
    %v1132 = vld [vmem:[#allocation8 + $0x190] sm:$0xf]
    %v1133 = vld [vmem:[#allocation8 + $0x194] sm:$0xf]
    %v1134 = vld [vmem:[#allocation8 + $0x198] sm:$0xf]
    %v1135 = vld [vmem:[#allocation8 + $0x19c] sm:$0xf]
    %v1136 = vld [vmem:[#allocation8 + $0x1a0] sm:$0xf]
    %v1137 = vld [vmem:[#allocation8 + $0x1a4] sm:$0xf]
    %v1138 = vld [vmem:[#allocation8 + $0x1a8] sm:$0xf]
    %v1139 = vld [vmem:[#allocation8 + $0x1ac] sm:$0xf]
    %v1140 = vld [vmem:[#allocation8 + $0x1b0] sm:$0xf]
    %v1141 = vld [vmem:[#allocation8 + $0x1b4] sm:$0xf]
    %v1142 = vld [vmem:[#allocation8 + $0x1b8] sm:$0xf]
    %v1143 = vld [vmem:[#allocation8 + $0x1bc] sm:$0xf]
    %v1144 = vld [vmem:[#allocation8 + $0x1c0] sm:$0xf]
    %v1145 = vld [vmem:[#allocation8 + $0x1c4] sm:$0xf]
    %v1146 = vld [vmem:[#allocation8 + $0x1c8] sm:$0xf]
    %v1147 = vld [vmem:[#allocation8 + $0x1cc] sm:$0xf]
    %v1148 = vld [vmem:[#allocation8 + $0x1d0] sm:$0xf]
    %v1149 = vld [vmem:[#allocation8 + $0x1d4] sm:$0xf]
    %v1150 = vld [vmem:[#allocation8 + $0x1d8] sm:$0xf]
    %v1151 = vld [vmem:[#allocation8 + $0x1dc] sm:$0xf]
    %v1152 = vld [vmem:[#allocation8 + $0x1e0] sm:$0xf]
    %v1153 = vld [vmem:[#allocation8 + $0x1e4] sm:$0xf]
    %v1154 = vld [vmem:[#allocation8 + $0x1e8] sm:$0xf]
    %v1155 = vld [vmem:[#allocation8 + $0x1ec] sm:$0xf]
    %v1156 = vld [vmem:[#allocation8 + $0x1f0] sm:$0xf]
    %v1157 = vld [vmem:[#allocation8 + $0x1f4] sm:$0xf]
    %v1158 = vld [vmem:[#allocation8 + $0x1f8] sm:$0xf]
    %v1159 = vld [vmem:[#allocation8 + $0x1fc] sm:$0xf]
    %v1176 = vunpack.c.l.b16 %v1144
    %v1177 = vunpack.c.l.b16 %v1145
    %v1178 = vunpack.c.l.b16 %v1146
    %v1179 = vunpack.c.l.b16 %v1147
    %v1180 = vunpack.c.l.b16 %v1148
    %v1181 = vunpack.c.l.b16 %v1149
    %v1182 = vunpack.c.l.b16 %v1150
    %v1183 = vunpack.c.l.b16 %v1151
    %v1184 = vunpack.c.l.b16 %v1152
    %v1185 = vunpack.c.l.b16 %v1153
    %v1186 = vunpack.c.l.b16 %v1154
    %v1187 = vunpack.c.l.b16 %v1155
    %v1188 = vunpack.c.l.b16 %v1156
    %v1189 = vunpack.c.l.b16 %v1157
    %v1190 = vunpack.c.l.b16 %v1158
    %v1191 = vunpack.c.l.b16 %v1159
    %v1192 = vpack.c.b16 %v1177, %v1176
    %v1193 = vpack.c.b16 %v1179, %v1178
    %v1194 = vpack.c.b16 %v1181, %v1180
    %v1195 = vpack.c.b16 %v1183, %v1182
    %v1196 = vpack.c.b16 %v1185, %v1184
    %v1197 = vpack.c.b16 %v1187, %v1186
    %v1198 = vpack.c.b16 %v1189, %v1188
    %v1199 = vpack.c.b16 %v1191, %v1190
    %1208 = vmatprep.subr.bf16.mxu0 0
    %1209 = vmatpush1.bf16.msra.mxu0 %v1192
    %1210 = vmatprep.subr.bf16.mxu0 0
    %1211 = vmatpush1.bf16.msra.mxu0 %v1193
    %1212 = vmatprep.subr.bf16.mxu0 0
    %1213 = vmatpush1.bf16.msra.mxu0 %v1194
    %1214 = vmatprep.subr.bf16.mxu0 0
    %1215 = vmatpush1.bf16.msra.mxu0 %v1195
    %1216 = vmatprep.subr.bf16.mxu0 0
    %1217 = vmatpush1.bf16.msra.mxu0 %v1196
    %1218 = vmatprep.subr.bf16.mxu0 0
    %1219 = vmatpush1.bf16.msra.mxu0 %v1197
    %1220 = vmatprep.subr.bf16.mxu0 0
    %1221 = vmatpush1.bf16.msra.mxu0 %v1198
    %1222 = vmatprep.subr.bf16.mxu0 0
    %1223 = vmatpush1.bf16.msra.mxu0 %v1199
    %1224 = vmatprep.subr.bf16.mxu0 0
    %1225 = vmatpush1.bf16.msra.mxu0 0
    %1226 = vmatprep.subr.bf16.mxu0 0
    %1227 = vmatpush1.bf16.msra.mxu0 0
    %1228 = vmatprep.subr.bf16.mxu0 0
    %1229 = vmatpush1.bf16.msra.mxu0 0
    %1230 = vmatprep.subr.bf16.mxu0 0
    %1231 = vmatpush1.bf16.msra.mxu0 0
    %1232 = vmatprep.subr.bf16.mxu0 0
    %1233 = vmatpush1.bf16.msra.mxu0 0
    %1234 = vmatprep.subr.bf16.mxu0 0
    %1235 = vmatpush1.bf16.msra.mxu0 0
    %1236 = vmatprep.subr.bf16.mxu0 0
    %1237 = vmatpush1.bf16.msra.mxu0 0
    %1238 = vmatprep.subr.bf16.mxu0 0
    %1239 = vmatpush1.bf16.msra.mxu0 0
    %1240 = vmatprep.mubr.bf16.mxu0 0
    %1241 = vmatmul.mubr.bf16.gmra.mrb[0].mxu0 %v1039
    %v1242 = vpop.f32.mrb[0].mxu0
    %v1243 = vadd.f32 0.0, %v1242
    %v1244 = vpop.f32.mrb[0].mxu0
    %v1245 = vpop.f32.mrb[0].mxu0
    %v1246 = vadd.f32 0.0, %v1245
    %v1247 = vpop.f32.mrb[0].mxu0
    %1248 = vmatprep.mubr.bf16.mxu0 0
    %1249 = vmatmul.mubr.bf16.gmra.mrb[0].mxu0 %v1040
    %v1250 = vpop.f32.mrb[0].mxu0
    %v1251 = vadd.f32 0.0, %v1250
    %v1252 = vpop.f32.mrb[0].mxu0
    %v1253 = vpop.f32.mrb[0].mxu0
    %v1254 = vpop.f32.mrb[0].mxu0
    %1255 = vdwg.mxu0
    %v1272 = vunpack.c.l.b16 %v1128
    %v1273 = vunpack.c.l.b16 %v1129
    %v1274 = vunpack.c.l.b16 %v1130
    %v1275 = vunpack.c.l.b16 %v1131
    %v1276 = vunpack.c.l.b16 %v1132
    %v1277 = vunpack.c.l.b16 %v1133
    %v1278 = vunpack.c.l.b16 %v1134
    %v1279 = vunpack.c.l.b16 %v1135
    %v1280 = vunpack.c.l.b16 %v1136
    %v1281 = vunpack.c.l.b16 %v1137
    %v1282 = vunpack.c.l.b16 %v1138
    %v1283 = vunpack.c.l.b16 %v1139
    %v1284 = vunpack.c.l.b16 %v1140
    %v1285 = vunpack.c.l.b16 %v1141
    %v1286 = vunpack.c.l.b16 %v1142
    %v1287 = vunpack.c.l.b16 %v1143
    %v1288 = vpack.c.b16 %v1273, %v1272
    %v1289 = vpack.c.b16 %v1275, %v1274
    %v1290 = vpack.c.b16 %v1277, %v1276
    %v1291 = vpack.c.b16 %v1279, %v1278
    %v1292 = vpack.c.b16 %v1281, %v1280
    %v1293 = vpack.c.b16 %v1283, %v1282
    %v1294 = vpack.c.b16 %v1285, %v1284
    %v1295 = vpack.c.b16 %v1287, %v1286
    %1304 = vmatprep.subr.bf16.mxu0 0
    %1305 = vmatpush1.bf16.msra.mxu0 %v1288
    %1306 = vmatprep.subr.bf16.mxu0 0
    %1307 = vmatpush1.bf16.msra.mxu0 %v1289
    %1308 = vmatprep.subr.bf16.mxu0 0
    %1309 = vmatpush1.bf16.msra.mxu0 %v1290
    %1310 = vmatprep.subr.bf16.mxu0 0
    %1311 = vmatpush1.bf16.msra.mxu0 %v1291
    %1312 = vmatprep.subr.bf16.mxu0 0
    %1313 = vmatpush1.bf16.msra.mxu0 %v1292
    %1314 = vmatprep.subr.bf16.mxu0 0
    %1315 = vmatpush1.bf16.msra.mxu0 %v1293
    %1316 = vmatprep.subr.bf16.mxu0 0
    %1317 = vmatpush1.bf16.msra.mxu0 %v1294
    %1318 = vmatprep.subr.bf16.mxu0 0
    %1319 = vmatpush1.bf16.msra.mxu0 %v1295
    %1320 = vmatprep.subr.bf16.mxu0 0
    %1321 = vmatpush1.bf16.msra.mxu0 0
    %1322 = vmatprep.subr.bf16.mxu0 0
    %1323 = vmatpush1.bf16.msra.mxu0 0
    %1324 = vmatprep.subr.bf16.mxu0 0
    %1325 = vmatpush1.bf16.msra.mxu0 0
    %1326 = vmatprep.subr.bf16.mxu0 0
    %1327 = vmatpush1.bf16.msra.mxu0 0
    %1328 = vmatprep.subr.bf16.mxu0 0
    %1329 = vmatpush1.bf16.msra.mxu0 0
    %1330 = vmatprep.subr.bf16.mxu0 0
    %1331 = vmatpush1.bf16.msra.mxu0 0
    %1332 = vmatprep.subr.bf16.mxu0 0
    %1333 = vmatpush1.bf16.msra.mxu0 0
    %1334 = vmatprep.subr.bf16.mxu0 0
    %1335 = vmatpush1.bf16.msra.mxu0 0
    %1336 = vmatprep.mubr.bf16.mxu0 0
    %1337 = vmatmul.mubr.bf16.gmra.mrb[0].mxu0 %v1126
    %v1338 = vpop.f32.mrb[0].mxu0
    %v1339 = vadd.f32 %v1243, %v1338
    %v1340 = vpop.f32.mrb[0].mxu0
    %v1341 = vpop.f32.mrb[0].mxu0
    %v1342 = vadd.f32 %v1246, %v1341
    %v1343 = vpop.f32.mrb[0].mxu0
    %1344 = vmatprep.mubr.bf16.mxu0 0
    %1345 = vmatmul.mubr.bf16.gmra.mrb[0].mxu0 %v1127
    %v1346 = vpop.f32.mrb[0].mxu0
    %v1347 = vadd.f32 %v1251, %v1346
    %v1348 = vpop.f32.mrb[0].mxu0
    %v1349 = vpop.f32.mrb[0].mxu0
    %v1350 = vpop.f32.mrb[0].mxu0
    %1351 = vdwg.mxu0
    %v1352 = vld [vmem:[#allocation8 + $0x200] sm:$0xf]
    %v1353 = vld [vmem:[#allocation8 + $0x204] sm:$0xf]
    %v1354 = vld [vmem:[#allocation8 + $0x208] sm:$0xf]
    %v1355 = vld [vmem:[#allocation8 + $0x20c] sm:$0xf]
    %v1356 = vld [vmem:[#allocation8 + $0x210] sm:$0xf]
    %v1357 = vld [vmem:[#allocation8 + $0x214] sm:$0xf]
    %v1358 = vld [vmem:[#allocation8 + $0x218] sm:$0xf]
    %v1359 = vld [vmem:[#allocation8 + $0x21c] sm:$0xf]
    %v1360 = vld [vmem:[#allocation8 + $0x220] sm:$0xf]
    %v1361 = vld [vmem:[#allocation8 + $0x224] sm:$0xf]
    %v1362 = vld [vmem:[#allocation8 + $0x228] sm:$0xf]
    %v1363 = vld [vmem:[#allocation8 + $0x22c] sm:$0xf]
    %v1364 = vld [vmem:[#allocation8 + $0x230] sm:$0xf]
    %v1365 = vld [vmem:[#allocation8 + $0x234] sm:$0xf]
    %v1366 = vld [vmem:[#allocation8 + $0x238] sm:$0xf]
    %v1367 = vld [vmem:[#allocation8 + $0x23c] sm:$0xf]
    %v1384 = vunpack.c.l.b16 %v1352
    %v1385 = vunpack.c.l.b16 %v1353
    %v1386 = vunpack.c.l.b16 %v1354
    %v1387 = vunpack.c.l.b16 %v1355
    %v1388 = vunpack.c.l.b16 %v1356
    %v1389 = vunpack.c.l.b16 %v1357
    %v1390 = vunpack.c.l.b16 %v1358
    %v1391 = vunpack.c.l.b16 %v1359
    %v1392 = vunpack.c.l.b16 %v1360
    %v1393 = vunpack.c.l.b16 %v1361
    %v1394 = vunpack.c.l.b16 %v1362
    %v1395 = vunpack.c.l.b16 %v1363
    %v1396 = vunpack.c.l.b16 %v1364
    %v1397 = vunpack.c.l.b16 %v1365
    %v1398 = vunpack.c.l.b16 %v1366
    %v1399 = vunpack.c.l.b16 %v1367
    %v1400 = vpack.c.b16 %v1385, %v1384
    %v1401 = vpack.c.b16 %v1387, %v1386
    %v1402 = vpack.c.b16 %v1389, %v1388
    %v1403 = vpack.c.b16 %v1391, %v1390
    %v1404 = vpack.c.b16 %v1393, %v1392
    %v1405 = vpack.c.b16 %v1395, %v1394
    %v1406 = vpack.c.b16 %v1397, %v1396
    %v1407 = vpack.c.b16 %v1399, %v1398
    %1416 = vmatprep.subr.bf16.mxu0 0
    %1417 = vmatpush1.bf16.msra.mxu0 %v1400
    %1418 = vmatprep.subr.bf16.mxu0 0
    %1419 = vmatpush1.bf16.msra.mxu0 %v1401
    %1420 = vmatprep.subr.bf16.mxu0 0
    %1421 = vmatpush1.bf16.msra.mxu0 %v1402
    %1422 = vmatprep.subr.bf16.mxu0 0
    %1423 = vmatpush1.bf16.msra.mxu0 %v1403
    %1424 = vmatprep.subr.bf16.mxu0 0
    %1425 = vmatpush1.bf16.msra.mxu0 %v1404
    %1426 = vmatprep.subr.bf16.mxu0 0
    %1427 = vmatpush1.bf16.msra.mxu0 %v1405
    %1428 = vmatprep.subr.bf16.mxu0 0
    %1429 = vmatpush1.bf16.msra.mxu0 %v1406
    %1430 = vmatprep.subr.bf16.mxu0 0
    %1431 = vmatpush1.bf16.msra.mxu0 %v1407
    %1432 = vmatprep.subr.bf16.mxu0 0
    %1433 = vmatpush1.bf16.msra.mxu0 0
    %1434 = vmatprep.subr.bf16.mxu0 0
    %1435 = vmatpush1.bf16.msra.mxu0 0
    %1436 = vmatprep.subr.bf16.mxu0 0
    %1437 = vmatpush1.bf16.msra.mxu0 0
    %1438 = vmatprep.subr.bf16.mxu0 0
    %1439 = vmatpush1.bf16.msra.mxu0 0
    %1440 = vmatprep.subr.bf16.mxu0 0
    %1441 = vmatpush1.bf16.msra.mxu0 0
    %1442 = vmatprep.subr.bf16.mxu0 0
    %1443 = vmatpush1.bf16.msra.mxu0 0
    %1444 = vmatprep.subr.bf16.mxu0 0
    %1445 = vmatpush1.bf16.msra.mxu0 0
    %1446 = vmatprep.subr.bf16.mxu0 0
    %1447 = vmatpush1.bf16.msra.mxu0 0
    %1448 = vmatprep.mubr.bf16.mxu0 0
    %1449 = vmatmul.mubr.bf16.gmra.mrb[0].mxu0 %v1055
    %v1450 = vpop.f32.mrb[0].mxu0
    %v1451 = vadd.f32 0.0, %v1450
    %v1452 = vpop.f32.mrb[0].mxu0
    %v1453 = vpop.f32.mrb[0].mxu0
    %v1454 = vpop.f32.mrb[0].mxu0
    %1455 = vdwg.mxu0
    %v1456 = vlaneseq
    %v1457 = vshrl.u32 %v1456, 7
    %v1458 = vsub.s32 0, %v1457
    %v1459 = vrot.slane %v1451, %v1458
    %v1460 = vadd.f32 %v1339, %v1459
    %v1461 = vadd.f32 %v1342, %v1459
    %v1462 = vadd.f32 %v1347, %v1459
    %v1463 = vld [vmem:[%s6 + $0xa] sm:$0x1]
    %v1464 = vlaneseq
    %v1465 = vshrl.u32 %v1464, 7
    %v1466 = vsub.s32 0, %v1465
    %v1467 = vrot.slane %v1463, %v1466
    %v1468 = vadd.f32 %v1460, %v1467
    %v1469 = vadd.f32 %v1461, %v1467
    %v1470 = vadd.f32 %v1462, %v1467
    %v1471 = vmax.f32 %v1468, 0.0
    %v1472 = vmax.f32 %v1469, 0.0
    %v1473 = vmax.f32 %v1470, 0.0
    %v1474 = vpack.c.bf16 %v1472, %v1471
    %v1475 = vpack.c.bf16 %v1473, %v1473
    %v1476 = vld [vmem:[#allocation8 + $0x240] sm:$0xf]
    %v1477 = vld [vmem:[#allocation8 + $0x244] sm:$0xf]
    %v1478 = vld [vmem:[#allocation8 + $0x248] sm:$0xf]
    %v1479 = vld [vmem:[#allocation8 + $0x24c] sm:$0xf]
    %v1480 = vld [vmem:[#allocation8 + $0x250] sm:$0xf]
    %v1481 = vld [vmem:[#allocation8 + $0x254] sm:$0xf]
    %v1482 = vld [vmem:[#allocation8 + $0x258] sm:$0xf]
    %v1483 = vld [vmem:[#allocation8 + $0x25c] sm:$0xf]
    %v1484 = vld [vmem:[#allocation8 + $0x260] sm:$0xf]
    %v1485 = vld [vmem:[#allocation8 + $0x264] sm:$0xf]
    %v1486 = vld [vmem:[#allocation8 + $0x268] sm:$0xf]
    %v1487 = vld [vmem:[#allocation8 + $0x26c] sm:$0xf]
    %v1488 = vld [vmem:[#allocation8 + $0x270] sm:$0xf]
    %v1489 = vld [vmem:[#allocation8 + $0x274] sm:$0xf]
    %v1490 = vld [vmem:[#allocation8 + $0x278] sm:$0xf]
    %v1491 = vld [vmem:[#allocation8 + $0x27c] sm:$0xf]
    %v1492 = vld [vmem:[%s6 + $0xb] sm:$0x1]
    %v1493 = vlaneseq
    %v1494 = vshrl.u32 %v1493, 7
    %v1495 = vsub.s32 0, %v1494
    %v1496 = vrot.slane %v1492, %v1495
    %v1513 = vunpack.c.l.b16 %v1476
    %v1514 = vunpack.c.l.b16 %v1477
    %v1515 = vunpack.c.l.b16 %v1478
    %v1516 = vunpack.c.l.b16 %v1479
    %v1517 = vunpack.c.l.b16 %v1480
    %v1518 = vunpack.c.l.b16 %v1481
    %v1519 = vunpack.c.l.b16 %v1482
    %v1520 = vunpack.c.l.b16 %v1483
    %v1521 = vunpack.c.l.b16 %v1484
    %v1522 = vunpack.c.l.b16 %v1485
    %v1523 = vunpack.c.l.b16 %v1486
    %v1524 = vunpack.c.l.b16 %v1487
    %v1525 = vunpack.c.l.b16 %v1488
    %v1526 = vunpack.c.l.b16 %v1489
    %v1527 = vunpack.c.l.b16 %v1490
    %v1528 = vunpack.c.l.b16 %v1491
    %v1529 = vpack.c.b16 %v1514, %v1513
    %v1530 = vpack.c.b16 %v1516, %v1515
    %v1531 = vpack.c.b16 %v1518, %v1517
    %v1532 = vpack.c.b16 %v1520, %v1519
    %v1533 = vpack.c.b16 %v1522, %v1521
    %v1534 = vpack.c.b16 %v1524, %v1523
    %v1535 = vpack.c.b16 %v1526, %v1525
    %v1536 = vpack.c.b16 %v1528, %v1527
    %1545 = vmatprep.subr.bf16.mxu0 0
    %1546 = vmatpush1.bf16.msra.mxu0 %v1529
    %1547 = vmatprep.subr.bf16.mxu0 0
    %1548 = vmatpush1.bf16.msra.mxu0 %v1530
    %1549 = vmatprep.subr.bf16.mxu0 0
    %1550 = vmatpush1.bf16.msra.mxu0 %v1531
    %1551 = vmatprep.subr.bf16.mxu0 0
    %1552 = vmatpush1.bf16.msra.mxu0 %v1532
    %1553 = vmatprep.subr.bf16.mxu0 0
    %1554 = vmatpush1.bf16.msra.mxu0 %v1533
    %1555 = vmatprep.subr.bf16.mxu0 0
    %1556 = vmatpush1.bf16.msra.mxu0 %v1534
    %1557 = vmatprep.subr.bf16.mxu0 0
    %1558 = vmatpush1.bf16.msra.mxu0 %v1535
    %1559 = vmatprep.subr.bf16.mxu0 0
    %1560 = vmatpush1.bf16.msra.mxu0 %v1536
    %1561 = vmatprep.subr.bf16.mxu0 0
    %1562 = vmatpush1.bf16.msra.mxu0 0
    %1563 = vmatprep.subr.bf16.mxu0 0
    %1564 = vmatpush1.bf16.msra.mxu0 0
    %1565 = vmatprep.subr.bf16.mxu0 0
    %1566 = vmatpush1.bf16.msra.mxu0 0
    %1567 = vmatprep.subr.bf16.mxu0 0
    %1568 = vmatpush1.bf16.msra.mxu0 0
    %1569 = vmatprep.subr.bf16.mxu0 0
    %1570 = vmatpush1.bf16.msra.mxu0 0
    %1571 = vmatprep.subr.bf16.mxu0 0
    %1572 = vmatpush1.bf16.msra.mxu0 0
    %1573 = vmatprep.subr.bf16.mxu0 0
    %1574 = vmatpush1.bf16.msra.mxu0 0
    %1575 = vmatprep.subr.bf16.mxu0 0
    %1576 = vmatpush1.bf16.msra.mxu0 0
    %1577 = vmatprep.mubr.bf16.mxu0 0
    %1578 = vmatmul.mubr.bf16.gmra.mrb[0].mxu0 %v1474
    %v1579 = vpop.f32.mrb[0].mxu0
    %v1580 = vadd.f32 %v1496, %v1579
    %v1581 = vpop.f32.mrb[0].mxu0
    %v1582 = vpop.f32.mrb[0].mxu0
    %v1583 = vadd.f32 %v1496, %v1582
    %v1584 = vpop.f32.mrb[0].mxu0
    %1585 = vmatprep.mubr.bf16.mxu0 0
    %1586 = vmatmul.mubr.bf16.gmra.mrb[0].mxu0 %v1475
    %v1587 = vpop.f32.mrb[0].mxu0
    %v1588 = vadd.f32 %v1496, %v1587
    %v1589 = vpop.f32.mrb[0].mxu0
    %v1590 = vpop.f32.mrb[0].mxu0
    %v1591 = vpop.f32.mrb[0].mxu0
    %1592 = vdwg.mxu0
    %v1593 = vmax.f32 %v1580, 0.0
    %v1594 = vmax.f32 %v1583, 0.0
    %v1595 = vmax.f32 %v1588, 0.0
    %v1596 = vpack.c.bf16 %v1594, %v1593
    %v1597 = vpack.c.bf16 %v1595, %v1595
    %v1598 = vld [vmem:[#allocation8 + $0x280] sm:$0xf]
    %v1599 = vld [vmem:[#allocation8 + $0x284] sm:$0xf]
    %v1600 = vld [vmem:[#allocation8 + $0x288] sm:$0xf]
    %v1601 = vld [vmem:[#allocation8 + $0x28c] sm:$0xf]
    %v1602 = vld [vmem:[#allocation8 + $0x290] sm:$0xf]
    %v1603 = vld [vmem:[#allocation8 + $0x294] sm:$0xf]
    %v1604 = vld [vmem:[#allocation8 + $0x298] sm:$0xf]
    %v1605 = vld [vmem:[#allocation8 + $0x29c] sm:$0xf]
    %v1606 = vld [vmem:[#allocation8 + $0x2a0] sm:$0xf]
    %v1607 = vld [vmem:[#allocation8 + $0x2a4] sm:$0xf]
    %v1608 = vld [vmem:[#allocation8 + $0x2a8] sm:$0xf]
    %v1609 = vld [vmem:[#allocation8 + $0x2ac] sm:$0xf]
    %v1610 = vld [vmem:[#allocation8 + $0x2b0] sm:$0xf]
    %v1611 = vld [vmem:[#allocation8 + $0x2b4] sm:$0xf]
    %v1612 = vld [vmem:[#allocation8 + $0x2b8] sm:$0xf]
    %v1613 = vld [vmem:[#allocation8 + $0x2bc] sm:$0xf]
    %v1614 = vld [vmem:[%s6 + $0xc] sm:$0x1]
    %v1615 = vlaneseq
    %v1616 = vshrl.u32 %v1615, 7
    %v1617 = vsub.s32 0, %v1616
    %v1618 = vrot.slane %v1614, %v1617
    %v1635 = vunpack.c.l.b16 %v1598
    %v1636 = vunpack.c.l.b16 %v1599
    %v1637 = vunpack.c.l.b16 %v1600
    %v1638 = vunpack.c.l.b16 %v1601
    %v1639 = vunpack.c.l.b16 %v1602
    %v1640 = vunpack.c.l.b16 %v1603
    %v1641 = vunpack.c.l.b16 %v1604
    %v1642 = vunpack.c.l.b16 %v1605
    %v1643 = vunpack.c.l.b16 %v1606
    %v1644 = vunpack.c.l.b16 %v1607
    %v1645 = vunpack.c.l.b16 %v1608
    %v1646 = vunpack.c.l.b16 %v1609
    %v1647 = vunpack.c.l.b16 %v1610
    %v1648 = vunpack.c.l.b16 %v1611
    %v1649 = vunpack.c.l.b16 %v1612
    %v1650 = vunpack.c.l.b16 %v1613
    %v1651 = vpack.c.b16 %v1636, %v1635
    %v1652 = vpack.c.b16 %v1638, %v1637
    %v1653 = vpack.c.b16 %v1640, %v1639
    %v1654 = vpack.c.b16 %v1642, %v1641
    %v1655 = vpack.c.b16 %v1644, %v1643
    %v1656 = vpack.c.b16 %v1646, %v1645
    %v1657 = vpack.c.b16 %v1648, %v1647
    %v1658 = vpack.c.b16 %v1650, %v1649
    %1667 = vmatprep.subr.bf16.mxu0 0
    %1668 = vmatpush1.bf16.msra.mxu0 %v1651
    %1669 = vmatprep.subr.bf16.mxu0 0
    %1670 = vmatpush1.bf16.msra.mxu0 %v1652
    %1671 = vmatprep.subr.bf16.mxu0 0
    %1672 = vmatpush1.bf16.msra.mxu0 %v1653
    %1673 = vmatprep.subr.bf16.mxu0 0
    %1674 = vmatpush1.bf16.msra.mxu0 %v1654
    %1675 = vmatprep.subr.bf16.mxu0 0
    %1676 = vmatpush1.bf16.msra.mxu0 %v1655
    %1677 = vmatprep.subr.bf16.mxu0 0
    %1678 = vmatpush1.bf16.msra.mxu0 %v1656
    %1679 = vmatprep.subr.bf16.mxu0 0
    %1680 = vmatpush1.bf16.msra.mxu0 %v1657
    %1681 = vmatprep.subr.bf16.mxu0 0
    %1682 = vmatpush1.bf16.msra.mxu0 %v1658
    %1683 = vmatprep.subr.bf16.mxu0 0
    %1684 = vmatpush1.bf16.msra.mxu0 0
    %1685 = vmatprep.subr.bf16.mxu0 0
    %1686 = vmatpush1.bf16.msra.mxu0 0
    %1687 = vmatprep.subr.bf16.mxu0 0
    %1688 = vmatpush1.bf16.msra.mxu0 0
    %1689 = vmatprep.subr.bf16.mxu0 0
    %1690 = vmatpush1.bf16.msra.mxu0 0
    %1691 = vmatprep.subr.bf16.mxu0 0
    %1692 = vmatpush1.bf16.msra.mxu0 0
    %1693 = vmatprep.subr.bf16.mxu0 0
    %1694 = vmatpush1.bf16.msra.mxu0 0
    %1695 = vmatprep.subr.bf16.mxu0 0
    %1696 = vmatpush1.bf16.msra.mxu0 0
    %1697 = vmatprep.subr.bf16.mxu0 0
    %1698 = vmatpush1.bf16.msra.mxu0 0
    %1699 = vmatprep.mubr.bf16.mxu0 0
    %1700 = vmatmul.mubr.bf16.gmra.mrb[0].mxu0 %v1596
    %v1701 = vpop.f32.mrb[0].mxu0
    %v1702 = vadd.f32 %v1618, %v1701
    %v1703 = vpop.f32.mrb[0].mxu0
    %v1704 = vpop.f32.mrb[0].mxu0
    %v1705 = vadd.f32 %v1618, %v1704
    %v1706 = vpop.f32.mrb[0].mxu0
    %1707 = vmatprep.mubr.bf16.mxu0 0
    %1708 = vmatmul.mubr.bf16.gmra.mrb[0].mxu0 %v1597
    %v1709 = vpop.f32.mrb[0].mxu0
    %v1710 = vadd.f32 %v1618, %v1709
    %v1711 = vpop.f32.mrb[0].mxu0
    %v1712 = vpop.f32.mrb[0].mxu0
    %v1713 = vpop.f32.mrb[0].mxu0
    %1714 = vdwg.mxu0
    %v1715 = vmul.f32 %v1702, %v1702
    %v1716 = vmul.f32 %v1705, %v1705
    %v1717 = vmul.f32 %v1710, %v1710
    %1718 = vadd.xlane.f32.xlu0 %v1715
    %v1719 = vpop.xlane.xlu0 %1718
    %1720 = vadd.xlane.f32.xlu0 %v1716
    %v1721 = vpop.xlane.xlu0 %1720
    %1722 = vadd.xlane.f32.xlu0 %v1717
    %v1723 = vpop.xlane.xlu0 %1722
    %v1724 = vmax.f32 %v1719, 1e-16
    %v1725 = vmax.f32 %v1721, 1e-16
    %v1726 = vmax.f32 %v1723, 1e-16
    %v1727 = vrsqrt.pop %v1724
    %v1728 = vrsqrt.pop %v1725
    %v1729 = vrsqrt.pop %v1726
    %v1730 = vmul.f32 %v1702, %v1727
    %v1731 = vmul.f32 %v1705, %v1728
    %v1732 = vmul.f32 %v1710, %v1729
    %v1733 = vpack.c.bf16 %v1731, %v1730
    %v1734 = vpack.c.bf16 %v1732, %v1732
    %v1735 = vadd.f32 %v1730, %v1731
    %v1736 = vadd.f32 %v1735, %v1732
    %v1737 = vrot.slane %v1736, 4
    %v1738 = vadd.f32 %v1736, %v1737
    %v1739 = vrot.slane %v1738, 2
    %v1740 = vadd.f32 %v1738, %v1739
    %v1741 = vrot.slane %v1740, 1
    %v1742 = vadd.f32 %v1740, %v1741
    %v1743 = vmul.f32 %v1742, %v1742
    %1744 = vadd.xlane.f32.xlu0 %v1743
    %v1745 = vpop.xlane.xlu0 %1744
    %v1746 = vmax.f32 %v1745, 1e-16
    %v1747 = vrsqrt.pop %v1746
    %v1748 = vmul.f32 %v1742, %v1747
    %v1749 = vpack.c.bf16 %v1748, %v1748
    %v1751 = vsel %vm1074, %v1734, 0
    %1753 = vmatprep.subr.bf16.mxu0 0
    %1754 = vmatpush1.bf16.msra.mxu0 %v1733
    %1755 = vmatprep.subr.bf16.mxu0 0
    %1756 = vmatpush1.bf16.msra.mxu0 %v1751
    %1757 = vmatprep.subr.bf16.mxu0 0
    %1758 = vmatpush1.bf16.msra.mxu0 0
    %1759 = vmatprep.subr.bf16.mxu0 0
    %1760 = vmatpush1.bf16.msra.mxu0 0
    %1761 = vmatprep.subr.bf16.mxu0 0
    %1762 = vmatpush1.bf16.msra.mxu0 0
    %1763 = vmatprep.subr.bf16.mxu0 0
    %1764 = vmatpush1.bf16.msra.mxu0 0
    %1765 = vmatprep.subr.bf16.mxu0 0
    %1766 = vmatpush1.bf16.msra.mxu0 0
    %1767 = vmatprep.subr.bf16.mxu0 0
    %1768 = vmatpush1.bf16.msra.mxu0 0
    %1769 = vmatprep.subr.bf16.mxu0 0
    %1770 = vmatpush1.bf16.msra.mxu0 0
    %1771 = vmatprep.subr.bf16.mxu0 0
    %1772 = vmatpush1.bf16.msra.mxu0 0
    %1773 = vmatprep.subr.bf16.mxu0 0
    %1774 = vmatpush1.bf16.msra.mxu0 0
    %1775 = vmatprep.subr.bf16.mxu0 0
    %1776 = vmatpush1.bf16.msra.mxu0 0
    %1777 = vmatprep.subr.bf16.mxu0 0
    %1778 = vmatpush1.bf16.msra.mxu0 0
    %1779 = vmatprep.subr.bf16.mxu0 0
    %1780 = vmatpush1.bf16.msra.mxu0 0
    %1781 = vmatprep.subr.bf16.mxu0 0
    %1782 = vmatpush1.bf16.msra.mxu0 0
    %1783 = vmatprep.subr.bf16.mxu0 0
    %1784 = vmatpush1.bf16.msra.mxu0 0
    %1785 = vmatprep.mubr.bf16.mxu0 0
    %1786 = vmatmul.mubr.bf16.gmra.mrb[0].mxu0 %v1069
    %v1787 = vpop.f32.mrb[0].mxu0
    %v1788 = vadd.f32 0.0, %v1787
    %v1789 = vpop.f32.mrb[0].mxu0
    %v1790 = vpop.f32.mrb[0].mxu0
    %v1791 = vadd.f32 0.0, %v1790
    %v1792 = vpop.f32.mrb[0].mxu0
    %1793 = vmatprep.mubr.bf16.mxu0 0
    %1794 = vmatmul.mubr.bf16.gmra.mrb[0].mxu0 %v1072
    %v1795 = vpop.f32.mrb[0].mxu0
    %v1796 = vadd.f32 0.0, %v1795
    %v1797 = vpop.f32.mrb[0].mxu0
    %v1798 = vpop.f32.mrb[0].mxu0
    %v1799 = vpop.f32.mrb[0].mxu0
    %1800 = vdwg.mxu0
    %v1801 = vpack.c.bf16 %v1791, %v1788
    %v1802 = vpack.c.bf16 %v1796, %v1796
    %1803 = vmatprep.subr.bf16.mxu0 0
    %1804 = vmatpush1.bf16.msra.mxu0 %v1192
    %1805 = vmatprep.subr.bf16.mxu0 0
    %1806 = vmatpush1.bf16.msra.mxu0 %v1193
    %1807 = vmatprep.subr.bf16.mxu0 0
    %1808 = vmatpush1.bf16.msra.mxu0 %v1194
    %1809 = vmatprep.subr.bf16.mxu0 0
    %1810 = vmatpush1.bf16.msra.mxu0 %v1195
    %1811 = vmatprep.subr.bf16.mxu0 0
    %1812 = vmatpush1.bf16.msra.mxu0 %v1196
    %1813 = vmatprep.subr.bf16.mxu0 0
    %1814 = vmatpush1.bf16.msra.mxu0 %v1197
    %1815 = vmatprep.subr.bf16.mxu0 0
    %1816 = vmatpush1.bf16.msra.mxu0 %v1198
    %1817 = vmatprep.subr.bf16.mxu0 0
    %1818 = vmatpush1.bf16.msra.mxu0 %v1199
    %1819 = vmatprep.subr.bf16.mxu0 0
    %1820 = vmatpush1.bf16.msra.mxu0 0
    %1821 = vmatprep.subr.bf16.mxu0 0
    %1822 = vmatpush1.bf16.msra.mxu0 0
    %1823 = vmatprep.subr.bf16.mxu0 0
    %1824 = vmatpush1.bf16.msra.mxu0 0
    %1825 = vmatprep.subr.bf16.mxu0 0
    %1826 = vmatpush1.bf16.msra.mxu0 0
    %1827 = vmatprep.subr.bf16.mxu0 0
    %1828 = vmatpush1.bf16.msra.mxu0 0
    %1829 = vmatprep.subr.bf16.mxu0 0
    %1830 = vmatpush1.bf16.msra.mxu0 0
    %1831 = vmatprep.subr.bf16.mxu0 0
    %1832 = vmatpush1.bf16.msra.mxu0 0
    %1833 = vmatprep.subr.bf16.mxu0 0
    %1834 = vmatpush1.bf16.msra.mxu0 0
    %1835 = vmatprep.mubr.bf16.mxu0 0
    %1836 = vmatmul.mubr.bf16.gmra.mrb[0].mxu0 %v1733
    %v1837 = vpop.f32.mrb[0].mxu0
    %v1838 = vadd.f32 0.0, %v1837
    %v1839 = vpop.f32.mrb[0].mxu0
    %v1840 = vpop.f32.mrb[0].mxu0
    %v1841 = vadd.f32 0.0, %v1840
    %v1842 = vpop.f32.mrb[0].mxu0
    %1843 = vmatprep.mubr.bf16.mxu0 0
    %1844 = vmatmul.mubr.bf16.gmra.mrb[0].mxu0 %v1734
    %v1845 = vpop.f32.mrb[0].mxu0
    %v1846 = vadd.f32 0.0, %v1845
    %v1847 = vpop.f32.mrb[0].mxu0
    %v1848 = vpop.f32.mrb[0].mxu0
    %v1849 = vpop.f32.mrb[0].mxu0
    %1850 = vdwg.mxu0
    %1851 = vmatprep.subr.bf16.mxu0 0
    %1852 = vmatpush1.bf16.msra.mxu0 %v1288
    %1853 = vmatprep.subr.bf16.mxu0 0
    %1854 = vmatpush1.bf16.msra.mxu0 %v1289
    %1855 = vmatprep.subr.bf16.mxu0 0
    %1856 = vmatpush1.bf16.msra.mxu0 %v1290
    %1857 = vmatprep.subr.bf16.mxu0 0
    %1858 = vmatpush1.bf16.msra.mxu0 %v1291
    %1859 = vmatprep.subr.bf16.mxu0 0
    %1860 = vmatpush1.bf16.msra.mxu0 %v1292
    %1861 = vmatprep.subr.bf16.mxu0 0
    %1862 = vmatpush1.bf16.msra.mxu0 %v1293
    %1863 = vmatprep.subr.bf16.mxu0 0
    %1864 = vmatpush1.bf16.msra.mxu0 %v1294
    %1865 = vmatprep.subr.bf16.mxu0 0
    %1866 = vmatpush1.bf16.msra.mxu0 %v1295
    %1867 = vmatprep.subr.bf16.mxu0 0
    %1868 = vmatpush1.bf16.msra.mxu0 0
    %1869 = vmatprep.subr.bf16.mxu0 0
    %1870 = vmatpush1.bf16.msra.mxu0 0
    %1871 = vmatprep.subr.bf16.mxu0 0
    %1872 = vmatpush1.bf16.msra.mxu0 0
    %1873 = vmatprep.subr.bf16.mxu0 0
    %1874 = vmatpush1.bf16.msra.mxu0 0
    %1875 = vmatprep.subr.bf16.mxu0 0
    %1876 = vmatpush1.bf16.msra.mxu0 0
    %1877 = vmatprep.subr.bf16.mxu0 0
    %1878 = vmatpush1.bf16.msra.mxu0 0
    %1879 = vmatprep.subr.bf16.mxu0 0
    %1880 = vmatpush1.bf16.msra.mxu0 0
    %1881 = vmatprep.subr.bf16.mxu0 0
    %1882 = vmatpush1.bf16.msra.mxu0 0
    %1883 = vmatprep.mubr.bf16.mxu0 0
    %1884 = vmatmul.mubr.bf16.gmra.mrb[0].mxu0 %v1801
    %v1885 = vpop.f32.mrb[0].mxu0
    %v1886 = vadd.f32 %v1838, %v1885
    %v1887 = vpop.f32.mrb[0].mxu0
    %v1888 = vpop.f32.mrb[0].mxu0
    %v1889 = vadd.f32 %v1841, %v1888
    %v1890 = vpop.f32.mrb[0].mxu0
    %1891 = vmatprep.mubr.bf16.mxu0 0
    %1892 = vmatmul.mubr.bf16.gmra.mrb[0].mxu0 %v1802
    %v1893 = vpop.f32.mrb[0].mxu0
    %v1894 = vadd.f32 %v1846, %v1893
    %v1895 = vpop.f32.mrb[0].mxu0
    %v1896 = vpop.f32.mrb[0].mxu0
    %v1897 = vpop.f32.mrb[0].mxu0
    %1898 = vdwg.mxu0
    %1899 = vmatprep.subr.bf16.mxu0 0
    %1900 = vmatpush1.bf16.msra.mxu0 %v1400
    %1901 = vmatprep.subr.bf16.mxu0 0
    %1902 = vmatpush1.bf16.msra.mxu0 %v1401
    %1903 = vmatprep.subr.bf16.mxu0 0
    %1904 = vmatpush1.bf16.msra.mxu0 %v1402
    %1905 = vmatprep.subr.bf16.mxu0 0
    %1906 = vmatpush1.bf16.msra.mxu0 %v1403
    %1907 = vmatprep.subr.bf16.mxu0 0
    %1908 = vmatpush1.bf16.msra.mxu0 %v1404
    %1909 = vmatprep.subr.bf16.mxu0 0
    %1910 = vmatpush1.bf16.msra.mxu0 %v1405
    %1911 = vmatprep.subr.bf16.mxu0 0
    %1912 = vmatpush1.bf16.msra.mxu0 %v1406
    %1913 = vmatprep.subr.bf16.mxu0 0
    %1914 = vmatpush1.bf16.msra.mxu0 %v1407
    %1915 = vmatprep.subr.bf16.mxu0 0
    %1916 = vmatpush1.bf16.msra.mxu0 0
    %1917 = vmatprep.subr.bf16.mxu0 0
    %1918 = vmatpush1.bf16.msra.mxu0 0
    %1919 = vmatprep.subr.bf16.mxu0 0
    %1920 = vmatpush1.bf16.msra.mxu0 0
    %1921 = vmatprep.subr.bf16.mxu0 0
    %1922 = vmatpush1.bf16.msra.mxu0 0
    %1923 = vmatprep.subr.bf16.mxu0 0
    %1924 = vmatpush1.bf16.msra.mxu0 0
    %1925 = vmatprep.subr.bf16.mxu0 0
    %1926 = vmatpush1.bf16.msra.mxu0 0
    %1927 = vmatprep.subr.bf16.mxu0 0
    %1928 = vmatpush1.bf16.msra.mxu0 0
    %1929 = vmatprep.subr.bf16.mxu0 0
    %1930 = vmatpush1.bf16.msra.mxu0 0
    %1931 = vmatprep.mubr.bf16.mxu0 0
    %1932 = vmatmul.mubr.bf16.gmra.mrb[0].mxu0 %v1749
    %v1933 = vpop.f32.mrb[0].mxu0
    %v1934 = vadd.f32 0.0, %v1933
    %v1935 = vpop.f32.mrb[0].mxu0
    %v1936 = vpop.f32.mrb[0].mxu0
    %v1937 = vpop.f32.mrb[0].mxu0
    %1938 = vdwg.mxu0
    %v1939 = vlaneseq
    %v1940 = vshrl.u32 %v1939, 7
    %v1941 = vsub.s32 0, %v1940
    %v1942 = vrot.slane %v1934, %v1941
    %v1943 = vadd.f32 %v1886, %v1942
    %v1944 = vadd.f32 %v1889, %v1942
    %v1945 = vadd.f32 %v1894, %v1942
    %v1946 = vadd.f32 %v1943, %v1467
    %v1947 = vadd.f32 %v1944, %v1467
    %v1948 = vadd.f32 %v1945, %v1467
    %v1949 = vmax.f32 %v1946, 0.0
    %v1950 = vmax.f32 %v1947, 0.0
    %v1951 = vmax.f32 %v1948, 0.0
    %v1952 = vpack.c.bf16 %v1950, %v1949
    %v1953 = vpack.c.bf16 %v1951, %v1951
    %1954 = vmatprep.subr.bf16.mxu0 0
    %1955 = vmatpush1.bf16.msra.mxu0 %v1529
    %1956 = vmatprep.subr.bf16.mxu0 0
    %1957 = vmatpush1.bf16.msra.mxu0 %v1530
    %1958 = vmatprep.subr.bf16.mxu0 0
    %1959 = vmatpush1.bf16.msra.mxu0 %v1531
    %1960 = vmatprep.subr.bf16.mxu0 0
    %1961 = vmatpush1.bf16.msra.mxu0 %v1532
    %1962 = vmatprep.subr.bf16.mxu0 0
    %1963 = vmatpush1.bf16.msra.mxu0 %v1533
    %1964 = vmatprep.subr.bf16.mxu0 0
    %1965 = vmatpush1.bf16.msra.mxu0 %v1534
    %1966 = vmatprep.subr.bf16.mxu0 0
    %1967 = vmatpush1.bf16.msra.mxu0 %v1535
    %1968 = vmatprep.subr.bf16.mxu0 0
    %1969 = vmatpush1.bf16.msra.mxu0 %v1536
    %1970 = vmatprep.subr.bf16.mxu0 0
    %1971 = vmatpush1.bf16.msra.mxu0 0
    %1972 = vmatprep.subr.bf16.mxu0 0
    %1973 = vmatpush1.bf16.msra.mxu0 0
    %1974 = vmatprep.subr.bf16.mxu0 0
    %1975 = vmatpush1.bf16.msra.mxu0 0
    %1976 = vmatprep.subr.bf16.mxu0 0
    %1977 = vmatpush1.bf16.msra.mxu0 0
    %1978 = vmatprep.subr.bf16.mxu0 0
    %1979 = vmatpush1.bf16.msra.mxu0 0
    %1980 = vmatprep.subr.bf16.mxu0 0
    %1981 = vmatpush1.bf16.msra.mxu0 0
    %1982 = vmatprep.subr.bf16.mxu0 0
    %1983 = vmatpush1.bf16.msra.mxu0 0
    %1984 = vmatprep.subr.bf16.mxu0 0
    %1985 = vmatpush1.bf16.msra.mxu0 0
    %1986 = vmatprep.mubr.bf16.mxu0 0
    %1987 = vmatmul.mubr.bf16.gmra.mrb[0].mxu0 %v1952
    %v1988 = vpop.f32.mrb[0].mxu0
    %v1989 = vadd.f32 %v1496, %v1988
    %v1990 = vpop.f32.mrb[0].mxu0
    %v1991 = vpop.f32.mrb[0].mxu0
    %v1992 = vadd.f32 %v1496, %v1991
    %v1993 = vpop.f32.mrb[0].mxu0
    %1994 = vmatprep.mubr.bf16.mxu0 0
    %1995 = vmatmul.mubr.bf16.gmra.mrb[0].mxu0 %v1953
    %v1996 = vpop.f32.mrb[0].mxu0
    %v1997 = vadd.f32 %v1496, %v1996
    %v1998 = vpop.f32.mrb[0].mxu0
    %v1999 = vpop.f32.mrb[0].mxu0
    %v2000 = vpop.f32.mrb[0].mxu0
    %2001 = vdwg.mxu0
    %v2002 = vmax.f32 %v1989, 0.0
    %v2003 = vmax.f32 %v1992, 0.0
    %v2004 = vmax.f32 %v1997, 0.0
    %v2005 = vpack.c.bf16 %v2003, %v2002
    %v2006 = vpack.c.bf16 %v2004, %v2004
    %2007 = vmatprep.subr.bf16.mxu0 0
    %2008 = vmatpush1.bf16.msra.mxu0 %v1651
    %2009 = vmatprep.subr.bf16.mxu0 0
    %2010 = vmatpush1.bf16.msra.mxu0 %v1652
    %2011 = vmatprep.subr.bf16.mxu0 0
    %2012 = vmatpush1.bf16.msra.mxu0 %v1653
    %2013 = vmatprep.subr.bf16.mxu0 0
    %2014 = vmatpush1.bf16.msra.mxu0 %v1654
    %2015 = vmatprep.subr.bf16.mxu0 0
    %2016 = vmatpush1.bf16.msra.mxu0 %v1655
    %2017 = vmatprep.subr.bf16.mxu0 0
    %2018 = vmatpush1.bf16.msra.mxu0 %v1656
    %2019 = vmatprep.subr.bf16.mxu0 0
    %2020 = vmatpush1.bf16.msra.mxu0 %v1657
    %2021 = vmatprep.subr.bf16.mxu0 0
    %2022 = vmatpush1.bf16.msra.mxu0 %v1658
    %2023 = vmatprep.subr.bf16.mxu0 0
    %2024 = vmatpush1.bf16.msra.mxu0 0
    %2025 = vmatprep.subr.bf16.mxu0 0
    %2026 = vmatpush1.bf16.msra.mxu0 0
    %2027 = vmatprep.subr.bf16.mxu0 0
    %2028 = vmatpush1.bf16.msra.mxu0 0
    %2029 = vmatprep.subr.bf16.mxu0 0
    %2030 = vmatpush1.bf16.msra.mxu0 0
    %2031 = vmatprep.subr.bf16.mxu0 0
    %2032 = vmatpush1.bf16.msra.mxu0 0
    %2033 = vmatprep.subr.bf16.mxu0 0
    %2034 = vmatpush1.bf16.msra.mxu0 0
    %2035 = vmatprep.subr.bf16.mxu0 0
    %2036 = vmatpush1.bf16.msra.mxu0 0
    %2037 = vmatprep.subr.bf16.mxu0 0
    %2038 = vmatpush1.bf16.msra.mxu0 0
    %2039 = vmatprep.mubr.bf16.mxu0 0
    %2040 = vmatmul.mubr.bf16.gmra.mrb[0].mxu0 %v2005
    %v2041 = vpop.f32.mrb[0].mxu0
    %v2042 = vadd.f32 %v1618, %v2041
    %v2043 = vpop.f32.mrb[0].mxu0
    %v2044 = vpop.f32.mrb[0].mxu0
    %v2045 = vadd.f32 %v1618, %v2044
    %v2046 = vpop.f32.mrb[0].mxu0
    %2047 = vmatprep.mubr.bf16.mxu0 0
    %2048 = vmatmul.mubr.bf16.gmra.mrb[0].mxu0 %v2006
    %v2049 = vpop.f32.mrb[0].mxu0
    %v2050 = vadd.f32 %v1618, %v2049
    %v2051 = vpop.f32.mrb[0].mxu0
    %v2052 = vpop.f32.mrb[0].mxu0
    %v2053 = vpop.f32.mrb[0].mxu0
    %2054 = vdwg.mxu0
    %v2055 = vmul.f32 %v2042, %v2042
    %v2056 = vmul.f32 %v2045, %v2045
    %v2057 = vmul.f32 %v2050, %v2050
    %2058 = vadd.xlane.f32.xlu0 %v2055
    %v2059 = vpop.xlane.xlu0 %2058
    %2060 = vadd.xlane.f32.xlu0 %v2056
    %v2061 = vpop.xlane.xlu0 %2060
    %2062 = vadd.xlane.f32.xlu0 %v2057
    %v2063 = vpop.xlane.xlu0 %2062
    %v2064 = vmax.f32 %v2059, 1e-16
    %v2065 = vmax.f32 %v2061, 1e-16
    %v2066 = vmax.f32 %v2063, 1e-16
    %v2067 = vrsqrt.pop %v2064
    %v2068 = vrsqrt.pop %v2065
    %v2069 = vrsqrt.pop %v2066
    %v2070 = vmul.f32 %v2042, %v2067
    %v2071 = vmul.f32 %v2045, %v2068
    %v2072 = vmul.f32 %v2050, %v2069
    %v2073 = vpack.c.bf16 %v2071, %v2070
    %v2074 = vpack.c.bf16 %v2072, %v2072
    %v2075 = vadd.f32 %v2070, %v2071
    %v2076 = vadd.f32 %v2075, %v2072
    %v2077 = vrot.slane %v2076, 4
    %v2078 = vadd.f32 %v2076, %v2077
    %v2079 = vrot.slane %v2078, 2
    %v2080 = vadd.f32 %v2078, %v2079
    %v2081 = vrot.slane %v2080, 1
    %v2082 = vadd.f32 %v2080, %v2081
    %v2083 = vmul.f32 %v2082, %v2082
    %2084 = vadd.xlane.f32.xlu0 %v2083
    %v2085 = vpop.xlane.xlu0 %2084
    %v2086 = vmax.f32 %v2085, 1e-16
    %v2087 = vrsqrt.pop %v2086
    %v2088 = vmul.f32 %v2082, %v2087
    %v2089 = vpack.c.bf16 %v2088, %v2088
    %v2091 = vsel %vm1074, %v2074, 0
    %2093 = vmatprep.subr.bf16.mxu0 0
    %2094 = vmatpush1.bf16.msra.mxu0 %v2073
    %2095 = vmatprep.subr.bf16.mxu0 0
    %2096 = vmatpush1.bf16.msra.mxu0 %v2091
    %2097 = vmatprep.subr.bf16.mxu0 0
    %2098 = vmatpush1.bf16.msra.mxu0 0
    %2099 = vmatprep.subr.bf16.mxu0 0
    %2100 = vmatpush1.bf16.msra.mxu0 0
    %2101 = vmatprep.subr.bf16.mxu0 0
    %2102 = vmatpush1.bf16.msra.mxu0 0
    %2103 = vmatprep.subr.bf16.mxu0 0
    %2104 = vmatpush1.bf16.msra.mxu0 0
    %2105 = vmatprep.subr.bf16.mxu0 0
    %2106 = vmatpush1.bf16.msra.mxu0 0
    %2107 = vmatprep.subr.bf16.mxu0 0
    %2108 = vmatpush1.bf16.msra.mxu0 0
    %2109 = vmatprep.subr.bf16.mxu0 0
    %2110 = vmatpush1.bf16.msra.mxu0 0
    %2111 = vmatprep.subr.bf16.mxu0 0
    %2112 = vmatpush1.bf16.msra.mxu0 0
    %2113 = vmatprep.subr.bf16.mxu0 0
    %2114 = vmatpush1.bf16.msra.mxu0 0
    %2115 = vmatprep.subr.bf16.mxu0 0
    %2116 = vmatpush1.bf16.msra.mxu0 0
    %2117 = vmatprep.subr.bf16.mxu0 0
    %2118 = vmatpush1.bf16.msra.mxu0 0
    %2119 = vmatprep.subr.bf16.mxu0 0
    %2120 = vmatpush1.bf16.msra.mxu0 0
    %2121 = vmatprep.subr.bf16.mxu0 0
    %2122 = vmatpush1.bf16.msra.mxu0 0
    %2123 = vmatprep.subr.bf16.mxu0 0
    %2124 = vmatpush1.bf16.msra.mxu0 0
    %2125 = vmatprep.mubr.bf16.mxu0 0
    %2126 = vmatmul.mubr.bf16.gmra.mrb[0].mxu0 %v1069
    %v2127 = vpop.f32.mrb[0].mxu0
    %v2128 = vadd.f32 0.0, %v2127
    %v2129 = vpop.f32.mrb[0].mxu0
    %v2130 = vpop.f32.mrb[0].mxu0
    %v2131 = vadd.f32 0.0, %v2130
    %v2132 = vpop.f32.mrb[0].mxu0
    %2133 = vmatprep.mubr.bf16.mxu0 0
    %2134 = vmatmul.mubr.bf16.gmra.mrb[0].mxu0 %v1072
    %v2135 = vpop.f32.mrb[0].mxu0
    %v2136 = vadd.f32 0.0, %v2135
    %v2137 = vpop.f32.mrb[0].mxu0
    %v2138 = vpop.f32.mrb[0].mxu0
    %v2139 = vpop.f32.mrb[0].mxu0
    %2140 = vdwg.mxu0
    %v2141 = vpack.c.bf16 %v2131, %v2128
    %v2142 = vpack.c.bf16 %v2136, %v2136
    %v2143 = vld [vmem:[#allocation8 + $0x2c0] sm:$0xf]
    %v2144 = vld [vmem:[#allocation8 + $0x2c4] sm:$0xf]
    %v2145 = vld [vmem:[#allocation8 + $0x2c8] sm:$0xf]
    %v2146 = vld [vmem:[#allocation8 + $0x2cc] sm:$0xf]
    %v2147 = vld [vmem:[#allocation8 + $0x2d0] sm:$0xf]
    %v2148 = vld [vmem:[#allocation8 + $0x2d4] sm:$0xf]
    %v2149 = vld [vmem:[#allocation8 + $0x2d8] sm:$0xf]
    %v2150 = vld [vmem:[#allocation8 + $0x2dc] sm:$0xf]
    %v2151 = vld [vmem:[#allocation8 + $0x2e0] sm:$0xf]
    %v2152 = vld [vmem:[#allocation8 + $0x2e4] sm:$0xf]
    %v2153 = vld [vmem:[#allocation8 + $0x2e8] sm:$0xf]
    %v2154 = vld [vmem:[#allocation8 + $0x2ec] sm:$0xf]
    %v2155 = vld [vmem:[#allocation8 + $0x2f0] sm:$0xf]
    %v2156 = vld [vmem:[#allocation8 + $0x2f4] sm:$0xf]
    %v2157 = vld [vmem:[#allocation8 + $0x2f8] sm:$0xf]
    %v2158 = vld [vmem:[#allocation8 + $0x2fc] sm:$0xf]
    %v2159 = vld [vmem:[#allocation8 + $0x300] sm:$0xf]
    %v2160 = vld [vmem:[#allocation8 + $0x304] sm:$0xf]
    %v2161 = vld [vmem:[#allocation8 + $0x308] sm:$0xf]
    %v2162 = vld [vmem:[#allocation8 + $0x30c] sm:$0xf]
    %v2163 = vld [vmem:[#allocation8 + $0x310] sm:$0xf]
    %v2164 = vld [vmem:[#allocation8 + $0x314] sm:$0xf]
    %v2165 = vld [vmem:[#allocation8 + $0x318] sm:$0xf]
    %v2166 = vld [vmem:[#allocation8 + $0x31c] sm:$0xf]
    %v2167 = vld [vmem:[#allocation8 + $0x320] sm:$0xf]
    %v2168 = vld [vmem:[#allocation8 + $0x324] sm:$0xf]
    %v2169 = vld [vmem:[#allocation8 + $0x328] sm:$0xf]
    %v2170 = vld [vmem:[#allocation8 + $0x32c] sm:$0xf]
    %v2171 = vld [vmem:[#allocation8 + $0x330] sm:$0xf]
    %v2172 = vld [vmem:[#allocation8 + $0x334] sm:$0xf]
    %v2173 = vld [vmem:[#allocation8 + $0x338] sm:$0xf]
    %v2174 = vld [vmem:[#allocation8 + $0x33c] sm:$0xf]
    %v2191 = vunpack.c.l.b16 %v2159
    %v2192 = vunpack.c.l.b16 %v2160
    %v2193 = vunpack.c.l.b16 %v2161
    %v2194 = vunpack.c.l.b16 %v2162
    %v2195 = vunpack.c.l.b16 %v2163
    %v2196 = vunpack.c.l.b16 %v2164
    %v2197 = vunpack.c.l.b16 %v2165
    %v2198 = vunpack.c.l.b16 %v2166
    %v2199 = vunpack.c.l.b16 %v2167
    %v2200 = vunpack.c.l.b16 %v2168
    %v2201 = vunpack.c.l.b16 %v2169
    %v2202 = vunpack.c.l.b16 %v2170
    %v2203 = vunpack.c.l.b16 %v2171
    %v2204 = vunpack.c.l.b16 %v2172
    %v2205 = vunpack.c.l.b16 %v2173
    %v2206 = vunpack.c.l.b16 %v2174
    %v2207 = vpack.c.b16 %v2192, %v2191
    %v2208 = vpack.c.b16 %v2194, %v2193
    %v2209 = vpack.c.b16 %v2196, %v2195
    %v2210 = vpack.c.b16 %v2198, %v2197
    %v2211 = vpack.c.b16 %v2200, %v2199
    %v2212 = vpack.c.b16 %v2202, %v2201
    %v2213 = vpack.c.b16 %v2204, %v2203
    %v2214 = vpack.c.b16 %v2206, %v2205
    %2223 = vmatprep.subr.bf16.mxu0 0
    %2224 = vmatpush1.bf16.msra.mxu0 %v2207
    %2225 = vmatprep.subr.bf16.mxu0 0
    %2226 = vmatpush1.bf16.msra.mxu0 %v2208
    %2227 = vmatprep.subr.bf16.mxu0 0
    %2228 = vmatpush1.bf16.msra.mxu0 %v2209
    %2229 = vmatprep.subr.bf16.mxu0 0
    %2230 = vmatpush1.bf16.msra.mxu0 %v2210
    %2231 = vmatprep.subr.bf16.mxu0 0
    %2232 = vmatpush1.bf16.msra.mxu0 %v2211
    %2233 = vmatprep.subr.bf16.mxu0 0
    %2234 = vmatpush1.bf16.msra.mxu0 %v2212
    %2235 = vmatprep.subr.bf16.mxu0 0
    %2236 = vmatpush1.bf16.msra.mxu0 %v2213
    %2237 = vmatprep.subr.bf16.mxu0 0
    %2238 = vmatpush1.bf16.msra.mxu0 %v2214
    %2239 = vmatprep.subr.bf16.mxu0 0
    %2240 = vmatpush1.bf16.msra.mxu0 0
    %2241 = vmatprep.subr.bf16.mxu0 0
    %2242 = vmatpush1.bf16.msra.mxu0 0
    %2243 = vmatprep.subr.bf16.mxu0 0
    %2244 = vmatpush1.bf16.msra.mxu0 0
    %2245 = vmatprep.subr.bf16.mxu0 0
    %2246 = vmatpush1.bf16.msra.mxu0 0
    %2247 = vmatprep.subr.bf16.mxu0 0
    %2248 = vmatpush1.bf16.msra.mxu0 0
    %2249 = vmatprep.subr.bf16.mxu0 0
    %2250 = vmatpush1.bf16.msra.mxu0 0
    %2251 = vmatprep.subr.bf16.mxu0 0
    %2252 = vmatpush1.bf16.msra.mxu0 0
    %2253 = vmatprep.subr.bf16.mxu0 0
    %2254 = vmatpush1.bf16.msra.mxu0 0
    %2255 = vmatprep.mubr.bf16.mxu0 0
    %2256 = vmatmul.mubr.bf16.gmra.mrb[0].mxu0 %v2073
    %v2257 = vpop.f32.mrb[0].mxu0
    %v2258 = vadd.f32 0.0, %v2257
    %v2259 = vpop.f32.mrb[0].mxu0
    %v2260 = vpop.f32.mrb[0].mxu0
    %v2261 = vadd.f32 0.0, %v2260
    %v2262 = vpop.f32.mrb[0].mxu0
    %2263 = vmatprep.mubr.bf16.mxu0 0
    %2264 = vmatmul.mubr.bf16.gmra.mrb[0].mxu0 %v2074
    %v2265 = vpop.f32.mrb[0].mxu0
    %v2266 = vadd.f32 0.0, %v2265
    %v2267 = vpop.f32.mrb[0].mxu0
    %v2268 = vpop.f32.mrb[0].mxu0
    %v2269 = vpop.f32.mrb[0].mxu0
    %2270 = vdwg.mxu0
    %v2287 = vunpack.c.l.b16 %v2143
    %v2288 = vunpack.c.l.b16 %v2144
    %v2289 = vunpack.c.l.b16 %v2145
    %v2290 = vunpack.c.l.b16 %v2146
    %v2291 = vunpack.c.l.b16 %v2147
    %v2292 = vunpack.c.l.b16 %v2148
    %v2293 = vunpack.c.l.b16 %v2149
    %v2294 = vunpack.c.l.b16 %v2150
    %v2295 = vunpack.c.l.b16 %v2151
    %v2296 = vunpack.c.l.b16 %v2152
    %v2297 = vunpack.c.l.b16 %v2153
    %v2298 = vunpack.c.l.b16 %v2154
    %v2299 = vunpack.c.l.b16 %v2155
    %v2300 = vunpack.c.l.b16 %v2156
    %v2301 = vunpack.c.l.b16 %v2157
    %v2302 = vunpack.c.l.b16 %v2158
    %v2303 = vpack.c.b16 %v2288, %v2287
    %v2304 = vpack.c.b16 %v2290, %v2289
    %v2305 = vpack.c.b16 %v2292, %v2291
    %v2306 = vpack.c.b16 %v2294, %v2293
    %v2307 = vpack.c.b16 %v2296, %v2295
    %v2308 = vpack.c.b16 %v2298, %v2297
    %v2309 = vpack.c.b16 %v2300, %v2299
    %v2310 = vpack.c.b16 %v2302, %v2301
    %2319 = vmatprep.subr.bf16.mxu0 0
    %2320 = vmatpush1.bf16.msra.mxu0 %v2303
    %2321 = vmatprep.subr.bf16.mxu0 0
    %2322 = vmatpush1.bf16.msra.mxu0 %v2304
    %2323 = vmatprep.subr.bf16.mxu0 0
    %2324 = vmatpush1.bf16.msra.mxu0 %v2305
    %2325 = vmatprep.subr.bf16.mxu0 0
    %2326 = vmatpush1.bf16.msra.mxu0 %v2306
    %2327 = vmatprep.subr.bf16.mxu0 0
    %2328 = vmatpush1.bf16.msra.mxu0 %v2307
    %2329 = vmatprep.subr.bf16.mxu0 0
    %2330 = vmatpush1.bf16.msra.mxu0 %v2308
    %2331 = vmatprep.subr.bf16.mxu0 0
    %2332 = vmatpush1.bf16.msra.mxu0 %v2309
    %2333 = vmatprep.subr.bf16.mxu0 0
    %2334 = vmatpush1.bf16.msra.mxu0 %v2310
    %2335 = vmatprep.subr.bf16.mxu0 0
    %2336 = vmatpush1.bf16.msra.mxu0 0
    %2337 = vmatprep.subr.bf16.mxu0 0
    %2338 = vmatpush1.bf16.msra.mxu0 0
    %2339 = vmatprep.subr.bf16.mxu0 0
    %2340 = vmatpush1.bf16.msra.mxu0 0
    %2341 = vmatprep.subr.bf16.mxu0 0
    %2342 = vmatpush1.bf16.msra.mxu0 0
    %2343 = vmatprep.subr.bf16.mxu0 0
    %2344 = vmatpush1.bf16.msra.mxu0 0
    %2345 = vmatprep.subr.bf16.mxu0 0
    %2346 = vmatpush1.bf16.msra.mxu0 0
    %2347 = vmatprep.subr.bf16.mxu0 0
    %2348 = vmatpush1.bf16.msra.mxu0 0
    %2349 = vmatprep.subr.bf16.mxu0 0
    %2350 = vmatpush1.bf16.msra.mxu0 0
    %2351 = vmatprep.mubr.bf16.mxu0 0
    %2352 = vmatmul.mubr.bf16.gmra.mrb[0].mxu0 %v2141
    %v2353 = vpop.f32.mrb[0].mxu0
    %v2354 = vadd.f32 %v2258, %v2353
    %v2355 = vpop.f32.mrb[0].mxu0
    %v2356 = vpop.f32.mrb[0].mxu0
    %v2357 = vadd.f32 %v2261, %v2356
    %v2358 = vpop.f32.mrb[0].mxu0
    %2359 = vmatprep.mubr.bf16.mxu0 0
    %2360 = vmatmul.mubr.bf16.gmra.mrb[0].mxu0 %v2142
    %v2361 = vpop.f32.mrb[0].mxu0
    %v2362 = vadd.f32 %v2266, %v2361
    %v2363 = vpop.f32.mrb[0].mxu0
    %v2364 = vpop.f32.mrb[0].mxu0
    %v2365 = vpop.f32.mrb[0].mxu0
    %2366 = vdwg.mxu0
    %v2367 = vld [vmem:[#allocation8 + $0x340] sm:$0xf]
    %v2368 = vld [vmem:[#allocation8 + $0x344] sm:$0xf]
    %v2369 = vld [vmem:[#allocation8 + $0x348] sm:$0xf]
    %v2370 = vld [vmem:[#allocation8 + $0x34c] sm:$0xf]
    %v2371 = vld [vmem:[#allocation8 + $0x350] sm:$0xf]
    %v2372 = vld [vmem:[#allocation8 + $0x354] sm:$0xf]
    %v2373 = vld [vmem:[#allocation8 + $0x358] sm:$0xf]
    %v2374 = vld [vmem:[#allocation8 + $0x35c] sm:$0xf]
    %v2375 = vld [vmem:[#allocation8 + $0x360] sm:$0xf]
    %v2376 = vld [vmem:[#allocation8 + $0x364] sm:$0xf]
    %v2377 = vld [vmem:[#allocation8 + $0x368] sm:$0xf]
    %v2378 = vld [vmem:[#allocation8 + $0x36c] sm:$0xf]
    %v2379 = vld [vmem:[#allocation8 + $0x370] sm:$0xf]
    %v2380 = vld [vmem:[#allocation8 + $0x374] sm:$0xf]
    %v2381 = vld [vmem:[#allocation8 + $0x378] sm:$0xf]
    %v2382 = vld [vmem:[#allocation8 + $0x37c] sm:$0xf]
    %v2399 = vunpack.c.l.b16 %v2367
    %v2400 = vunpack.c.l.b16 %v2368
    %v2401 = vunpack.c.l.b16 %v2369
    %v2402 = vunpack.c.l.b16 %v2370
    %v2403 = vunpack.c.l.b16 %v2371
    %v2404 = vunpack.c.l.b16 %v2372
    %v2405 = vunpack.c.l.b16 %v2373
    %v2406 = vunpack.c.l.b16 %v2374
    %v2407 = vunpack.c.l.b16 %v2375
    %v2408 = vunpack.c.l.b16 %v2376
    %v2409 = vunpack.c.l.b16 %v2377
    %v2410 = vunpack.c.l.b16 %v2378
    %v2411 = vunpack.c.l.b16 %v2379
    %v2412 = vunpack.c.l.b16 %v2380
    %v2413 = vunpack.c.l.b16 %v2381
    %v2414 = vunpack.c.l.b16 %v2382
    %v2415 = vpack.c.b16 %v2400, %v2399
    %v2416 = vpack.c.b16 %v2402, %v2401
    %v2417 = vpack.c.b16 %v2404, %v2403
    %v2418 = vpack.c.b16 %v2406, %v2405
    %v2419 = vpack.c.b16 %v2408, %v2407
    %v2420 = vpack.c.b16 %v2410, %v2409
    %v2421 = vpack.c.b16 %v2412, %v2411
    %v2422 = vpack.c.b16 %v2414, %v2413
    %2431 = vmatprep.subr.bf16.mxu0 0
    %2432 = vmatpush1.bf16.msra.mxu0 %v2415
    %2433 = vmatprep.subr.bf16.mxu0 0
    %2434 = vmatpush1.bf16.msra.mxu0 %v2416
    %2435 = vmatprep.subr.bf16.mxu0 0
    %2436 = vmatpush1.bf16.msra.mxu0 %v2417
    %2437 = vmatprep.subr.bf16.mxu0 0
    %2438 = vmatpush1.bf16.msra.mxu0 %v2418
    %2439 = vmatprep.subr.bf16.mxu0 0
    %2440 = vmatpush1.bf16.msra.mxu0 %v2419
    %2441 = vmatprep.subr.bf16.mxu0 0
    %2442 = vmatpush1.bf16.msra.mxu0 %v2420
    %2443 = vmatprep.subr.bf16.mxu0 0
    %2444 = vmatpush1.bf16.msra.mxu0 %v2421
    %2445 = vmatprep.subr.bf16.mxu0 0
    %2446 = vmatpush1.bf16.msra.mxu0 %v2422
    %2447 = vmatprep.subr.bf16.mxu0 0
    %2448 = vmatpush1.bf16.msra.mxu0 0
    %2449 = vmatprep.subr.bf16.mxu0 0
    %2450 = vmatpush1.bf16.msra.mxu0 0
    %2451 = vmatprep.subr.bf16.mxu0 0
    %2452 = vmatpush1.bf16.msra.mxu0 0
    %2453 = vmatprep.subr.bf16.mxu0 0
    %2454 = vmatpush1.bf16.msra.mxu0 0
    %2455 = vmatprep.subr.bf16.mxu0 0
    %2456 = vmatpush1.bf16.msra.mxu0 0
    %2457 = vmatprep.subr.bf16.mxu0 0
    %2458 = vmatpush1.bf16.msra.mxu0 0
    %2459 = vmatprep.subr.bf16.mxu0 0
    %2460 = vmatpush1.bf16.msra.mxu0 0
    %2461 = vmatprep.subr.bf16.mxu0 0
    %2462 = vmatpush1.bf16.msra.mxu0 0
    %2463 = vmatprep.mubr.bf16.mxu0 0
    %2464 = vmatmul.mubr.bf16.gmra.mrb[0].mxu0 %v2089
    %v2465 = vpop.f32.mrb[0].mxu0
    %v2466 = vadd.f32 0.0, %v2465
    %v2467 = vpop.f32.mrb[0].mxu0
    %v2468 = vpop.f32.mrb[0].mxu0
    %v2469 = vpop.f32.mrb[0].mxu0
    %2470 = vdwg.mxu0
    %v2471 = vlaneseq
    %v2472 = vshrl.u32 %v2471, 7
    %v2473 = vsub.s32 0, %v2472
    %v2474 = vrot.slane %v2466, %v2473
    %v2475 = vadd.f32 %v2354, %v2474
    %v2476 = vadd.f32 %v2357, %v2474
    %v2477 = vadd.f32 %v2362, %v2474
    %v2478 = vld [vmem:[%s6 + $0xd] sm:$0x1]
    %v2479 = vlaneseq
    %v2480 = vshrl.u32 %v2479, 7
    %v2481 = vsub.s32 0, %v2480
    %v2482 = vrot.slane %v2478, %v2481
    %v2483 = vadd.f32 %v2475, %v2482
    %v2484 = vadd.f32 %v2476, %v2482
    %v2485 = vadd.f32 %v2477, %v2482
    %v2486 = vmax.f32 %v2483, 0.0
    %v2487 = vmax.f32 %v2484, 0.0
    %v2488 = vmax.f32 %v2485, 0.0
    %v2489 = vpack.c.bf16 %v2487, %v2486
    %v2490 = vpack.c.bf16 %v2488, %v2488
    %v2491 = vld [vmem:[#allocation8 + $0x380] sm:$0xf]
    %v2492 = vld [vmem:[#allocation8 + $0x384] sm:$0xf]
    %v2493 = vld [vmem:[#allocation8 + $0x388] sm:$0xf]
    %v2494 = vld [vmem:[#allocation8 + $0x38c] sm:$0xf]
    %v2495 = vld [vmem:[#allocation8 + $0x390] sm:$0xf]
    %v2496 = vld [vmem:[#allocation8 + $0x394] sm:$0xf]
    %v2497 = vld [vmem:[#allocation8 + $0x398] sm:$0xf]
    %v2498 = vld [vmem:[#allocation8 + $0x39c] sm:$0xf]
    %v2499 = vld [vmem:[#allocation8 + $0x3a0] sm:$0xf]
    %v2500 = vld [vmem:[#allocation8 + $0x3a4] sm:$0xf]
    %v2501 = vld [vmem:[#allocation8 + $0x3a8] sm:$0xf]
    %v2502 = vld [vmem:[#allocation8 + $0x3ac] sm:$0xf]
    %v2503 = vld [vmem:[#allocation8 + $0x3b0] sm:$0xf]
    %v2504 = vld [vmem:[#allocation8 + $0x3b4] sm:$0xf]
    %v2505 = vld [vmem:[#allocation8 + $0x3b8] sm:$0xf]
    %v2506 = vld [vmem:[#allocation8 + $0x3bc] sm:$0xf]
    %v2507 = vld [vmem:[%s6 + $0xe] sm:$0x1]
    %v2508 = vlaneseq
    %v2509 = vshrl.u32 %v2508, 7
    %v2510 = vsub.s32 0, %v2509
    %v2511 = vrot.slane %v2507, %v2510
    %v2528 = vunpack.c.l.b16 %v2491
    %v2529 = vunpack.c.l.b16 %v2492
    %v2530 = vunpack.c.l.b16 %v2493
    %v2531 = vunpack.c.l.b16 %v2494
    %v2532 = vunpack.c.l.b16 %v2495
    %v2533 = vunpack.c.l.b16 %v2496
    %v2534 = vunpack.c.l.b16 %v2497
    %v2535 = vunpack.c.l.b16 %v2498
    %v2536 = vunpack.c.l.b16 %v2499
    %v2537 = vunpack.c.l.b16 %v2500
    %v2538 = vunpack.c.l.b16 %v2501
    %v2539 = vunpack.c.l.b16 %v2502
    %v2540 = vunpack.c.l.b16 %v2503
    %v2541 = vunpack.c.l.b16 %v2504
    %v2542 = vunpack.c.l.b16 %v2505
    %v2543 = vunpack.c.l.b16 %v2506
    %v2544 = vpack.c.b16 %v2529, %v2528
    %v2545 = vpack.c.b16 %v2531, %v2530
    %v2546 = vpack.c.b16 %v2533, %v2532
    %v2547 = vpack.c.b16 %v2535, %v2534
    %v2548 = vpack.c.b16 %v2537, %v2536
    %v2549 = vpack.c.b16 %v2539, %v2538
    %v2550 = vpack.c.b16 %v2541, %v2540
    %v2551 = vpack.c.b16 %v2543, %v2542
    %2560 = vmatprep.subr.bf16.mxu0 0
    %2561 = vmatpush1.bf16.msra.mxu0 %v2544
    %2562 = vmatprep.subr.bf16.mxu0 0
    %2563 = vmatpush1.bf16.msra.mxu0 %v2545
    %2564 = vmatprep.subr.bf16.mxu0 0
    %2565 = vmatpush1.bf16.msra.mxu0 %v2546
    %2566 = vmatprep.subr.bf16.mxu0 0
    %2567 = vmatpush1.bf16.msra.mxu0 %v2547
    %2568 = vmatprep.subr.bf16.mxu0 0
    %2569 = vmatpush1.bf16.msra.mxu0 %v2548
    %2570 = vmatprep.subr.bf16.mxu0 0
    %2571 = vmatpush1.bf16.msra.mxu0 %v2549
    %2572 = vmatprep.subr.bf16.mxu0 0
    %2573 = vmatpush1.bf16.msra.mxu0 %v2550
    %2574 = vmatprep.subr.bf16.mxu0 0
    %2575 = vmatpush1.bf16.msra.mxu0 %v2551
    %2576 = vmatprep.subr.bf16.mxu0 0
    %2577 = vmatpush1.bf16.msra.mxu0 0
    %2578 = vmatprep.subr.bf16.mxu0 0
    %2579 = vmatpush1.bf16.msra.mxu0 0
    %2580 = vmatprep.subr.bf16.mxu0 0
    %2581 = vmatpush1.bf16.msra.mxu0 0
    %2582 = vmatprep.subr.bf16.mxu0 0
    %2583 = vmatpush1.bf16.msra.mxu0 0
    %2584 = vmatprep.subr.bf16.mxu0 0
    %2585 = vmatpush1.bf16.msra.mxu0 0
    %2586 = vmatprep.subr.bf16.mxu0 0
    %2587 = vmatpush1.bf16.msra.mxu0 0
    %2588 = vmatprep.subr.bf16.mxu0 0
    %2589 = vmatpush1.bf16.msra.mxu0 0
    %2590 = vmatprep.subr.bf16.mxu0 0
    %2591 = vmatpush1.bf16.msra.mxu0 0
    %2592 = vmatprep.mubr.bf16.mxu0 0
    %2593 = vmatmul.mubr.bf16.gmra.mrb[0].mxu0 %v2489
    %v2594 = vpop.f32.mrb[0].mxu0
    %v2595 = vadd.f32 %v2511, %v2594
    %v2596 = vpop.f32.mrb[0].mxu0
    %v2597 = vpop.f32.mrb[0].mxu0
    %v2598 = vadd.f32 %v2511, %v2597
    %v2599 = vpop.f32.mrb[0].mxu0
    %2600 = vmatprep.mubr.bf16.mxu0 0
    %2601 = vmatmul.mubr.bf16.gmra.mrb[0].mxu0 %v2490
    %v2602 = vpop.f32.mrb[0].mxu0
    %v2603 = vadd.f32 %v2511, %v2602
    %v2604 = vpop.f32.mrb[0].mxu0
    %v2605 = vpop.f32.mrb[0].mxu0
    %v2606 = vpop.f32.mrb[0].mxu0
    %2607 = vdwg.mxu0
    %v2608 = vmax.f32 %v2595, 0.0
    %v2609 = vmax.f32 %v2598, 0.0
    %v2610 = vmax.f32 %v2603, 0.0
    %v2611 = vpack.c.bf16 %v2609, %v2608
    %v2612 = vpack.c.bf16 %v2610, %v2610
    %v2613 = vld [vmem:[#allocation8 + $0x3c0] sm:$0xf]
    %v2614 = vld [vmem:[#allocation8 + $0x3c4] sm:$0xf]
    %v2615 = vld [vmem:[#allocation8 + $0x3c8] sm:$0xf]
    %v2616 = vld [vmem:[#allocation8 + $0x3cc] sm:$0xf]
    %v2617 = vld [vmem:[#allocation8 + $0x3d0] sm:$0xf]
    %v2618 = vld [vmem:[#allocation8 + $0x3d4] sm:$0xf]
    %v2619 = vld [vmem:[#allocation8 + $0x3d8] sm:$0xf]
    %v2620 = vld [vmem:[#allocation8 + $0x3dc] sm:$0xf]
    %v2621 = vld [vmem:[#allocation8 + $0x3e0] sm:$0xf]
    %v2622 = vld [vmem:[#allocation8 + $0x3e4] sm:$0xf]
    %v2623 = vld [vmem:[#allocation8 + $0x3e8] sm:$0xf]
    %v2624 = vld [vmem:[#allocation8 + $0x3ec] sm:$0xf]
    %v2625 = vld [vmem:[#allocation8 + $0x3f0] sm:$0xf]
    %v2626 = vld [vmem:[#allocation8 + $0x3f4] sm:$0xf]
    %v2627 = vld [vmem:[#allocation8 + $0x3f8] sm:$0xf]
    %v2628 = vld [vmem:[#allocation8 + $0x3fc] sm:$0xf]
    %v2629 = vld [vmem:[%s6 + $0xf] sm:$0x1]
    %v2630 = vlaneseq
    %v2631 = vshrl.u32 %v2630, 7
    %v2632 = vsub.s32 0, %v2631
    %v2633 = vrot.slane %v2629, %v2632
    %v2650 = vunpack.c.l.b16 %v2613
    %v2651 = vunpack.c.l.b16 %v2614
    %v2652 = vunpack.c.l.b16 %v2615
    %v2653 = vunpack.c.l.b16 %v2616
    %v2654 = vunpack.c.l.b16 %v2617
    %v2655 = vunpack.c.l.b16 %v2618
    %v2656 = vunpack.c.l.b16 %v2619
    %v2657 = vunpack.c.l.b16 %v2620
    %v2658 = vunpack.c.l.b16 %v2621
    %v2659 = vunpack.c.l.b16 %v2622
    %v2660 = vunpack.c.l.b16 %v2623
    %v2661 = vunpack.c.l.b16 %v2624
    %v2662 = vunpack.c.l.b16 %v2625
    %v2663 = vunpack.c.l.b16 %v2626
    %v2664 = vunpack.c.l.b16 %v2627
    %v2665 = vunpack.c.l.b16 %v2628
    %v2666 = vpack.c.b16 %v2651, %v2650
    %v2667 = vpack.c.b16 %v2653, %v2652
    %v2668 = vpack.c.b16 %v2655, %v2654
    %v2669 = vpack.c.b16 %v2657, %v2656
    %v2670 = vpack.c.b16 %v2659, %v2658
    %v2671 = vpack.c.b16 %v2661, %v2660
    %v2672 = vpack.c.b16 %v2663, %v2662
    %v2673 = vpack.c.b16 %v2665, %v2664
    %2682 = vmatprep.subr.bf16.mxu0 0
    %2683 = vmatpush1.bf16.msra.mxu0 %v2666
    %2684 = vmatprep.subr.bf16.mxu0 0
    %2685 = vmatpush1.bf16.msra.mxu0 %v2667
    %2686 = vmatprep.subr.bf16.mxu0 0
    %2687 = vmatpush1.bf16.msra.mxu0 %v2668
    %2688 = vmatprep.subr.bf16.mxu0 0
    %2689 = vmatpush1.bf16.msra.mxu0 %v2669
    %2690 = vmatprep.subr.bf16.mxu0 0
    %2691 = vmatpush1.bf16.msra.mxu0 %v2670
    %2692 = vmatprep.subr.bf16.mxu0 0
    %2693 = vmatpush1.bf16.msra.mxu0 %v2671
    %2694 = vmatprep.subr.bf16.mxu0 0
    %2695 = vmatpush1.bf16.msra.mxu0 %v2672
    %2696 = vmatprep.subr.bf16.mxu0 0
    %2697 = vmatpush1.bf16.msra.mxu0 %v2673
    %2698 = vmatprep.subr.bf16.mxu0 0
    %2699 = vmatpush1.bf16.msra.mxu0 0
    %2700 = vmatprep.subr.bf16.mxu0 0
    %2701 = vmatpush1.bf16.msra.mxu0 0
    %2702 = vmatprep.subr.bf16.mxu0 0
    %2703 = vmatpush1.bf16.msra.mxu0 0
    %2704 = vmatprep.subr.bf16.mxu0 0
    %2705 = vmatpush1.bf16.msra.mxu0 0
    %2706 = vmatprep.subr.bf16.mxu0 0
    %2707 = vmatpush1.bf16.msra.mxu0 0
    %2708 = vmatprep.subr.bf16.mxu0 0
    %2709 = vmatpush1.bf16.msra.mxu0 0
    %2710 = vmatprep.subr.bf16.mxu0 0
    %2711 = vmatpush1.bf16.msra.mxu0 0
    %2712 = vmatprep.subr.bf16.mxu0 0
    %2713 = vmatpush1.bf16.msra.mxu0 0
    %2714 = vmatprep.mubr.bf16.mxu0 0
    %2715 = vmatmul.mubr.bf16.gmra.mrb[0].mxu0 %v2611
    %v2716 = vpop.f32.mrb[0].mxu0
    %v2717 = vadd.f32 %v2633, %v2716
    %v2718 = vpop.f32.mrb[0].mxu0
    %v2719 = vpop.f32.mrb[0].mxu0
    %v2720 = vadd.f32 %v2633, %v2719
    %v2721 = vpop.f32.mrb[0].mxu0
    %2722 = vmatprep.mubr.bf16.mxu0 0
    %2723 = vmatmul.mubr.bf16.gmra.mrb[0].mxu0 %v2612
    %v2724 = vpop.f32.mrb[0].mxu0
    %v2725 = vadd.f32 %v2633, %v2724
    %v2726 = vpop.f32.mrb[0].mxu0
    %v2727 = vpop.f32.mrb[0].mxu0
    %v2728 = vpop.f32.mrb[0].mxu0
    %2729 = vdwg.mxu0
    %v2730 = vmul.f32 %v2717, %v2717
    %v2731 = vmul.f32 %v2720, %v2720
    %v2732 = vmul.f32 %v2725, %v2725
    %2733 = vadd.xlane.f32.xlu0 %v2730
    %v2734 = vpop.xlane.xlu0 %2733
    %2735 = vadd.xlane.f32.xlu0 %v2731
    %v2736 = vpop.xlane.xlu0 %2735
    %2737 = vadd.xlane.f32.xlu0 %v2732
    %v2738 = vpop.xlane.xlu0 %2737
    %v2739 = vmax.f32 %v2734, 1e-16
    %v2740 = vmax.f32 %v2736, 1e-16
    %v2741 = vmax.f32 %v2738, 1e-16
    %v2742 = vrsqrt.pop %v2739
    %v2743 = vrsqrt.pop %v2740
    %v2744 = vrsqrt.pop %v2741
    %v2745 = vmul.f32 %v2717, %v2742
    %v2746 = vmul.f32 %v2720, %v2743
    %v2747 = vmul.f32 %v2725, %v2744
    %v2748 = vadd.f32 %v2745, %v2746
    %v2749 = vadd.f32 %v2748, %v2747
    %v2750 = vrot.slane %v2749, 4
    %v2751 = vadd.f32 %v2749, %v2750
    %v2752 = vrot.slane %v2751, 2
    %v2753 = vadd.f32 %v2751, %v2752
    %v2754 = vrot.slane %v2753, 1
    %v2755 = vadd.f32 %v2753, %v2754
    %v2756 = vmul.f32 %v2755, %v2755
    %2757 = vadd.xlane.f32.xlu0 %v2756
    %v2758 = vpop.xlane.xlu0 %2757
    %v2759 = vmax.f32 %v2758, 1e-16
    %v2760 = vrsqrt.pop %v2759
    %v2761 = vmul.f32 %v2755, %v2760
    %2762 = vst [vmem:[#allocation10] sm:$0xff] %v2745
    %2763 = vst [vmem:[#allocation10 + $0x8] sm:$0xff] %v2746
    %2764 = vst [vmem:[#allocation10 + $0x10] sm:$0xff] %v2747
    %2765 = vst [vmem:[#allocation11] sm:$0x1] %v2761
    // Predicated region
    $region46: #{tpu_custom_call.1} parent=1 // pred_check
      _
    $region47: #{tpu_custom_call.1} parent=1 // pred_check_branch
      %2767 = sbr.rel (0) target = $region49
    $region48: #{tpu_custom_call.1} parent=1 // pred_region
      %s2769 = ssub.s32 384, 384
      %2770 = vsyncadd [#allocation4], %s2769
      %s2771 = sshll.u32 [#allocation10], 4
      %s2772 = int_to_ptr.vmem [resolvable:$true] %s2771
      %2777 = dma.vmem_to_hbm [thread:$0]  %s2772, 384, %s7, [#allocation4], 128, 128, 8
    $region49: #{tpu_custom_call.1} parent=1 // pred_fallthru
      _
    // Predicated region
    $region50: #{tpu_custom_call.1} parent=1 // pred_check
      _
    $region51: #{tpu_custom_call.1} parent=1 // pred_check_branch
      %2779 = sbr.rel (0) target = $region53
    $region52: #{tpu_custom_call.1} parent=1 // pred_region
      %s2781 = ssub.s32 16, 16
      %2782 = vsyncadd [#allocation12], %s2781
      %s2784 = sshll.u32 [#allocation11], 4
      %s2785 = int_to_ptr.vmem [resolvable:$true] %s2784
      %2787 = dma.vmem_to_hbm [thread:$0]  %s2785, 16, %s8, [#allocation12]
    $region53: #{tpu_custom_call.1} parent=1 // pred_fallthru
      _
    // Predicated region
    $region54: #{tpu_custom_call.1} parent=1 // pred_check
      _
    $region55: #{tpu_custom_call.1} parent=1 // pred_check_branch
      %2789 = sbr.rel (0) target = $region57
    $region56: #{tpu_custom_call.1} parent=1 // pred_region
      %2790 = dma.done [#allocation4], 384
    $region57: #{tpu_custom_call.1} parent=1 // pred_fallthru
      _
    // Predicated region
    $region58: #{tpu_custom_call.1} parent=1 // pred_check
      _
    $region59: #{tpu_custom_call.1} parent=1 // pred_check_branch
      %2792 = sbr.rel (0) target = $region61
    $region60: #{tpu_custom_call.1} parent=1 // pred_region
      %2793 = dma.done [#allocation12], 16
    $region61: #{tpu_custom_call.1} parent=1 // pred_fallthru
      _
    %2794 = vsyncpa [#allocation3], 1
    %2795 = vsyncpa [#allocation6], 1
    %2796 = vsyncpa [#allocation9], 1
    %2797 = vsyncpa [#allocation4], 1
    %2798 = vsyncpa [#allocation12], 1

</llo_original>
